<compile_context>
chip_gen: v6e
topology: v6e:2x2x1
jax: 0.10.0
libtpu: 0.0.40
codegen_flags: <defaults>
</compile_context>

<pallas_src>
import functools

import jax
import jax.numpy as jnp
from jax import lax
from jax.experimental import pallas as pl
from jax.experimental.pallas import tpu as pltpu


def _snli_attention_kernel(x1_ref, x2_ref, ws1_ref, ws2_ref,
                           wfh_ref, bfh_ref, wfp_ref, bfp_ref,
                           out_ref, *, mxu_dtype):
    """One batch tile (tb sentence pairs) per grid step.

    x1_ref, x2_ref : (seq, tb, hidden)    native seq-major layout (VMEM)
    ws1_ref        : (hidden, d_a)        Ws1.weight.T
    ws2_ref        : (d_a, r)             Ws2.weight.T
    wfh_ref/wfp_ref: (r, hidden, hidden)  W_f*.weight.T regrouped r-major
    bfh_ref/bfp_ref: (1, hidden)
    out_ref        : (tb, hidden)
    """
    seq, tb, hidden = x1_ref.shape
    r = ws2_ref.shape[1]
    n = seq * tb

    # Shared attention weights: loaded once, resident for both sentences.
    ws1 = ws1_ref[...].astype(mxu_dtype)
    ws2 = ws2_ref[...].astype(mxu_dtype)

    def attend(x_ref, wf_ref, bf_ref):
        x = x_ref[...]                                        # (seq, tb, H) f32
        xm = x.astype(mxu_dtype)
        x2d = xm.reshape(n, hidden)                           # major-dim collapse only

        # scores = tanh(H @ Ws1^T) @ Ws2^T, rows = seq*tb.
        s = jnp.tanh(jnp.dot(x2d, ws1,
                             preferred_element_type=jnp.float32))     # (n, d_a)
        scores = jnp.dot(s.astype(mxu_dtype), ws2,
                         preferred_element_type=jnp.float32)          # (n, r)

        # Numerically stable softmax over the sequence axis (axis 0): pure
        # across-vreg reductions (no transpose), exact division.
        sc = scores.reshape(seq, tb, r)
        mx = jnp.max(sc, axis=0, keepdims=True)
        e = jnp.exp(sc - mx)
        a = e / jnp.sum(e, axis=0, keepdims=True)                     # (seq, tb, r) f32
        a2 = a.reshape(n, r).astype(mxu_dtype)

        # Output projection accumulated in registers:
        #   f = bias + sum_ri (sum_s a[s, :, ri] * x[s, :, :]) @ Wf[ri]
        # The broadcast of attention column ri across the hidden lanes is a
        # one-hot MXU matmul (exact: one nonzero term), so no XLU lane
        # broadcasts and no VMEM scratch for the flattened M.
        f = bf_ref[...].astype(jnp.float32)                           # (1, H)
        for ri in range(r):                                           # r small & static
            one_hot = (lax.broadcasted_iota(jnp.int32, (r, hidden), 0)
                       == ri).astype(mxu_dtype)                       # (r, H)
            w_b = jnp.dot(a2, one_hot,
                          preferred_element_type=jnp.float32)         # (n, H): a[:, ri] bcast
            m_ri = jnp.sum(w_b.reshape(seq, tb, hidden) * x, axis=0)  # (tb, H) f32
            f = f + jnp.dot(m_ri.astype(mxu_dtype),
                            wf_ref[ri].astype(mxu_dtype),
                            preferred_element_type=jnp.float32)       # (tb, H)
        return f

    f_h = attend(x1_ref, wfh_ref, bfh_ref)
    f_p = attend(x2_ref, wfp_ref, bfp_ref)
    out_ref[...] = (f_h * f_p).astype(out_ref.dtype)


def snli_attention_pallas(x1, x2, Ws1, Ws2, W_fh, b_fh, W_fp, b_fp,
                          *, batch_tile=256, mxu_dtype=None):
    """x1, x2: (seq, batch, hidden); weights in PyTorch nn.Linear layout
    (weight: (out_features, in_features), bias: (out_features,)).
    Returns (batch, hidden).  mxu_dtype=jnp.bfloat16 casts matmul operands
    only (recommended for v6e/v7x at production sizes)."""
    seq, batch, hidden = x1.shape
    d_a = Ws1.shape[0]
    r = Ws2.shape[0]
    if mxu_dtype is None:
        mxu_dtype = x1.dtype

    # Host-side one-time weight relayout: transpose to (in, out); regroup the
    # fused output projections r-major so the kernel can index Wf[ri].
    ws1_t = Ws1.T                                    # (hidden, d_a)
    ws2_t = Ws2.T                                    # (d_a, r)
    wfh = W_fh.T.reshape(r, hidden, hidden)          # (r, hidden, hidden)
    wfp = W_fp.T.reshape(r, hidden, hidden)
    bfh = b_fh.reshape(1, hidden)
    bfp = b_fp.reshape(1, hidden)

    # Batch tiling: fewest, largest tiles (one step for small batches); tb is
    # always a multiple of 8 so in-kernel reshapes never relayout.  For very
    # large batch_tile * hidden raise vmem_limit_bytes in CompilerParams (and
    # on v7x prefer a smaller batch_tile / K-tiled output projection).
    def round_up(v, m):
        return ((v + m - 1) // m) * m

    tb = min(round_up(batch, 8), round_up(batch_tile, 8))
    padded_batch = round_up(batch, tb)
    if padded_batch != batch:
        pad = padded_batch - batch
        x1 = jnp.pad(x1, ((0, 0), (0, pad), (0, 0)))
        x2 = jnp.pad(x2, ((0, 0), (0, pad), (0, 0)))

    kernel = functools.partial(_snli_attention_kernel, mxu_dtype=mxu_dtype)

    out = pl.pallas_call(
        kernel,
        grid=(padded_batch // tb,),
        in_specs=[
            pl.BlockSpec((seq, tb, hidden), lambda b: (0, b, 0)),    # x1 (native layout)
            pl.BlockSpec((seq, tb, hidden), lambda b: (0, b, 0)),    # x2
            pl.BlockSpec((hidden, d_a), lambda b: (0, 0)),           # Ws1^T
            pl.BlockSpec((d_a, r), lambda b: (0, 0)),                # Ws2^T
            pl.BlockSpec((r, hidden, hidden), lambda b: (0, 0, 0)),  # W_fh^T (r-major)
            pl.BlockSpec((1, hidden), lambda b: (0, 0)),             # b_fh
            pl.BlockSpec((r, hidden, hidden), lambda b: (0, 0, 0)),  # W_fp^T (r-major)
            pl.BlockSpec((1, hidden), lambda b: (0, 0)),             # b_fp
        ],
        out_specs=pl.BlockSpec((tb, hidden), lambda b: (b, 0)),
        out_shape=jax.ShapeDtypeStruct((padded_batch, hidden), x1.dtype),
        compiler_params=pltpu.CompilerParams(
            dimension_semantics=("parallel",)),
    )(x1, x2, ws1_t, ws2_t, wfh, bfh, wfp, bfp)
    return out[:batch]


def snli_attention_ref(x1, x2, Ws1, Ws2, W_fh, b_fh, W_fp, b_fp):
    """Pure-JAX reference mirroring the PyTorch forward semantics."""
    def attn(x):                                           # x: (seq, batch, hidden)
        h = jnp.transpose(x, (1, 0, 2))                    # (batch, seq, hidden)
        s = jnp.tanh(jnp.einsum('bsh,ah->bsa', h, Ws1))    # (batch, seq, d_a)
        scores = jnp.einsum('bsa,ra->bsr', s, Ws2)         # (batch, seq, r)
        a = jax.nn.softmax(scores, axis=1)                 # softmax over seq
        m = jnp.einsum('bsr,bsh->brh', a, h)               # (batch, r, hidden)
        return m.reshape(h.shape[0], -1)                   # r-major flatten

    f_h = attn(x1) @ W_fh.T + b_fh
    f_p = attn(x2) @ W_fp.T + b_fp
    return f_h * f_p


if __name__ == "__main__":
    seq, batch, hidden, r = 8, 16, 32, 4
    d_a = hidden   # LinSelfAttention internal dim assumed == hidden_size

    key = jax.random.PRNGKey(0)
    ks = jax.random.split(key, 8)

    # PyTorch-layout parameters (Linear.weight is (out_features, in_features)).
    Ws1 = 0.1 * jax.random.normal(ks[0], (d_a, hidden), jnp.float32)
    Ws2 = 0.1 * jax.random.normal(ks[1], (r, d_a), jnp.float32)
    W_fh = 0.1 * jax.random.normal(ks[2], (hidden, r * hidden), jnp.float32)
    b_fh = 0.1 * jax.random.normal(ks[3], (hidden,), jnp.float32)
    W_fp = 0.1 * jax.random.normal(ks[4], (hidden, r * hidden), jnp.float32)
    b_fp = 0.1 * jax.random.normal(ks[5], (hidden,), jnp.float32)

    x1 = jax.random.normal(ks[6], (seq, batch, hidden), jnp.float32)
    x2 = jax.random.normal(ks[7], (seq, batch, hidden), jnp.float32)

    # Default batch_tile covers the whole (small) batch in ONE grid step.
    out = snli_attention_pallas(x1, x2, Ws1, Ws2, W_fh, b_fh, W_fp, b_fp)
    out = jax.block_until_ready(out)

    ref = snli_attention_ref(x1, x2, Ws1, Ws2, W_fh, b_fh, W_fp, b_fp)
    assert out.shape == (batch, hidden)
    # Exact division + f32 matmul accumulation: tight tolerance again.
    assert jnp.allclose(out, ref, atol=1e-4, rtol=1e-4), "mismatch vs JAX reference"

    print("KERNEL_OK")
</pallas_src>

<mosaic_0001>
module attributes {stable_mosaic.version = 11 : i64} {
  func.func @_snli_attention_kernel(%arg0: i32, %arg1: memref<8x16x32xf32, #tpu.memory_space<vmem>>, %arg2: memref<8x16x32xf32, #tpu.memory_space<vmem>>, %arg3: memref<32x32xf32, #tpu.memory_space<vmem>>, %arg4: memref<32x4xf32, #tpu.memory_space<vmem>>, %arg5: memref<4x32x32xf32, #tpu.memory_space<vmem>>, %arg6: memref<1x32xf32, #tpu.memory_space<vmem>>, %arg7: memref<4x32x32xf32, #tpu.memory_space<vmem>>, %arg8: memref<1x32xf32, #tpu.memory_space<vmem>>, %arg9: memref<16x32xf32, #tpu.memory_space<vmem>>) attributes {dimension_semantics = [#tpu.dimension_semantics<parallel>], iteration_bounds = array<i64: 1>, scalar_prefetch = 0 : i64, scratch_operands = 0 : i64, tpu.core_type = #tpu.core_type<tc>, window_params = [{transform_indices = @transform_0, window_bounds = array<i64: 8, 16, 32>}, {transform_indices = @transform_1, window_bounds = array<i64: 8, 16, 32>}, {pipeline_mode = #tpu.pipeline_mode<synchronous>, transform_indices = @transform_2, window_bounds = array<i64: 32, 32>}, {pipeline_mode = #tpu.pipeline_mode<synchronous>, transform_indices = @transform_3, window_bounds = array<i64: 32, 4>}, {pipeline_mode = #tpu.pipeline_mode<synchronous>, transform_indices = @transform_4, window_bounds = array<i64: 4, 32, 32>}, {pipeline_mode = #tpu.pipeline_mode<synchronous>, transform_indices = @transform_5, window_bounds = array<i64: 1, 32>}, {pipeline_mode = #tpu.pipeline_mode<synchronous>, transform_indices = @transform_6, window_bounds = array<i64: 4, 32, 32>}, {pipeline_mode = #tpu.pipeline_mode<synchronous>, transform_indices = @transform_7, window_bounds = array<i64: 1, 32>}, {transform_indices = @transform_8, window_bounds = array<i64: 16, 32>}]} {
    %c0 = arith.constant 0 : index
    %c0_0 = arith.constant 0 : index
    %0 = vector.load %arg3[%c0, %c0_0] : memref<32x32xf32, #tpu.memory_space<vmem>>, vector<32x32xf32>
    %c0_1 = arith.constant 0 : index
    %c0_2 = arith.constant 0 : index
    %1 = vector.load %arg4[%c0_1, %c0_2] : memref<32x4xf32, #tpu.memory_space<vmem>>, vector<32x4xf32>
    %c0_3 = arith.constant 0 : index
    %c0_4 = arith.constant 0 : index
    %c0_5 = arith.constant 0 : index
    %2 = vector.load %arg1[%c0_3, %c0_4, %c0_5] : memref<8x16x32xf32, #tpu.memory_space<vmem>>, vector<8x16x32xf32>
    %3 = vector.shape_cast %2 : vector<8x16x32xf32> to vector<128x32xf32>
    %cst = arith.constant dense<0.000000e+00> : vector<128x32xf32>
    %4 = tpu.matmul %3, %0, %cst {dimension_numbers = #tpu.dot_dimension_numbers<[1], [0], [0], [1], [0, 0, 1, 1], [], []>} : vector<128x32xf32>, vector<32x32xf32>, vector<128x32xf32> -> vector<128x32xf32>
    %5 = math.tanh %4 : vector<128x32xf32>
    %cst_6 = arith.constant dense<0.000000e+00> : vector<128x4xf32>
    %6 = tpu.matmul %5, %1, %cst_6 {dimension_numbers = #tpu.dot_dimension_numbers<[1], [0], [0], [1], [0, 0, 1, 1], [], []>} : vector<128x32xf32>, vector<32x4xf32>, vector<128x4xf32> -> vector<128x4xf32>
    %7 = vector.shape_cast %6 : vector<128x4xf32> to vector<8x16x4xf32>
    %cst_7 = arith.constant dense<0xFF800000> : vector<16x4xf32>
    %8 = vector.multi_reduction <maximumf>, %7, %cst_7 [0] : vector<8x16x4xf32> to vector<16x4xf32>
    %9 = vector.shape_cast %8 : vector<16x4xf32> to vector<1x16x4xf32>
    %10 = vector.broadcast %9 : vector<1x16x4xf32> to vector<8x16x4xf32>
    %11 = arith.subf %7, %10 : vector<8x16x4xf32>
    %12 = math.exp %11 : vector<8x16x4xf32>
    %cst_8 = arith.constant dense<0.000000e+00> : vector<16x4xf32>
    %13 = vector.multi_reduction <add>, %12, %cst_8 [0] : vector<8x16x4xf32> to vector<16x4xf32>
    %14 = vector.shape_cast %13 : vector<16x4xf32> to vector<1x16x4xf32>
    %15 = vector.broadcast %14 : vector<1x16x4xf32> to vector<8x16x4xf32>
    %16 = arith.divf %12, %15 : vector<8x16x4xf32>
    %17 = vector.shape_cast %16 : vector<8x16x4xf32> to vector<128x4xf32>
    %c0_9 = arith.constant 0 : index
    %c0_10 = arith.constant 0 : index
    %18 = vector.load %arg6[%c0_9, %c0_10] : memref<1x32xf32, #tpu.memory_space<vmem>>, vector<1x32xf32>
    %19 = tpu.iota {dimensions = array<i32: 0>} : vector<4x32xi32>
    %c0_i32 = arith.constant 0 : i32
    %20 = vector.broadcast %c0_i32 : i32 to vector<4x32xi32>
    %21 = arith.cmpi eq, %19, %20 : vector<4x32xi32>
    %22 = arith.extui %21 : vector<4x32xi1> to vector<4x32xi32>
    %23 = arith.sitofp %22 : vector<4x32xi32> to vector<4x32xf32>
    %cst_11 = arith.constant dense<0.000000e+00> : vector<128x32xf32>
    %24 = tpu.matmul %17, %23, %cst_11 {dimension_numbers = #tpu.dot_dimension_numbers<[1], [0], [0], [1], [0, 0, 1, 1], [], []>} : vector<128x4xf32>, vector<4x32xf32>, vector<128x32xf32> -> vector<128x32xf32>
    %25 = vector.shape_cast %24 : vector<128x32xf32> to vector<8x16x32xf32>
    %26 = arith.mulf %25, %2 : vector<8x16x32xf32>
    %cst_12 = arith.constant dense<0.000000e+00> : vector<16x32xf32>
    %27 = vector.multi_reduction <add>, %26, %cst_12 [0] : vector<8x16x32xf32> to vector<16x32xf32>
    %c0_13 = arith.constant 0 : index
    %c0_14 = arith.constant 0 : index
    %c0_15 = arith.constant 0 : index
    %28 = vector.load %arg5[%c0_13, %c0_14, %c0_15] : memref<4x32x32xf32, #tpu.memory_space<vmem>>, vector<1x32x32xf32>
    %29 = vector.shape_cast %28 : vector<1x32x32xf32> to vector<32x32xf32>
    %cst_16 = arith.constant dense<0.000000e+00> : vector<16x32xf32>
    %30 = tpu.matmul %27, %29, %cst_16 {dimension_numbers = #tpu.dot_dimension_numbers<[1], [0], [0], [1], [0, 0, 1, 1], [], []>} : vector<16x32xf32>, vector<32x32xf32>, vector<16x32xf32> -> vector<16x32xf32>
    %31 = vector.broadcast %18 : vector<1x32xf32> to vector<16x32xf32>
    %32 = arith.addf %31, %30 : vector<16x32xf32>
    %33 = tpu.iota {dimensions = array<i32: 0>} : vector<4x32xi32>
    %c1_i32 = arith.constant 1 : i32
    %34 = vector.broadcast %c1_i32 : i32 to vector<4x32xi32>
    %35 = arith.cmpi eq, %33, %34 : vector<4x32xi32>
    %36 = arith.extui %35 : vector<4x32xi1> to vector<4x32xi32>
    %37 = arith.sitofp %36 : vector<4x32xi32> to vector<4x32xf32>
    %cst_17 = arith.constant dense<0.000000e+00> : vector<128x32xf32>
    %38 = tpu.matmul %17, %37, %cst_17 {dimension_numbers = #tpu.dot_dimension_numbers<[1], [0], [0], [1], [0, 0, 1, 1], [], []>} : vector<128x4xf32>, vector<4x32xf32>, vector<128x32xf32> -> vector<128x32xf32>
    %39 = vector.shape_cast %38 : vector<128x32xf32> to vector<8x16x32xf32>
    %40 = arith.mulf %39, %2 : vector<8x16x32xf32>
    %cst_18 = arith.constant dense<0.000000e+00> : vector<16x32xf32>
    %41 = vector.multi_reduction <add>, %40, %cst_18 [0] : vector<8x16x32xf32> to vector<16x32xf32>
    %c1 = arith.constant 1 : index
    %c0_19 = arith.constant 0 : index
    %c0_20 = arith.constant 0 : index
    %42 = vector.load %arg5[%c1, %c0_19, %c0_20] : memref<4x32x32xf32, #tpu.memory_space<vmem>>, vector<1x32x32xf32>
    %43 = vector.shape_cast %42 : vector<1x32x32xf32> to vector<32x32xf32>
    %cst_21 = arith.constant dense<0.000000e+00> : vector<16x32xf32>
    %44 = tpu.matmul %41, %43, %cst_21 {dimension_numbers = #tpu.dot_dimension_numbers<[1], [0], [0], [1], [0, 0, 1, 1], [], []>} : vector<16x32xf32>, vector<32x32xf32>, vector<16x32xf32> -> vector<16x32xf32>
    %45 = arith.addf %32, %44 : vector<16x32xf32>
    %46 = tpu.iota {dimensions = array<i32: 0>} : vector<4x32xi32>
    %c2_i32 = arith.constant 2 : i32
    %47 = vector.broadcast %c2_i32 : i32 to vector<4x32xi32>
    %48 = arith.cmpi eq, %46, %47 : vector<4x32xi32>
    %49 = arith.extui %48 : vector<4x32xi1> to vector<4x32xi32>
    %50 = arith.sitofp %49 : vector<4x32xi32> to vector<4x32xf32>
    %cst_22 = arith.constant dense<0.000000e+00> : vector<128x32xf32>
    %51 = tpu.matmul %17, %50, %cst_22 {dimension_numbers = #tpu.dot_dimension_numbers<[1], [0], [0], [1], [0, 0, 1, 1], [], []>} : vector<128x4xf32>, vector<4x32xf32>, vector<128x32xf32> -> vector<128x32xf32>
    %52 = vector.shape_cast %51 : vector<128x32xf32> to vector<8x16x32xf32>
    %53 = arith.mulf %52, %2 : vector<8x16x32xf32>
    %cst_23 = arith.constant dense<0.000000e+00> : vector<16x32xf32>
    %54 = vector.multi_reduction <add>, %53, %cst_23 [0] : vector<8x16x32xf32> to vector<16x32xf32>
    %c2 = arith.constant 2 : index
    %c0_24 = arith.constant 0 : index
    %c0_25 = arith.constant 0 : index
    %55 = vector.load %arg5[%c2, %c0_24, %c0_25] : memref<4x32x32xf32, #tpu.memory_space<vmem>>, vector<1x32x32xf32>
    %56 = vector.shape_cast %55 : vector<1x32x32xf32> to vector<32x32xf32>
    %cst_26 = arith.constant dense<0.000000e+00> : vector<16x32xf32>
    %57 = tpu.matmul %54, %56, %cst_26 {dimension_numbers = #tpu.dot_dimension_numbers<[1], [0], [0], [1], [0, 0, 1, 1], [], []>} : vector<16x32xf32>, vector<32x32xf32>, vector<16x32xf32> -> vector<16x32xf32>
    %58 = arith.addf %45, %57 : vector<16x32xf32>
    %59 = tpu.iota {dimensions = array<i32: 0>} : vector<4x32xi32>
    %c3_i32 = arith.constant 3 : i32
    %60 = vector.broadcast %c3_i32 : i32 to vector<4x32xi32>
    %61 = arith.cmpi eq, %59, %60 : vector<4x32xi32>
    %62 = arith.extui %61 : vector<4x32xi1> to vector<4x32xi32>
    %63 = arith.sitofp %62 : vector<4x32xi32> to vector<4x32xf32>
    %cst_27 = arith.constant dense<0.000000e+00> : vector<128x32xf32>
    %64 = tpu.matmul %17, %63, %cst_27 {dimension_numbers = #tpu.dot_dimension_numbers<[1], [0], [0], [1], [0, 0, 1, 1], [], []>} : vector<128x4xf32>, vector<4x32xf32>, vector<128x32xf32> -> vector<128x32xf32>
    %65 = vector.shape_cast %64 : vector<128x32xf32> to vector<8x16x32xf32>
    %66 = arith.mulf %65, %2 : vector<8x16x32xf32>
    %cst_28 = arith.constant dense<0.000000e+00> : vector<16x32xf32>
    %67 = vector.multi_reduction <add>, %66, %cst_28 [0] : vector<8x16x32xf32> to vector<16x32xf32>
    %c3 = arith.constant 3 : index
    %c0_29 = arith.constant 0 : index
    %c0_30 = arith.constant 0 : index
    %68 = vector.load %arg5[%c3, %c0_29, %c0_30] : memref<4x32x32xf32, #tpu.memory_space<vmem>>, vector<1x32x32xf32>
    %69 = vector.shape_cast %68 : vector<1x32x32xf32> to vector<32x32xf32>
    %cst_31 = arith.constant dense<0.000000e+00> : vector<16x32xf32>
    %70 = tpu.matmul %67, %69, %cst_31 {dimension_numbers = #tpu.dot_dimension_numbers<[1], [0], [0], [1], [0, 0, 1, 1], [], []>} : vector<16x32xf32>, vector<32x32xf32>, vector<16x32xf32> -> vector<16x32xf32>
    %71 = arith.addf %58, %70 : vector<16x32xf32>
    %c0_32 = arith.constant 0 : index
    %c0_33 = arith.constant 0 : index
    %c0_34 = arith.constant 0 : index
    %72 = vector.load %arg2[%c0_32, %c0_33, %c0_34] : memref<8x16x32xf32, #tpu.memory_space<vmem>>, vector<8x16x32xf32>
    %73 = vector.shape_cast %72 : vector<8x16x32xf32> to vector<128x32xf32>
    %cst_35 = arith.constant dense<0.000000e+00> : vector<128x32xf32>
    %74 = tpu.matmul %73, %0, %cst_35 {dimension_numbers = #tpu.dot_dimension_numbers<[1], [0], [0], [1], [0, 0, 1, 1], [], []>} : vector<128x32xf32>, vector<32x32xf32>, vector<128x32xf32> -> vector<128x32xf32>
    %75 = math.tanh %74 : vector<128x32xf32>
    %cst_36 = arith.constant dense<0.000000e+00> : vector<128x4xf32>
    %76 = tpu.matmul %75, %1, %cst_36 {dimension_numbers = #tpu.dot_dimension_numbers<[1], [0], [0], [1], [0, 0, 1, 1], [], []>} : vector<128x32xf32>, vector<32x4xf32>, vector<128x4xf32> -> vector<128x4xf32>
    %77 = vector.shape_cast %76 : vector<128x4xf32> to vector<8x16x4xf32>
    %cst_37 = arith.constant dense<0xFF800000> : vector<16x4xf32>
    %78 = vector.multi_reduction <maximumf>, %77, %cst_37 [0] : vector<8x16x4xf32> to vector<16x4xf32>
    %79 = vector.shape_cast %78 : vector<16x4xf32> to vector<1x16x4xf32>
    %80 = vector.broadcast %79 : vector<1x16x4xf32> to vector<8x16x4xf32>
    %81 = arith.subf %77, %80 : vector<8x16x4xf32>
    %82 = math.exp %81 : vector<8x16x4xf32>
    %cst_38 = arith.constant dense<0.000000e+00> : vector<16x4xf32>
    %83 = vector.multi_reduction <add>, %82, %cst_38 [0] : vector<8x16x4xf32> to vector<16x4xf32>
    %84 = vector.shape_cast %83 : vector<16x4xf32> to vector<1x16x4xf32>
    %85 = vector.broadcast %84 : vector<1x16x4xf32> to vector<8x16x4xf32>
    %86 = arith.divf %82, %85 : vector<8x16x4xf32>
    %87 = vector.shape_cast %86 : vector<8x16x4xf32> to vector<128x4xf32>
    %c0_39 = arith.constant 0 : index
    %c0_40 = arith.constant 0 : index
    %88 = vector.load %arg8[%c0_39, %c0_40] : memref<1x32xf32, #tpu.memory_space<vmem>>, vector<1x32xf32>
    %89 = tpu.iota {dimensions = array<i32: 0>} : vector<4x32xi32>
    %c0_i32_41 = arith.constant 0 : i32
    %90 = vector.broadcast %c0_i32_41 : i32 to vector<4x32xi32>
    %91 = arith.cmpi eq, %89, %90 : vector<4x32xi32>
    %92 = arith.extui %91 : vector<4x32xi1> to vector<4x32xi32>
    %93 = arith.sitofp %92 : vector<4x32xi32> to vector<4x32xf32>
    %cst_42 = arith.constant dense<0.000000e+00> : vector<128x32xf32>
    %94 = tpu.matmul %87, %93, %cst_42 {dimension_numbers = #tpu.dot_dimension_numbers<[1], [0], [0], [1], [0, 0, 1, 1], [], []>} : vector<128x4xf32>, vector<4x32xf32>, vector<128x32xf32> -> vector<128x32xf32>
    %95 = vector.shape_cast %94 : vector<128x32xf32> to vector<8x16x32xf32>
    %96 = arith.mulf %95, %72 : vector<8x16x32xf32>
    %cst_43 = arith.constant dense<0.000000e+00> : vector<16x32xf32>
    %97 = vector.multi_reduction <add>, %96, %cst_43 [0] : vector<8x16x32xf32> to vector<16x32xf32>
    %c0_44 = arith.constant 0 : index
    %c0_45 = arith.constant 0 : index
    %c0_46 = arith.constant 0 : index
    %98 = vector.load %arg7[%c0_44, %c0_45, %c0_46] : memref<4x32x32xf32, #tpu.memory_space<vmem>>, vector<1x32x32xf32>
    %99 = vector.shape_cast %98 : vector<1x32x32xf32> to vector<32x32xf32>
    %cst_47 = arith.constant dense<0.000000e+00> : vector<16x32xf32>
    %100 = tpu.matmul %97, %99, %cst_47 {dimension_numbers = #tpu.dot_dimension_numbers<[1], [0], [0], [1], [0, 0, 1, 1], [], []>} : vector<16x32xf32>, vector<32x32xf32>, vector<16x32xf32> -> vector<16x32xf32>
    %101 = vector.broadcast %88 : vector<1x32xf32> to vector<16x32xf32>
    %102 = arith.addf %101, %100 : vector<16x32xf32>
    %103 = tpu.iota {dimensions = array<i32: 0>} : vector<4x32xi32>
    %c1_i32_48 = arith.constant 1 : i32
    %104 = vector.broadcast %c1_i32_48 : i32 to vector<4x32xi32>
    %105 = arith.cmpi eq, %103, %104 : vector<4x32xi32>
    %106 = arith.extui %105 : vector<4x32xi1> to vector<4x32xi32>
    %107 = arith.sitofp %106 : vector<4x32xi32> to vector<4x32xf32>
    %cst_49 = arith.constant dense<0.000000e+00> : vector<128x32xf32>
    %108 = tpu.matmul %87, %107, %cst_49 {dimension_numbers = #tpu.dot_dimension_numbers<[1], [0], [0], [1], [0, 0, 1, 1], [], []>} : vector<128x4xf32>, vector<4x32xf32>, vector<128x32xf32> -> vector<128x32xf32>
    %109 = vector.shape_cast %108 : vector<128x32xf32> to vector<8x16x32xf32>
    %110 = arith.mulf %109, %72 : vector<8x16x32xf32>
    %cst_50 = arith.constant dense<0.000000e+00> : vector<16x32xf32>
    %111 = vector.multi_reduction <add>, %110, %cst_50 [0] : vector<8x16x32xf32> to vector<16x32xf32>
    %c1_51 = arith.constant 1 : index
    %c0_52 = arith.constant 0 : index
    %c0_53 = arith.constant 0 : index
    %112 = vector.load %arg7[%c1_51, %c0_52, %c0_53] : memref<4x32x32xf32, #tpu.memory_space<vmem>>, vector<1x32x32xf32>
    %113 = vector.shape_cast %112 : vector<1x32x32xf32> to vector<32x32xf32>
    %cst_54 = arith.constant dense<0.000000e+00> : vector<16x32xf32>
    %114 = tpu.matmul %111, %113, %cst_54 {dimension_numbers = #tpu.dot_dimension_numbers<[1], [0], [0], [1], [0, 0, 1, 1], [], []>} : vector<16x32xf32>, vector<32x32xf32>, vector<16x32xf32> -> vector<16x32xf32>
    %115 = arith.addf %102, %114 : vector<16x32xf32>
    %116 = tpu.iota {dimensions = array<i32: 0>} : vector<4x32xi32>
    %c2_i32_55 = arith.constant 2 : i32
    %117 = vector.broadcast %c2_i32_55 : i32 to vector<4x32xi32>
    %118 = arith.cmpi eq, %116, %117 : vector<4x32xi32>
    %119 = arith.extui %118 : vector<4x32xi1> to vector<4x32xi32>
    %120 = arith.sitofp %119 : vector<4x32xi32> to vector<4x32xf32>
    %cst_56 = arith.constant dense<0.000000e+00> : vector<128x32xf32>
    %121 = tpu.matmul %87, %120, %cst_56 {dimension_numbers = #tpu.dot_dimension_numbers<[1], [0], [0], [1], [0, 0, 1, 1], [], []>} : vector<128x4xf32>, vector<4x32xf32>, vector<128x32xf32> -> vector<128x32xf32>
    %122 = vector.shape_cast %121 : vector<128x32xf32> to vector<8x16x32xf32>
    %123 = arith.mulf %122, %72 : vector<8x16x32xf32>
    %cst_57 = arith.constant dense<0.000000e+00> : vector<16x32xf32>
    %124 = vector.multi_reduction <add>, %123, %cst_57 [0] : vector<8x16x32xf32> to vector<16x32xf32>
    %c2_58 = arith.constant 2 : index
    %c0_59 = arith.constant 0 : index
    %c0_60 = arith.constant 0 : index
    %125 = vector.load %arg7[%c2_58, %c0_59, %c0_60] : memref<4x32x32xf32, #tpu.memory_space<vmem>>, vector<1x32x32xf32>
    %126 = vector.shape_cast %125 : vector<1x32x32xf32> to vector<32x32xf32>
    %cst_61 = arith.constant dense<0.000000e+00> : vector<16x32xf32>
    %127 = tpu.matmul %124, %126, %cst_61 {dimension_numbers = #tpu.dot_dimension_numbers<[1], [0], [0], [1], [0, 0, 1, 1], [], []>} : vector<16x32xf32>, vector<32x32xf32>, vector<16x32xf32> -> vector<16x32xf32>
    %128 = arith.addf %115, %127 : vector<16x32xf32>
    %129 = tpu.iota {dimensions = array<i32: 0>} : vector<4x32xi32>
    %c3_i32_62 = arith.constant 3 : i32
    %130 = vector.broadcast %c3_i32_62 : i32 to vector<4x32xi32>
    %131 = arith.cmpi eq, %129, %130 : vector<4x32xi32>
    %132 = arith.extui %131 : vector<4x32xi1> to vector<4x32xi32>
    %133 = arith.sitofp %132 : vector<4x32xi32> to vector<4x32xf32>
    %cst_63 = arith.constant dense<0.000000e+00> : vector<128x32xf32>
    %134 = tpu.matmul %87, %133, %cst_63 {dimension_numbers = #tpu.dot_dimension_numbers<[1], [0], [0], [1], [0, 0, 1, 1], [], []>} : vector<128x4xf32>, vector<4x32xf32>, vector<128x32xf32> -> vector<128x32xf32>
    %135 = vector.shape_cast %134 : vector<128x32xf32> to vector<8x16x32xf32>
    %136 = arith.mulf %135, %72 : vector<8x16x32xf32>
    %cst_64 = arith.constant dense<0.000000e+00> : vector<16x32xf32>
    %137 = vector.multi_reduction <add>, %136, %cst_64 [0] : vector<8x16x32xf32> to vector<16x32xf32>
    %c3_65 = arith.constant 3 : index
    %c0_66 = arith.constant 0 : index
    %c0_67 = arith.constant 0 : index
    %138 = vector.load %arg7[%c3_65, %c0_66, %c0_67] : memref<4x32x32xf32, #tpu.memory_space<vmem>>, vector<1x32x32xf32>
    %139 = vector.shape_cast %138 : vector<1x32x32xf32> to vector<32x32xf32>
    %cst_68 = arith.constant dense<0.000000e+00> : vector<16x32xf32>
    %140 = tpu.matmul %137, %139, %cst_68 {dimension_numbers = #tpu.dot_dimension_numbers<[1], [0], [0], [1], [0, 0, 1, 1], [], []>} : vector<16x32xf32>, vector<32x32xf32>, vector<16x32xf32> -> vector<16x32xf32>
    %141 = arith.addf %128, %140 : vector<16x32xf32>
    %142 = arith.mulf %71, %141 : vector<16x32xf32>
    %c0_69 = arith.constant 0 : index
    %c0_70 = arith.constant 0 : index
    %143 = vector.load %arg9[%c0_69, %c0_70] : memref<16x32xf32, #tpu.memory_space<vmem>>, vector<16x32xf32>
    tpu.vector_store %arg9[%c0_69, %c0_70], %142 {strides = array<i32>} : memref<16x32xf32, #tpu.memory_space<vmem>>, vector<16x32xf32>,
    return
  }
  func.func @transform_0(%arg0: i32) -> (i32, i32, i32) {
    %c0_i32 = arith.constant 0 : i32
    %c0_i32_0 = arith.constant 0 : i32
    %c0_i32_1 = arith.constant 0 : i32
    return %c0_i32, %arg0, %c0_i32_0 : i32, i32, i32
  }
  func.func @transform_1(%arg0: i32) -> (i32, i32, i32) {
    %c0_i32 = arith.constant 0 : i32
    %c0_i32_0 = arith.constant 0 : i32
    %c0_i32_1 = arith.constant 0 : i32
    return %c0_i32, %arg0, %c0_i32_0 : i32, i32, i32
  }
  func.func @transform_2(%arg0: i32) -> (i32, i32) {
    %c0_i32 = arith.constant 0 : i32
    %c0_i32_0 = arith.constant 0 : i32
    %c0_i32_1 = arith.constant 0 : i32
    return %c0_i32, %c0_i32_0 : i32, i32
  }
  func.func @transform_3(%arg0: i32) -> (i32, i32) {
    %c0_i32 = arith.constant 0 : i32
    %c0_i32_0 = arith.constant 0 : i32
    %c0_i32_1 = arith.constant 0 : i32
    return %c0_i32, %c0_i32_0 : i32, i32
  }
  func.func @transform_4(%arg0: i32) -> (i32, i32, i32) {
    %c0_i32 = arith.constant 0 : i32
    %c0_i32_0 = arith.constant 0 : i32
    %c0_i32_1 = arith.constant 0 : i32
    %c0_i32_2 = arith.constant 0 : i32
    return %c0_i32, %c0_i32_0, %c0_i32_1 : i32, i32, i32
  }
  func.func @transform_5(%arg0: i32) -> (i32, i32) {
    %c0_i32 = arith.constant 0 : i32
    %c0_i32_0 = arith.constant 0 : i32
    %c0_i32_1 = arith.constant 0 : i32
    return %c0_i32, %c0_i32_0 : i32, i32
  }
  func.func @transform_6(%arg0: i32) -> (i32, i32, i32) {
    %c0_i32 = arith.constant 0 : i32
    %c0_i32_0 = arith.constant 0 : i32
    %c0_i32_1 = arith.constant 0 : i32
    %c0_i32_2 = arith.constant 0 : i32
    return %c0_i32, %c0_i32_0, %c0_i32_1 : i32, i32, i32
  }
  func.func @transform_7(%arg0: i32) -> (i32, i32) {
    %c0_i32 = arith.constant 0 : i32
    %c0_i32_0 = arith.constant 0 : i32
    %c0_i32_1 = arith.constant 0 : i32
    return %c0_i32, %c0_i32_0 : i32, i32
  }
  func.func @transform_8(%arg0: i32) -> (i32, i32) {
    %c0_i32 = arith.constant 0 : i32
    %c0_i32_0 = arith.constant 0 : i32
    return %arg0, %c0_i32 : i32, i32
  }
}

</mosaic_0001>

<llo_original>
// kernel: tpu_custom_call.1
$region0: #{tpu_custom_call.1}
  #allocation0 [shape = 'u32[]', space=smem, size = 0x4, offset = 0x4, fixed_abs, tag = 'smem constant byte address 0x4 - core index']
  #allocation1 [shape = 'u32[144,128]{1,0:T(1,128)}', space=vmem, size = 0x12000, scoped, tag = 'internal scratch']
  %s0 = inlined_call_operand.hbm [shape: f32[8,16,32], index: 0, kind: input, shape index: {}]
  %s1 = inlined_call_operand.hbm [shape: f32[8,16,32], index: 1, kind: input, shape index: {}]
  %s2 = inlined_call_operand.vmem [shape: f32[32,32], index: 2, kind: input, shape index: {}]
  %s3 = inlined_call_operand.vmem [shape: f32[32,4], index: 3, kind: input, shape index: {}]
  %s4 = inlined_call_operand.hbm [shape: f32[4,32,32], index: 4, kind: input, shape index: {}]
  %s5 = inlined_call_operand.vmem [shape: f32[1,32], index: 5, kind: input, shape index: {}]
  %s6 = inlined_call_operand.hbm [shape: f32[4,32,32], index: 6, kind: input, shape index: {}]
  %s7 = inlined_call_operand.vmem [shape: f32[1,32], index: 7, kind: input, shape index: {}]
  %s8 = inlined_call_operand.hbm [shape: f32[16,32], index: 8, kind: output, shape index: {}]
  %s9 = sld [smem:[#allocation0]]
  $region58: #{tpu_custom_call.1} parent=0
    _
  %s11 = ssub.s32 1, %s9
  %s12 = scalar_select 0, %s11, %s9
  $region1: #{tpu_custom_call.1} parent=0
    #allocation2 [shape = 'u8[65536]{0}', space=vmem, size = 0x10000, scoped, tag = 'input window, operand 0, single buffered']
    #allocation3 [shape = 's32[1]{0}', space=sflag, size = 0x4, scoped, tag = 'scoped memory for tpu_custom_call.1']
    #allocation4 [shape = 's32[1]{0}', space=sflag, size = 0x4, scoped, tag = 'scoped memory for tpu_custom_call.1']
    #allocation5 [shape = 'u8[65536]{0}', space=vmem, size = 0x10000, scoped, tag = 'input window, operand 1, single buffered']
    #allocation6 [shape = 's32[1]{0}', space=sflag, size = 0x4, scoped, tag = 'scoped memory for tpu_custom_call.1']
    #allocation7 [shape = 'u8[65536]{0}', space=vmem, size = 0x10000, scoped, tag = 'input window, operand 4, single buffered']
    #allocation8 [shape = 'u8[65536]{0}', space=vmem, size = 0x10000, scoped, tag = 'input window, operand 6, single buffered']
    #allocation9 [shape = 's32[1]{0}', space=sflag, size = 0x4, scoped, tag = 'scoped memory for tpu_custom_call.1']
    #allocation10 [shape = 'u8[8192]{0}', space=vmem, size = 0x2000, scoped, tag = 'output window, operand 0, single buffered']
    %13 = vsyncpa [#allocation3], 0
    %14 = vsyncpa [#allocation6], 0
    %15 = vsyncpa [#allocation9], 0
    %16 = vsyncpa [#allocation4], 0
    // Predicated region
    $region2: #{tpu_custom_call.1} parent=1 // pred_check
      _
    $region3: #{tpu_custom_call.1} parent=1 // pred_check_branch
      %18 = sbr.rel (0) target = $region5
    $region4: #{tpu_custom_call.1} parent=1 // pred_region
      %s20 = ssub.s32 2048, 2048
      %21 = vsyncadd [#allocation3], %s20
      %s22 = sshll.u32 [#allocation2], 4
      %s23 = int_to_ptr.vmem [resolvable:$true] %s22
      %28 = dma.hbm_to_vmem [thread:$0]  %s0, 2048, %s23, [#allocation3], 128, 128, 8
    $region5: #{tpu_custom_call.1} parent=1 // pred_fallthru
      _
    // Predicated region
    $region6: #{tpu_custom_call.1} parent=1 // pred_check
      _
    $region7: #{tpu_custom_call.1} parent=1 // pred_check_branch
      %30 = sbr.rel (0) target = $region9
    $region8: #{tpu_custom_call.1} parent=1 // pred_region
      %s32 = ssub.s32 2048, 2048
      %33 = vsyncadd [#allocation6], %s32
      %s34 = sshll.u32 [#allocation5], 4
      %s35 = int_to_ptr.vmem [resolvable:$true] %s34
      %40 = dma.hbm_to_vmem [thread:$0]  %s1, 2048, %s35, [#allocation6], 128, 128, 8
    $region9: #{tpu_custom_call.1} parent=1 // pred_fallthru
      _
    // Predicated region
    $region10: #{tpu_custom_call.1} parent=1 // pred_check
      _
    $region11: #{tpu_custom_call.1} parent=1 // pred_check_branch
      %42 = sbr.rel (0) target = $region13
    $region12: #{tpu_custom_call.1} parent=1 // pred_region
      _
    $region13: #{tpu_custom_call.1} parent=1 // pred_fallthru
      _
    // Predicated region
    $region14: #{tpu_custom_call.1} parent=1 // pred_check
      _
    $region15: #{tpu_custom_call.1} parent=1 // pred_check_branch
      %44 = sbr.rel (0) target = $region17
    $region16: #{tpu_custom_call.1} parent=1 // pred_region
      _
    $region17: #{tpu_custom_call.1} parent=1 // pred_fallthru
      _
    // Predicated region
    $region18: #{tpu_custom_call.1} parent=1 // pred_check
      _
    $region19: #{tpu_custom_call.1} parent=1 // pred_check_branch
      %46 = sbr.rel (0) target = $region21
    $region20: #{tpu_custom_call.1} parent=1 // pred_region
      %s48 = ssub.s32 2048, 2048
      %49 = vsyncadd [#allocation6], %s48
      %s50 = sshll.u32 [#allocation7], 4
      %s51 = int_to_ptr.vmem [resolvable:$true] %s50
      %56 = dma.hbm_to_vmem [thread:$0]  %s4, 2048, %s51, [#allocation6], 128, 128, 8
    $region21: #{tpu_custom_call.1} parent=1 // pred_fallthru
      _
    // Predicated region
    $region22: #{tpu_custom_call.1} parent=1 // pred_check
      _
    $region23: #{tpu_custom_call.1} parent=1 // pred_check_branch
      %58 = sbr.rel (0) target = $region25
    $region24: #{tpu_custom_call.1} parent=1 // pred_region
      _
    $region25: #{tpu_custom_call.1} parent=1 // pred_fallthru
      _
    // Predicated region
    $region26: #{tpu_custom_call.1} parent=1 // pred_check
      _
    $region27: #{tpu_custom_call.1} parent=1 // pred_check_branch
      %60 = sbr.rel (0) target = $region29
    $region28: #{tpu_custom_call.1} parent=1 // pred_region
      %s62 = ssub.s32 2048, 2048
      %63 = vsyncadd [#allocation9], %s62
      %s64 = sshll.u32 [#allocation8], 4
      %s65 = int_to_ptr.vmem [resolvable:$true] %s64
      %70 = dma.hbm_to_vmem [thread:$0]  %s6, 2048, %s65, [#allocation9], 128, 128, 8
    $region29: #{tpu_custom_call.1} parent=1 // pred_fallthru
      _
    // Predicated region
    $region30: #{tpu_custom_call.1} parent=1 // pred_check
      _
    $region31: #{tpu_custom_call.1} parent=1 // pred_check_branch
      %72 = sbr.rel (0) target = $region33
    $region32: #{tpu_custom_call.1} parent=1 // pred_region
      _
    $region33: #{tpu_custom_call.1} parent=1 // pred_fallthru
      _
    // Predicated region
    $region34: #{tpu_custom_call.1} parent=1 // pred_check
      _
    $region35: #{tpu_custom_call.1} parent=1 // pred_check_branch
      %74 = sbr.rel (0) target = $region37
    $region36: #{tpu_custom_call.1} parent=1 // pred_region
      %75 = dma.done [#allocation3], 2048
    $region37: #{tpu_custom_call.1} parent=1 // pred_fallthru
      _
    // Predicated region
    $region38: #{tpu_custom_call.1} parent=1 // pred_check
      _
    $region39: #{tpu_custom_call.1} parent=1 // pred_check_branch
      %77 = sbr.rel (0) target = $region41
    $region40: #{tpu_custom_call.1} parent=1 // pred_region
      %78 = dma.done [#allocation6], 2048
    $region41: #{tpu_custom_call.1} parent=1 // pred_fallthru
      _
    // Predicated region
    $region42: #{tpu_custom_call.1} parent=1 // pred_check
      _
    $region43: #{tpu_custom_call.1} parent=1 // pred_check_branch
      %80 = sbr.rel (0) target = $region45
    $region44: #{tpu_custom_call.1} parent=1 // pred_region
      %81 = dma.done [#allocation6], 2048
    $region45: #{tpu_custom_call.1} parent=1 // pred_fallthru
      _
    // Predicated region
    $region46: #{tpu_custom_call.1} parent=1 // pred_check
      _
    $region47: #{tpu_custom_call.1} parent=1 // pred_check_branch
      %83 = sbr.rel (0) target = $region49
    $region48: #{tpu_custom_call.1} parent=1 // pred_region
      %84 = dma.done [#allocation9], 2048
    $region49: #{tpu_custom_call.1} parent=1 // pred_fallthru
      _
    %v85 = vld [vmem:[%s2] sm:$0xff]
    %v86 = vld [vmem:[%s2 + $0x8] sm:$0xff]
    %v87 = vld [vmem:[%s2 + $0x10] sm:$0xff]
    %v88 = vld [vmem:[%s2 + $0x18] sm:$0xff]
    %v89 = vld [vmem:[%s3] sm:$0xff]
    %v90 = vld [vmem:[%s3 + $0x8] sm:$0xff]
    %v91 = vld [vmem:[%s3 + $0x10] sm:$0xff]
    %v92 = vld [vmem:[%s3 + $0x18] sm:$0xff]
    %v93 = vld [vmem:[#allocation2] sm:$0xff]
    %v94 = vld [vmem:[#allocation2 + $0x8] sm:$0xff]
    %v95 = vld [vmem:[#allocation2 + $0x10] sm:$0xff]
    %v96 = vld [vmem:[#allocation2 + $0x18] sm:$0xff]
    %v97 = vld [vmem:[#allocation2 + $0x20] sm:$0xff]
    %v98 = vld [vmem:[#allocation2 + $0x28] sm:$0xff]
    %v99 = vld [vmem:[#allocation2 + $0x30] sm:$0xff]
    %v100 = vld [vmem:[#allocation2 + $0x38] sm:$0xff]
    %v101 = vld [vmem:[#allocation2 + $0x40] sm:$0xff]
    %v102 = vld [vmem:[#allocation2 + $0x48] sm:$0xff]
    %v103 = vld [vmem:[#allocation2 + $0x50] sm:$0xff]
    %v104 = vld [vmem:[#allocation2 + $0x58] sm:$0xff]
    %v105 = vld [vmem:[#allocation2 + $0x60] sm:$0xff]
    %v106 = vld [vmem:[#allocation2 + $0x68] sm:$0xff]
    %v107 = vld [vmem:[#allocation2 + $0x70] sm:$0xff]
    %v108 = vld [vmem:[#allocation2 + $0x78] sm:$0xff]
    %vm109 = vcmask 261120
    %v111 = vsel %vm109, %v93, 0
    %v114 = vsel %vm109, %v94, 0
    %v117 = vsel %vm109, %v95, 0
    %v120 = vsel %vm109, %v96, 0
    %v123 = vsel %vm109, %v97, 0
    %v126 = vsel %vm109, %v98, 0
    %v129 = vsel %vm109, %v99, 0
    %v132 = vsel %vm109, %v100, 0
    %v135 = vsel %vm109, %v101, 0
    %v138 = vsel %vm109, %v102, 0
    %v141 = vsel %vm109, %v103, 0
    %v144 = vsel %vm109, %v104, 0
    %v147 = vsel %vm109, %v105, 0
    %v150 = vsel %vm109, %v106, 0
    %v153 = vsel %vm109, %v107, 0
    %v156 = vsel %vm109, %v108, 0
    %158 = vmatprep.subr.mxu0 0.0
    %159 = vmatpush1.msra.mxu0 0.0
    %160 = vmatprep.subr.mxu0 0.0
    %161 = vmatpush1.msra.mxu0 0.0
    %162 = vmatprep.subr.mxu0 0.0
    %163 = vmatpush1.msra.mxu0 0.0
    %164 = vmatprep.subr.mxu0 0.0
    %165 = vmatpush1.msra.mxu0 0.0
    %166 = vmatprep.subr.mxu0 0.0
    %167 = vmatpush1.msra.mxu0 0.0
    %168 = vmatprep.subr.mxu0 0.0
    %169 = vmatpush1.msra.mxu0 0.0
    %170 = vmatprep.subr.mxu0 0.0
    %171 = vmatpush1.msra.mxu0 0.0
    %172 = vmatprep.subr.mxu0 0.0
    %173 = vmatpush1.msra.mxu0 0.0
    %174 = vmatprep.subr.mxu0 0.0
    %175 = vmatpush1.msra.mxu0 0.0
    %176 = vmatprep.subr.mxu0 0.0
    %177 = vmatpush1.msra.mxu0 0.0
    %178 = vmatprep.subr.mxu0 0.0
    %179 = vmatpush1.msra.mxu0 0.0
    %180 = vmatprep.subr.mxu0 0.0
    %181 = vmatpush1.msra.mxu0 0.0
    %182 = vmatprep.subr.mxu0 0.0
    %183 = vmatpush1.msra.mxu0 %v88
    %184 = vmatprep.subr.mxu0 0.0
    %185 = vmatpush1.msra.mxu0 %v87
    %186 = vmatprep.subr.mxu0 0.0
    %187 = vmatpush1.msra.mxu0 %v86
    %188 = vmatprep.subr.mxu0 0.0
    %189 = vmatpush1.msra.mxu0 %v85
    %190 = vmatprep.subr.mxu0 0.0
    %191 = vmatpush2.msra.mxu0 0.0
    %192 = vmatprep.subr.mxu0 0.0
    %193 = vmatpush2.msra.mxu0 0.0
    %194 = vmatprep.subr.mxu0 0.0
    %195 = vmatpush2.msra.mxu0 0.0
    %196 = vmatprep.subr.mxu0 0.0
    %197 = vmatpush2.msra.mxu0 0.0
    %198 = vmatprep.subr.mxu0 0.0
    %199 = vmatpush2.msra.mxu0 0.0
    %200 = vmatprep.subr.mxu0 0.0
    %201 = vmatpush2.msra.mxu0 0.0
    %202 = vmatprep.subr.mxu0 0.0
    %203 = vmatpush2.msra.mxu0 0.0
    %204 = vmatprep.subr.mxu0 0.0
    %205 = vmatpush2.msra.mxu0 0.0
    %206 = vmatprep.subr.mxu0 0.0
    %207 = vmatpush2.msra.mxu0 0.0
    %208 = vmatprep.subr.mxu0 0.0
    %209 = vmatpush2.msra.mxu0 0.0
    %210 = vmatprep.subr.mxu0 0.0
    %211 = vmatpush2.msra.mxu0 0.0
    %212 = vmatprep.subr.mxu0 0.0
    %213 = vmatpush2.msra.mxu0 0.0
    %214 = vmatprep.subr.mxu0 0.0
    %215 = vmatpush2.msra.mxu0 0.0
    %216 = vmatprep.subr.mxu0 0.0
    %217 = vmatpush2.msra.mxu0 0.0
    %218 = vmatprep.subr.mxu0 0.0
    %219 = vmatpush2.msra.mxu0 0.0
    %220 = vmatprep.subr.mxu0 0.0
    %221 = vmatpush2.msra.mxu0 0.0
    %222 = vmatprep.mubr.f32.mxu0 0.0
    %223 = vmatmul.mubr.f32.gmra.mxu0 %v111
    %v224 = vpop.f32.mrf.mxu0
    %v225 = vadd.f32 0.0, %v224
    %v226 = vpop.f32.mrf.mxu0
    %227 = vmatprep.mubr.f32.mxu0 0.0
    %228 = vmatmul.mubr.f32.gmra.mxu0 %v114
    %v229 = vpop.f32.mrf.mxu0
    %v230 = vadd.f32 0.0, %v229
    %v231 = vpop.f32.mrf.mxu0
    %232 = vmatprep.mubr.f32.mxu0 0.0
    %233 = vmatmul.mubr.f32.gmra.mxu0 %v117
    %v234 = vpop.f32.mrf.mxu0
    %v235 = vadd.f32 0.0, %v234
    %v236 = vpop.f32.mrf.mxu0
    %237 = vmatprep.mubr.f32.mxu0 0.0
    %238 = vmatmul.mubr.f32.gmra.mxu0 %v120
    %v239 = vpop.f32.mrf.mxu0
    %v240 = vadd.f32 0.0, %v239
    %v241 = vpop.f32.mrf.mxu0
    %242 = vmatprep.mubr.f32.mxu0 0.0
    %243 = vmatmul.mubr.f32.gmra.mxu0 %v123
    %v244 = vpop.f32.mrf.mxu0
    %v245 = vadd.f32 0.0, %v244
    %v246 = vpop.f32.mrf.mxu0
    %247 = vmatprep.mubr.f32.mxu0 0.0
    %248 = vmatmul.mubr.f32.gmra.mxu0 %v126
    %v249 = vpop.f32.mrf.mxu0
    %v250 = vadd.f32 0.0, %v249
    %v251 = vpop.f32.mrf.mxu0
    %252 = vmatprep.mubr.f32.mxu0 0.0
    %253 = vmatmul.mubr.f32.gmra.mxu0 %v129
    %v254 = vpop.f32.mrf.mxu0
    %v255 = vadd.f32 0.0, %v254
    %v256 = vpop.f32.mrf.mxu0
    %257 = vmatprep.mubr.f32.mxu0 0.0
    %258 = vmatmul.mubr.f32.gmra.mxu0 %v132
    %v259 = vpop.f32.mrf.mxu0
    %v260 = vadd.f32 0.0, %v259
    %v261 = vpop.f32.mrf.mxu0
    %262 = vmatprep.mubr.f32.mxu0 0.0
    %263 = vmatmul.mubr.f32.gmra.mxu0 %v135
    %v264 = vpop.f32.mrf.mxu0
    %v265 = vadd.f32 0.0, %v264
    %v266 = vpop.f32.mrf.mxu0
    %267 = vmatprep.mubr.f32.mxu0 0.0
    %268 = vmatmul.mubr.f32.gmra.mxu0 %v138
    %v269 = vpop.f32.mrf.mxu0
    %v270 = vadd.f32 0.0, %v269
    %v271 = vpop.f32.mrf.mxu0
    %272 = vmatprep.mubr.f32.mxu0 0.0
    %273 = vmatmul.mubr.f32.gmra.mxu0 %v141
    %v274 = vpop.f32.mrf.mxu0
    %v275 = vadd.f32 0.0, %v274
    %v276 = vpop.f32.mrf.mxu0
    %277 = vmatprep.mubr.f32.mxu0 0.0
    %278 = vmatmul.mubr.f32.gmra.mxu0 %v144
    %v279 = vpop.f32.mrf.mxu0
    %v280 = vadd.f32 0.0, %v279
    %v281 = vpop.f32.mrf.mxu0
    %282 = vmatprep.mubr.f32.mxu0 0.0
    %283 = vmatmul.mubr.f32.gmra.mxu0 %v147
    %v284 = vpop.f32.mrf.mxu0
    %v285 = vadd.f32 0.0, %v284
    %v286 = vpop.f32.mrf.mxu0
    %287 = vmatprep.mubr.f32.mxu0 0.0
    %288 = vmatmul.mubr.f32.gmra.mxu0 %v150
    %v289 = vpop.f32.mrf.mxu0
    %v290 = vadd.f32 0.0, %v289
    %v291 = vpop.f32.mrf.mxu0
    %292 = vmatprep.mubr.f32.mxu0 0.0
    %293 = vmatmul.mubr.f32.gmra.mxu0 %v153
    %v294 = vpop.f32.mrf.mxu0
    %v295 = vadd.f32 0.0, %v294
    %v296 = vpop.f32.mrf.mxu0
    %297 = vmatprep.mubr.f32.mxu0 0.0
    %298 = vmatmul.mubr.f32.gmra.mxu0 %v156
    %v299 = vpop.f32.mrf.mxu0
    %v300 = vadd.f32 0.0, %v299
    %v301 = vpop.f32.mrf.mxu0
    %302 = vdwg.mxu0
    %v303 = vtanh.pop %v225
    %v304 = vtanh.pop %v230
    %v305 = vtanh.pop %v235
    %v306 = vtanh.pop %v240
    %v307 = vtanh.pop %v245
    %v308 = vtanh.pop %v250
    %v309 = vtanh.pop %v255
    %v310 = vtanh.pop %v260
    %v311 = vtanh.pop %v265
    %v312 = vtanh.pop %v270
    %v313 = vtanh.pop %v275
    %v314 = vtanh.pop %v280
    %v315 = vtanh.pop %v285
    %v316 = vtanh.pop %v290
    %v317 = vtanh.pop %v295
    %v318 = vtanh.pop %v300
    %v320 = vsel %vm109, %v303, 0
    %v323 = vsel %vm109, %v304, 0
    %v326 = vsel %vm109, %v305, 0
    %v329 = vsel %vm109, %v306, 0
    %v332 = vsel %vm109, %v307, 0
    %v335 = vsel %vm109, %v308, 0
    %v338 = vsel %vm109, %v309, 0
    %v341 = vsel %vm109, %v310, 0
    %v344 = vsel %vm109, %v311, 0
    %v347 = vsel %vm109, %v312, 0
    %v350 = vsel %vm109, %v313, 0
    %v353 = vsel %vm109, %v314, 0
    %v356 = vsel %vm109, %v315, 0
    %v359 = vsel %vm109, %v316, 0
    %v362 = vsel %vm109, %v317, 0
    %v365 = vsel %vm109, %v318, 0
    %367 = vmatprep.subr.mxu0 0.0
    %368 = vmatpush1.msra.mxu0 0.0
    %369 = vmatprep.subr.mxu0 0.0
    %370 = vmatpush1.msra.mxu0 0.0
    %371 = vmatprep.subr.mxu0 0.0
    %372 = vmatpush1.msra.mxu0 0.0
    %373 = vmatprep.subr.mxu0 0.0
    %374 = vmatpush1.msra.mxu0 0.0
    %375 = vmatprep.subr.mxu0 0.0
    %376 = vmatpush1.msra.mxu0 0.0
    %377 = vmatprep.subr.mxu0 0.0
    %378 = vmatpush1.msra.mxu0 0.0
    %379 = vmatprep.subr.mxu0 0.0
    %380 = vmatpush1.msra.mxu0 0.0
    %381 = vmatprep.subr.mxu0 0.0
    %382 = vmatpush1.msra.mxu0 0.0
    %383 = vmatprep.subr.mxu0 0.0
    %384 = vmatpush1.msra.mxu0 0.0
    %385 = vmatprep.subr.mxu0 0.0
    %386 = vmatpush1.msra.mxu0 0.0
    %387 = vmatprep.subr.mxu0 0.0
    %388 = vmatpush1.msra.mxu0 0.0
    %389 = vmatprep.subr.mxu0 0.0
    %390 = vmatpush1.msra.mxu0 0.0
    %391 = vmatprep.subr.mxu0 0.0
    %392 = vmatpush1.msra.mxu0 %v92
    %393 = vmatprep.subr.mxu0 0.0
    %394 = vmatpush1.msra.mxu0 %v91
    %395 = vmatprep.subr.mxu0 0.0
    %396 = vmatpush1.msra.mxu0 %v90
    %397 = vmatprep.subr.mxu0 0.0
    %398 = vmatpush1.msra.mxu0 %v89
    %399 = vmatprep.subr.mxu0 0.0
    %400 = vmatpush2.msra.mxu0 0.0
    %401 = vmatprep.subr.mxu0 0.0
    %402 = vmatpush2.msra.mxu0 0.0
    %403 = vmatprep.subr.mxu0 0.0
    %404 = vmatpush2.msra.mxu0 0.0
    %405 = vmatprep.subr.mxu0 0.0
    %406 = vmatpush2.msra.mxu0 0.0
    %407 = vmatprep.subr.mxu0 0.0
    %408 = vmatpush2.msra.mxu0 0.0
    %409 = vmatprep.subr.mxu0 0.0
    %410 = vmatpush2.msra.mxu0 0.0
    %411 = vmatprep.subr.mxu0 0.0
    %412 = vmatpush2.msra.mxu0 0.0
    %413 = vmatprep.subr.mxu0 0.0
    %414 = vmatpush2.msra.mxu0 0.0
    %415 = vmatprep.subr.mxu0 0.0
    %416 = vmatpush2.msra.mxu0 0.0
    %417 = vmatprep.subr.mxu0 0.0
    %418 = vmatpush2.msra.mxu0 0.0
    %419 = vmatprep.subr.mxu0 0.0
    %420 = vmatpush2.msra.mxu0 0.0
    %421 = vmatprep.subr.mxu0 0.0
    %422 = vmatpush2.msra.mxu0 0.0
    %423 = vmatprep.subr.mxu0 0.0
    %424 = vmatpush2.msra.mxu0 0.0
    %425 = vmatprep.subr.mxu0 0.0
    %426 = vmatpush2.msra.mxu0 0.0
    %427 = vmatprep.subr.mxu0 0.0
    %428 = vmatpush2.msra.mxu0 0.0
    %429 = vmatprep.subr.mxu0 0.0
    %430 = vmatpush2.msra.mxu0 0.0
    %431 = vmatprep.mubr.f32.mxu0 0.0
    %432 = vmatmul.mubr.f32.gmra.mxu0 %v320
    %v433 = vpop.f32.mrf.mxu0
    %v434 = vadd.f32 0.0, %v433
    %v435 = vpop.f32.mrf.mxu0
    %436 = vmatprep.mubr.f32.mxu0 0.0
    %437 = vmatmul.mubr.f32.gmra.mxu0 %v323
    %v438 = vpop.f32.mrf.mxu0
    %v439 = vadd.f32 0.0, %v438
    %v440 = vpop.f32.mrf.mxu0
    %441 = vmatprep.mubr.f32.mxu0 0.0
    %442 = vmatmul.mubr.f32.gmra.mxu0 %v326
    %v443 = vpop.f32.mrf.mxu0
    %v444 = vadd.f32 0.0, %v443
    %v445 = vpop.f32.mrf.mxu0
    %446 = vmatprep.mubr.f32.mxu0 0.0
    %447 = vmatmul.mubr.f32.gmra.mxu0 %v329
    %v448 = vpop.f32.mrf.mxu0
    %v449 = vadd.f32 0.0, %v448
    %v450 = vpop.f32.mrf.mxu0
    %451 = vmatprep.mubr.f32.mxu0 0.0
    %452 = vmatmul.mubr.f32.gmra.mxu0 %v332
    %v453 = vpop.f32.mrf.mxu0
    %v454 = vadd.f32 0.0, %v453
    %v455 = vpop.f32.mrf.mxu0
    %456 = vmatprep.mubr.f32.mxu0 0.0
    %457 = vmatmul.mubr.f32.gmra.mxu0 %v335
    %v458 = vpop.f32.mrf.mxu0
    %v459 = vadd.f32 0.0, %v458
    %v460 = vpop.f32.mrf.mxu0
    %461 = vmatprep.mubr.f32.mxu0 0.0
    %462 = vmatmul.mubr.f32.gmra.mxu0 %v338
    %v463 = vpop.f32.mrf.mxu0
    %v464 = vadd.f32 0.0, %v463
    %v465 = vpop.f32.mrf.mxu0
    %466 = vmatprep.mubr.f32.mxu0 0.0
    %467 = vmatmul.mubr.f32.gmra.mxu0 %v341
    %v468 = vpop.f32.mrf.mxu0
    %v469 = vadd.f32 0.0, %v468
    %v470 = vpop.f32.mrf.mxu0
    %471 = vmatprep.mubr.f32.mxu0 0.0
    %472 = vmatmul.mubr.f32.gmra.mxu0 %v344
    %v473 = vpop.f32.mrf.mxu0
    %v474 = vadd.f32 0.0, %v473
    %v475 = vpop.f32.mrf.mxu0
    %476 = vmatprep.mubr.f32.mxu0 0.0
    %477 = vmatmul.mubr.f32.gmra.mxu0 %v347
    %v478 = vpop.f32.mrf.mxu0
    %v479 = vadd.f32 0.0, %v478
    %v480 = vpop.f32.mrf.mxu0
    %481 = vmatprep.mubr.f32.mxu0 0.0
    %482 = vmatmul.mubr.f32.gmra.mxu0 %v350
    %v483 = vpop.f32.mrf.mxu0
    %v484 = vadd.f32 0.0, %v483
    %v485 = vpop.f32.mrf.mxu0
    %486 = vmatprep.mubr.f32.mxu0 0.0
    %487 = vmatmul.mubr.f32.gmra.mxu0 %v353
    %v488 = vpop.f32.mrf.mxu0
    %v489 = vadd.f32 0.0, %v488
    %v490 = vpop.f32.mrf.mxu0
    %491 = vmatprep.mubr.f32.mxu0 0.0
    %492 = vmatmul.mubr.f32.gmra.mxu0 %v356
    %v493 = vpop.f32.mrf.mxu0
    %v494 = vadd.f32 0.0, %v493
    %v495 = vpop.f32.mrf.mxu0
    %496 = vmatprep.mubr.f32.mxu0 0.0
    %497 = vmatmul.mubr.f32.gmra.mxu0 %v359
    %v498 = vpop.f32.mrf.mxu0
    %v499 = vadd.f32 0.0, %v498
    %v500 = vpop.f32.mrf.mxu0
    %501 = vmatprep.mubr.f32.mxu0 0.0
    %502 = vmatmul.mubr.f32.gmra.mxu0 %v362
    %v503 = vpop.f32.mrf.mxu0
    %v504 = vadd.f32 0.0, %v503
    %v505 = vpop.f32.mrf.mxu0
    %506 = vmatprep.mubr.f32.mxu0 0.0
    %507 = vmatmul.mubr.f32.gmra.mxu0 %v365
    %v508 = vpop.f32.mrf.mxu0
    %v509 = vadd.f32 0.0, %v508
    %v510 = vpop.f32.mrf.mxu0
    %511 = vdwg.mxu0
    %vm512 = vcmask 31744
    %v513 = vsel %vm512, %v434, -inf
    %v514 = vsel %vm512, %v444, -inf
    %v515 = vsel %vm512, %v454, -inf
    %v516 = vmax.f32 %v513, %v515
    %v517 = vsel %vm512, %v464, -inf
    %v518 = vmax.f32 %v514, %v517
    %v519 = vsel %vm512, %v474, -inf
    %v520 = vmax.f32 %v516, %v519
    %v521 = vsel %vm512, %v484, -inf
    %v522 = vmax.f32 %v518, %v521
    %v523 = vsel %vm512, %v494, -inf
    %v524 = vmax.f32 %v520, %v523
    %v525 = vsel %vm512, %v504, -inf
    %v526 = vmax.f32 %v522, %v525
    %v527 = vmax.f32 %v524, %v526
    %v528 = vsel %vm512, %v439, -inf
    %v529 = vsel %vm512, %v449, -inf
    %v530 = vsel %vm512, %v459, -inf
    %v531 = vmax.f32 %v528, %v530
    %v532 = vsel %vm512, %v469, -inf
    %v533 = vmax.f32 %v529, %v532
    %v534 = vsel %vm512, %v479, -inf
    %v535 = vmax.f32 %v531, %v534
    %v536 = vsel %vm512, %v489, -inf
    %v537 = vmax.f32 %v533, %v536
    %v538 = vsel %vm512, %v499, -inf
    %v539 = vmax.f32 %v535, %v538
    %v540 = vsel %vm512, %v509, -inf
    %v541 = vmax.f32 %v537, %v540
    %v542 = vmax.f32 %v539, %v541
    %v543 = vsub.f32 %v434, %v527
    %v544 = vsub.f32 %v439, %v542
    %v545 = vsub.f32 %v444, %v527
    %v546 = vsub.f32 %v449, %v542
    %v547 = vsub.f32 %v454, %v527
    %v548 = vsub.f32 %v459, %v542
    %v549 = vsub.f32 %v464, %v527
    %v550 = vsub.f32 %v469, %v542
    %v551 = vsub.f32 %v474, %v527
    %v552 = vsub.f32 %v479, %v542
    %v553 = vsub.f32 %v484, %v527
    %v554 = vsub.f32 %v489, %v542
    %v555 = vsub.f32 %v494, %v527
    %v556 = vsub.f32 %v499, %v542
    %v557 = vsub.f32 %v504, %v527
    %v558 = vsub.f32 %v509, %v542
    %v559 = vmul.f32 %v543, 1.442695
    %v560 = vpow.pop %v559
    %v561 = vmul.f32 %v544, 1.442695
    %v562 = vpow.pop %v561
    %v563 = vmul.f32 %v545, 1.442695
    %v564 = vpow.pop %v563
    %v565 = vmul.f32 %v546, 1.442695
    %v566 = vpow.pop %v565
    %v567 = vmul.f32 %v547, 1.442695
    %v568 = vpow.pop %v567
    %v569 = vmul.f32 %v548, 1.442695
    %v570 = vpow.pop %v569
    %v571 = vmul.f32 %v549, 1.442695
    %v572 = vpow.pop %v571
    %v573 = vmul.f32 %v550, 1.442695
    %v574 = vpow.pop %v573
    %v575 = vmul.f32 %v551, 1.442695
    %v576 = vpow.pop %v575
    %v577 = vmul.f32 %v552, 1.442695
    %v578 = vpow.pop %v577
    %v579 = vmul.f32 %v553, 1.442695
    %v580 = vpow.pop %v579
    %v581 = vmul.f32 %v554, 1.442695
    %v582 = vpow.pop %v581
    %v583 = vmul.f32 %v555, 1.442695
    %v584 = vpow.pop %v583
    %v585 = vmul.f32 %v556, 1.442695
    %v586 = vpow.pop %v585
    %v587 = vmul.f32 %v557, 1.442695
    %v588 = vpow.pop %v587
    %v589 = vmul.f32 %v558, 1.442695
    %v590 = vpow.pop %v589
    %v591 = vsel %vm512, %v560, 0.0
    %v592 = vsel %vm512, %v564, 0.0
    %v593 = vadd.f32 %v591, %v592
    %v594 = vsel %vm512, %v568, 0.0
    %v595 = vadd.f32 %v593, %v594
    %v596 = vsel %vm512, %v572, 0.0
    %v597 = vadd.f32 %v595, %v596
    %v598 = vsel %vm512, %v576, 0.0
    %v599 = vadd.f32 %v597, %v598
    %v600 = vsel %vm512, %v580, 0.0
    %v601 = vadd.f32 %v599, %v600
    %v602 = vsel %vm512, %v584, 0.0
    %v603 = vadd.f32 %v601, %v602
    %v604 = vsel %vm512, %v588, 0.0
    %v605 = vadd.f32 %v603, %v604
    %v606 = vsel %vm512, %v562, 0.0
    %v607 = vsel %vm512, %v566, 0.0
    %v608 = vadd.f32 %v606, %v607
    %v609 = vsel %vm512, %v570, 0.0
    %v610 = vadd.f32 %v608, %v609
    %v611 = vsel %vm512, %v574, 0.0
    %v612 = vadd.f32 %v610, %v611
    %v613 = vsel %vm512, %v578, 0.0
    %v614 = vadd.f32 %v612, %v613
    %v615 = vsel %vm512, %v582, 0.0
    %v616 = vadd.f32 %v614, %v615
    %v617 = vsel %vm512, %v586, 0.0
    %v618 = vadd.f32 %v616, %v617
    %v619 = vsel %vm512, %v590, 0.0
    %v620 = vadd.f32 %v618, %v619
    %v621 = vrcp.pop %v605
    %v622 = vmul.f32 %v560, %v621
    %v623 = vrcp.pop %v620
    %v624 = vmul.f32 %v562, %v623
    %v625 = vmul.f32 %v564, %v621
    %v626 = vmul.f32 %v566, %v623
    %v627 = vmul.f32 %v568, %v621
    %v628 = vmul.f32 %v570, %v623
    %v629 = vmul.f32 %v572, %v621
    %v630 = vmul.f32 %v574, %v623
    %v631 = vmul.f32 %v576, %v621
    %v632 = vmul.f32 %v578, %v623
    %v633 = vmul.f32 %v580, %v621
    %v634 = vmul.f32 %v582, %v623
    %v635 = vmul.f32 %v584, %v621
    %v636 = vmul.f32 %v586, %v623
    %v637 = vmul.f32 %v588, %v621
    %v638 = vmul.f32 %v590, %v623
    %v639 = vld [vmem:[%s5] sm:$0x1]
    %v640 = vlaneseq
    %v641 = vshrl.u32 %v640, 7
    %vm642 = vcmp.eq.s32.totalorder %v641, 0
    %v643 = vsel %vm642, 1, 0
    %v644 = vcvt.s32.f32 %v643
    %v646 = vsel %vm512, %v622, 0
    %v649 = vsel %vm512, %v624, 0
    %v652 = vsel %vm512, %v625, 0
    %v655 = vsel %vm512, %v626, 0
    %v658 = vsel %vm512, %v627, 0
    %v661 = vsel %vm512, %v628, 0
    %v664 = vsel %vm512, %v629, 0
    %v667 = vsel %vm512, %v630, 0
    %v670 = vsel %vm512, %v631, 0
    %v673 = vsel %vm512, %v632, 0
    %v676 = vsel %vm512, %v633, 0
    %v679 = vsel %vm512, %v634, 0
    %v682 = vsel %vm512, %v635, 0
    %v685 = vsel %vm512, %v636, 0
    %v688 = vsel %vm512, %v637, 0
    %v691 = vsel %vm512, %v638, 0
    %vm693 = vcmask 1043456
    %v695 = vsel %vm693, %v644, 0
    %697 = vmatprep.subr.mxu0 0.0
    %698 = vmatpush1.msra.mxu0 0.0
    %699 = vmatprep.subr.mxu0 0.0
    %700 = vmatpush1.msra.mxu0 0.0
    %701 = vmatprep.subr.mxu0 0.0
    %702 = vmatpush1.msra.mxu0 0.0
    %703 = vmatprep.subr.mxu0 0.0
    %704 = vmatpush1.msra.mxu0 0.0
    %705 = vmatprep.subr.mxu0 0.0
    %706 = vmatpush1.msra.mxu0 0.0
    %707 = vmatprep.subr.mxu0 0.0
    %708 = vmatpush1.msra.mxu0 0.0
    %709 = vmatprep.subr.mxu0 0.0
    %710 = vmatpush1.msra.mxu0 0.0
    %711 = vmatprep.subr.mxu0 0.0
    %712 = vmatpush1.msra.mxu0 0.0
    %713 = vmatprep.subr.mxu0 0.0
    %714 = vmatpush1.msra.mxu0 0.0
    %715 = vmatprep.subr.mxu0 0.0
    %716 = vmatpush1.msra.mxu0 0.0
    %717 = vmatprep.subr.mxu0 0.0
    %718 = vmatpush1.msra.mxu0 0.0
    %719 = vmatprep.subr.mxu0 0.0
    %720 = vmatpush1.msra.mxu0 0.0
    %721 = vmatprep.subr.mxu0 0.0
    %722 = vmatpush1.msra.mxu0 0.0
    %723 = vmatprep.subr.mxu0 0.0
    %724 = vmatpush1.msra.mxu0 0.0
    %725 = vmatprep.subr.mxu0 0.0
    %726 = vmatpush1.msra.mxu0 0.0
    %727 = vmatprep.subr.mxu0 0.0
    %728 = vmatpush1.msra.mxu0 %v695
    %729 = vmatprep.subr.mxu0 0.0
    %730 = vmatpush2.msra.mxu0 0.0
    %731 = vmatprep.subr.mxu0 0.0
    %732 = vmatpush2.msra.mxu0 0.0
    %733 = vmatprep.subr.mxu0 0.0
    %734 = vmatpush2.msra.mxu0 0.0
    %735 = vmatprep.subr.mxu0 0.0
    %736 = vmatpush2.msra.mxu0 0.0
    %737 = vmatprep.subr.mxu0 0.0
    %738 = vmatpush2.msra.mxu0 0.0
    %739 = vmatprep.subr.mxu0 0.0
    %740 = vmatpush2.msra.mxu0 0.0
    %741 = vmatprep.subr.mxu0 0.0
    %742 = vmatpush2.msra.mxu0 0.0
    %743 = vmatprep.subr.mxu0 0.0
    %744 = vmatpush2.msra.mxu0 0.0
    %745 = vmatprep.subr.mxu0 0.0
    %746 = vmatpush2.msra.mxu0 0.0
    %747 = vmatprep.subr.mxu0 0.0
    %748 = vmatpush2.msra.mxu0 0.0
    %749 = vmatprep.subr.mxu0 0.0
    %750 = vmatpush2.msra.mxu0 0.0
    %751 = vmatprep.subr.mxu0 0.0
    %752 = vmatpush2.msra.mxu0 0.0
    %753 = vmatprep.subr.mxu0 0.0
    %754 = vmatpush2.msra.mxu0 0.0
    %755 = vmatprep.subr.mxu0 0.0
    %756 = vmatpush2.msra.mxu0 0.0
    %757 = vmatprep.subr.mxu0 0.0
    %758 = vmatpush2.msra.mxu0 0.0
    %759 = vmatprep.subr.mxu0 0.0
    %760 = vmatpush2.msra.mxu0 0.0
    %761 = vmatprep.mubr.f32.mxu0 0.0
    %762 = vmatmul.mubr.f32.gmra.mxu0 %v646
    %v763 = vpop.f32.mrf.mxu0
    %v764 = vadd.f32 0.0, %v763
    %v765 = vpop.f32.mrf.mxu0
    %766 = vmatprep.mubr.f32.mxu0 0.0
    %767 = vmatmul.mubr.f32.gmra.mxu0 %v649
    %v768 = vpop.f32.mrf.mxu0
    %v769 = vadd.f32 0.0, %v768
    %v770 = vpop.f32.mrf.mxu0
    %771 = vmatprep.mubr.f32.mxu0 0.0
    %772 = vmatmul.mubr.f32.gmra.mxu0 %v652
    %v773 = vpop.f32.mrf.mxu0
    %v774 = vadd.f32 0.0, %v773
    %v775 = vpop.f32.mrf.mxu0
    %776 = vmatprep.mubr.f32.mxu0 0.0
    %777 = vmatmul.mubr.f32.gmra.mxu0 %v655
    %v778 = vpop.f32.mrf.mxu0
    %v779 = vadd.f32 0.0, %v778
    %v780 = vpop.f32.mrf.mxu0
    %781 = vmatprep.mubr.f32.mxu0 0.0
    %782 = vmatmul.mubr.f32.gmra.mxu0 %v658
    %v783 = vpop.f32.mrf.mxu0
    %v784 = vadd.f32 0.0, %v783
    %v785 = vpop.f32.mrf.mxu0
    %786 = vmatprep.mubr.f32.mxu0 0.0
    %787 = vmatmul.mubr.f32.gmra.mxu0 %v661
    %v788 = vpop.f32.mrf.mxu0
    %v789 = vadd.f32 0.0, %v788
    %v790 = vpop.f32.mrf.mxu0
    %791 = vmatprep.mubr.f32.mxu0 0.0
    %792 = vmatmul.mubr.f32.gmra.mxu0 %v664
    %v793 = vpop.f32.mrf.mxu0
    %v794 = vadd.f32 0.0, %v793
    %v795 = vpop.f32.mrf.mxu0
    %796 = vmatprep.mubr.f32.mxu0 0.0
    %797 = vmatmul.mubr.f32.gmra.mxu0 %v667
    %v798 = vpop.f32.mrf.mxu0
    %v799 = vadd.f32 0.0, %v798
    %v800 = vpop.f32.mrf.mxu0
    %801 = vmatprep.mubr.f32.mxu0 0.0
    %802 = vmatmul.mubr.f32.gmra.mxu0 %v670
    %v803 = vpop.f32.mrf.mxu0
    %v804 = vadd.f32 0.0, %v803
    %v805 = vpop.f32.mrf.mxu0
    %806 = vmatprep.mubr.f32.mxu0 0.0
    %807 = vmatmul.mubr.f32.gmra.mxu0 %v673
    %v808 = vpop.f32.mrf.mxu0
    %v809 = vadd.f32 0.0, %v808
    %v810 = vpop.f32.mrf.mxu0
    %811 = vmatprep.mubr.f32.mxu0 0.0
    %812 = vmatmul.mubr.f32.gmra.mxu0 %v676
    %v813 = vpop.f32.mrf.mxu0
    %v814 = vadd.f32 0.0, %v813
    %v815 = vpop.f32.mrf.mxu0
    %816 = vmatprep.mubr.f32.mxu0 0.0
    %817 = vmatmul.mubr.f32.gmra.mxu0 %v679
    %v818 = vpop.f32.mrf.mxu0
    %v819 = vadd.f32 0.0, %v818
    %v820 = vpop.f32.mrf.mxu0
    %821 = vmatprep.mubr.f32.mxu0 0.0
    %822 = vmatmul.mubr.f32.gmra.mxu0 %v682
    %v823 = vpop.f32.mrf.mxu0
    %v824 = vadd.f32 0.0, %v823
    %v825 = vpop.f32.mrf.mxu0
    %826 = vmatprep.mubr.f32.mxu0 0.0
    %827 = vmatmul.mubr.f32.gmra.mxu0 %v685
    %v828 = vpop.f32.mrf.mxu0
    %v829 = vadd.f32 0.0, %v828
    %v830 = vpop.f32.mrf.mxu0
    %831 = vmatprep.mubr.f32.mxu0 0.0
    %832 = vmatmul.mubr.f32.gmra.mxu0 %v688
    %v833 = vpop.f32.mrf.mxu0
    %v834 = vadd.f32 0.0, %v833
    %v835 = vpop.f32.mrf.mxu0
    %836 = vmatprep.mubr.f32.mxu0 0.0
    %837 = vmatmul.mubr.f32.gmra.mxu0 %v691
    %v838 = vpop.f32.mrf.mxu0
    %v839 = vadd.f32 0.0, %v838
    %v840 = vpop.f32.mrf.mxu0
    %841 = vdwg.mxu0
    %v842 = vmul.f32 %v764, %v93
    %v843 = vmul.f32 %v769, %v94
    %v844 = vmul.f32 %v774, %v95
    %v845 = vmul.f32 %v779, %v96
    %v846 = vmul.f32 %v784, %v97
    %v847 = vmul.f32 %v789, %v98
    %v848 = vmul.f32 %v794, %v99
    %v849 = vmul.f32 %v799, %v100
    %v850 = vmul.f32 %v804, %v101
    %v851 = vmul.f32 %v809, %v102
    %v852 = vmul.f32 %v814, %v103
    %v853 = vmul.f32 %v819, %v104
    %v854 = vmul.f32 %v824, %v105
    %v855 = vmul.f32 %v829, %v106
    %v856 = vmul.f32 %v834, %v107
    %v857 = vmul.f32 %v839, %v108
    %v858 = vsel %vm109, %v842, 0.0
    %v859 = vsel %vm109, %v844, 0.0
    %v860 = vadd.f32 %v858, %v859
    %v861 = vsel %vm109, %v846, 0.0
    %v862 = vadd.f32 %v860, %v861
    %v863 = vsel %vm109, %v848, 0.0
    %v864 = vadd.f32 %v862, %v863
    %v865 = vsel %vm109, %v850, 0.0
    %v866 = vadd.f32 %v864, %v865
    %v867 = vsel %vm109, %v852, 0.0
    %v868 = vadd.f32 %v866, %v867
    %v869 = vsel %vm109, %v854, 0.0
    %v870 = vadd.f32 %v868, %v869
    %v871 = vsel %vm109, %v856, 0.0
    %v872 = vadd.f32 %v870, %v871
    %v873 = vsel %vm109, %v843, 0.0
    %v874 = vsel %vm109, %v845, 0.0
    %v875 = vadd.f32 %v873, %v874
    %v876 = vsel %vm109, %v847, 0.0
    %v877 = vadd.f32 %v875, %v876
    %v878 = vsel %vm109, %v849, 0.0
    %v879 = vadd.f32 %v877, %v878
    %v880 = vsel %vm109, %v851, 0.0
    %v881 = vadd.f32 %v879, %v880
    %v882 = vsel %vm109, %v853, 0.0
    %v883 = vadd.f32 %v881, %v882
    %v884 = vsel %vm109, %v855, 0.0
    %v885 = vadd.f32 %v883, %v884
    %v886 = vsel %vm109, %v857, 0.0
    %v887 = vadd.f32 %v885, %v886
    %v888 = vld [vmem:[#allocation7] sm:$0xff]
    %v889 = vld [vmem:[#allocation7 + $0x8] sm:$0xff]
    %v890 = vld [vmem:[#allocation7 + $0x10] sm:$0xff]
    %v891 = vld [vmem:[#allocation7 + $0x18] sm:$0xff]
    %v893 = vsel %vm109, %v872, 0
    %v896 = vsel %vm109, %v887, 0
    %898 = vmatprep.subr.mxu0 0.0
    %899 = vmatpush1.msra.mxu0 0.0
    %900 = vmatprep.subr.mxu0 0.0
    %901 = vmatpush1.msra.mxu0 0.0
    %902 = vmatprep.subr.mxu0 0.0
    %903 = vmatpush1.msra.mxu0 0.0
    %904 = vmatprep.subr.mxu0 0.0
    %905 = vmatpush1.msra.mxu0 0.0
    %906 = vmatprep.subr.mxu0 0.0
    %907 = vmatpush1.msra.mxu0 0.0
    %908 = vmatprep.subr.mxu0 0.0
    %909 = vmatpush1.msra.mxu0 0.0
    %910 = vmatprep.subr.mxu0 0.0
    %911 = vmatpush1.msra.mxu0 0.0
    %912 = vmatprep.subr.mxu0 0.0
    %913 = vmatpush1.msra.mxu0 0.0
    %914 = vmatprep.subr.mxu0 0.0
    %915 = vmatpush1.msra.mxu0 0.0
    %916 = vmatprep.subr.mxu0 0.0
    %917 = vmatpush1.msra.mxu0 0.0
    %918 = vmatprep.subr.mxu0 0.0
    %919 = vmatpush1.msra.mxu0 0.0
    %920 = vmatprep.subr.mxu0 0.0
    %921 = vmatpush1.msra.mxu0 0.0
    %922 = vmatprep.subr.mxu0 0.0
    %923 = vmatpush1.msra.mxu0 %v891
    %924 = vmatprep.subr.mxu0 0.0
    %925 = vmatpush1.msra.mxu0 %v890
    %926 = vmatprep.subr.mxu0 0.0
    %927 = vmatpush1.msra.mxu0 %v889
    %928 = vmatprep.subr.mxu0 0.0
    %929 = vmatpush1.msra.mxu0 %v888
    %930 = vmatprep.subr.mxu0 0.0
    %931 = vmatpush2.msra.mxu0 0.0
    %932 = vmatprep.subr.mxu0 0.0
    %933 = vmatpush2.msra.mxu0 0.0
    %934 = vmatprep.subr.mxu0 0.0
    %935 = vmatpush2.msra.mxu0 0.0
    %936 = vmatprep.subr.mxu0 0.0
    %937 = vmatpush2.msra.mxu0 0.0
    %938 = vmatprep.subr.mxu0 0.0
    %939 = vmatpush2.msra.mxu0 0.0
    %940 = vmatprep.subr.mxu0 0.0
    %941 = vmatpush2.msra.mxu0 0.0
    %942 = vmatprep.subr.mxu0 0.0
    %943 = vmatpush2.msra.mxu0 0.0
    %944 = vmatprep.subr.mxu0 0.0
    %945 = vmatpush2.msra.mxu0 0.0
    %946 = vmatprep.subr.mxu0 0.0
    %947 = vmatpush2.msra.mxu0 0.0
    %948 = vmatprep.subr.mxu0 0.0
    %949 = vmatpush2.msra.mxu0 0.0
    %950 = vmatprep.subr.mxu0 0.0
    %951 = vmatpush2.msra.mxu0 0.0
    %952 = vmatprep.subr.mxu0 0.0
    %953 = vmatpush2.msra.mxu0 0.0
    %954 = vmatprep.subr.mxu0 0.0
    %955 = vmatpush2.msra.mxu0 0.0
    %956 = vmatprep.subr.mxu0 0.0
    %957 = vmatpush2.msra.mxu0 0.0
    %958 = vmatprep.subr.mxu0 0.0
    %959 = vmatpush2.msra.mxu0 0.0
    %960 = vmatprep.subr.mxu0 0.0
    %961 = vmatpush2.msra.mxu0 0.0
    %962 = vmatprep.mubr.f32.mxu0 0.0
    %963 = vmatmul.mubr.f32.gmra.mxu0 %v893
    %v964 = vpop.f32.mrf.mxu0
    %v965 = vadd.f32 0.0, %v964
    %v966 = vpop.f32.mrf.mxu0
    %967 = vmatprep.mubr.f32.mxu0 0.0
    %968 = vmatmul.mubr.f32.gmra.mxu0 %v896
    %v969 = vpop.f32.mrf.mxu0
    %v970 = vadd.f32 0.0, %v969
    %v971 = vpop.f32.mrf.mxu0
    %972 = vdwg.mxu0
    %v974 = vlaneseq
    %v975 = vshrl.u32 %v974, 7
    %v976 = vsub.s32 0, %v975
    %v977 = vrot.slane %v639, %v976
    %v979 = vadd.f32 %v977, %v965
    %v980 = vadd.f32 %v977, %v970
    %vm981 = vcmp.eq.s32.totalorder %v641, 1
    %v982 = vsel %vm981, 1, 0
    %v983 = vcvt.s32.f32 %v982
    %v985 = vsel %vm693, %v983, 0
    %987 = vmatprep.subr.mxu0 0.0
    %988 = vmatpush1.msra.mxu0 0.0
    %989 = vmatprep.subr.mxu0 0.0
    %990 = vmatpush1.msra.mxu0 0.0
    %991 = vmatprep.subr.mxu0 0.0
    %992 = vmatpush1.msra.mxu0 0.0
    %993 = vmatprep.subr.mxu0 0.0
    %994 = vmatpush1.msra.mxu0 0.0
    %995 = vmatprep.subr.mxu0 0.0
    %996 = vmatpush1.msra.mxu0 0.0
    %997 = vmatprep.subr.mxu0 0.0
    %998 = vmatpush1.msra.mxu0 0.0
    %999 = vmatprep.subr.mxu0 0.0
    %1000 = vmatpush1.msra.mxu0 0.0
    %1001 = vmatprep.subr.mxu0 0.0
    %1002 = vmatpush1.msra.mxu0 0.0
    %1003 = vmatprep.subr.mxu0 0.0
    %1004 = vmatpush1.msra.mxu0 0.0
    %1005 = vmatprep.subr.mxu0 0.0
    %1006 = vmatpush1.msra.mxu0 0.0
    %1007 = vmatprep.subr.mxu0 0.0
    %1008 = vmatpush1.msra.mxu0 0.0
    %1009 = vmatprep.subr.mxu0 0.0
    %1010 = vmatpush1.msra.mxu0 0.0
    %1011 = vmatprep.subr.mxu0 0.0
    %1012 = vmatpush1.msra.mxu0 0.0
    %1013 = vmatprep.subr.mxu0 0.0
    %1014 = vmatpush1.msra.mxu0 0.0
    %1015 = vmatprep.subr.mxu0 0.0
    %1016 = vmatpush1.msra.mxu0 0.0
    %1017 = vmatprep.subr.mxu0 0.0
    %1018 = vmatpush1.msra.mxu0 %v985
    %1019 = vmatprep.subr.mxu0 0.0
    %1020 = vmatpush2.msra.mxu0 0.0
    %1021 = vmatprep.subr.mxu0 0.0
    %1022 = vmatpush2.msra.mxu0 0.0
    %1023 = vmatprep.subr.mxu0 0.0
    %1024 = vmatpush2.msra.mxu0 0.0
    %1025 = vmatprep.subr.mxu0 0.0
    %1026 = vmatpush2.msra.mxu0 0.0
    %1027 = vmatprep.subr.mxu0 0.0
    %1028 = vmatpush2.msra.mxu0 0.0
    %1029 = vmatprep.subr.mxu0 0.0
    %1030 = vmatpush2.msra.mxu0 0.0
    %1031 = vmatprep.subr.mxu0 0.0
    %1032 = vmatpush2.msra.mxu0 0.0
    %1033 = vmatprep.subr.mxu0 0.0
    %1034 = vmatpush2.msra.mxu0 0.0
    %1035 = vmatprep.subr.mxu0 0.0
    %1036 = vmatpush2.msra.mxu0 0.0
    %1037 = vmatprep.subr.mxu0 0.0
    %1038 = vmatpush2.msra.mxu0 0.0
    %1039 = vmatprep.subr.mxu0 0.0
    %1040 = vmatpush2.msra.mxu0 0.0
    %1041 = vmatprep.subr.mxu0 0.0
    %1042 = vmatpush2.msra.mxu0 0.0
    %1043 = vmatprep.subr.mxu0 0.0
    %1044 = vmatpush2.msra.mxu0 0.0
    %1045 = vmatprep.subr.mxu0 0.0
    %1046 = vmatpush2.msra.mxu0 0.0
    %1047 = vmatprep.subr.mxu0 0.0
    %1048 = vmatpush2.msra.mxu0 0.0
    %1049 = vmatprep.subr.mxu0 0.0
    %1050 = vmatpush2.msra.mxu0 0.0
    %1051 = vmatprep.mubr.f32.mxu0 0.0
    %1052 = vmatmul.mubr.f32.gmra.mxu0 %v646
    %v1053 = vpop.f32.mrf.mxu0
    %v1054 = vadd.f32 0.0, %v1053
    %v1055 = vpop.f32.mrf.mxu0
    %1056 = vmatprep.mubr.f32.mxu0 0.0
    %1057 = vmatmul.mubr.f32.gmra.mxu0 %v649
    %v1058 = vpop.f32.mrf.mxu0
    %v1059 = vadd.f32 0.0, %v1058
    %v1060 = vpop.f32.mrf.mxu0
    %1061 = vmatprep.mubr.f32.mxu0 0.0
    %1062 = vmatmul.mubr.f32.gmra.mxu0 %v652
    %v1063 = vpop.f32.mrf.mxu0
    %v1064 = vadd.f32 0.0, %v1063
    %v1065 = vpop.f32.mrf.mxu0
    %1066 = vmatprep.mubr.f32.mxu0 0.0
    %1067 = vmatmul.mubr.f32.gmra.mxu0 %v655
    %v1068 = vpop.f32.mrf.mxu0
    %v1069 = vadd.f32 0.0, %v1068
    %v1070 = vpop.f32.mrf.mxu0
    %1071 = vmatprep.mubr.f32.mxu0 0.0
    %1072 = vmatmul.mubr.f32.gmra.mxu0 %v658
    %v1073 = vpop.f32.mrf.mxu0
    %v1074 = vadd.f32 0.0, %v1073
    %v1075 = vpop.f32.mrf.mxu0
    %1076 = vmatprep.mubr.f32.mxu0 0.0
    %1077 = vmatmul.mubr.f32.gmra.mxu0 %v661
    %v1078 = vpop.f32.mrf.mxu0
    %v1079 = vadd.f32 0.0, %v1078
    %v1080 = vpop.f32.mrf.mxu0
    %1081 = vmatprep.mubr.f32.mxu0 0.0
    %1082 = vmatmul.mubr.f32.gmra.mxu0 %v664
    %v1083 = vpop.f32.mrf.mxu0
    %v1084 = vadd.f32 0.0, %v1083
    %v1085 = vpop.f32.mrf.mxu0
    %1086 = vmatprep.mubr.f32.mxu0 0.0
    %1087 = vmatmul.mubr.f32.gmra.mxu0 %v667
    %v1088 = vpop.f32.mrf.mxu0
    %v1089 = vadd.f32 0.0, %v1088
    %v1090 = vpop.f32.mrf.mxu0
    %1091 = vmatprep.mubr.f32.mxu0 0.0
    %1092 = vmatmul.mubr.f32.gmra.mxu0 %v670
    %v1093 = vpop.f32.mrf.mxu0
    %v1094 = vadd.f32 0.0, %v1093
    %v1095 = vpop.f32.mrf.mxu0
    %1096 = vmatprep.mubr.f32.mxu0 0.0
    %1097 = vmatmul.mubr.f32.gmra.mxu0 %v673
    %v1098 = vpop.f32.mrf.mxu0
    %v1099 = vadd.f32 0.0, %v1098
    %v1100 = vpop.f32.mrf.mxu0
    %1101 = vmatprep.mubr.f32.mxu0 0.0
    %1102 = vmatmul.mubr.f32.gmra.mxu0 %v676
    %v1103 = vpop.f32.mrf.mxu0
    %v1104 = vadd.f32 0.0, %v1103
    %v1105 = vpop.f32.mrf.mxu0
    %1106 = vmatprep.mubr.f32.mxu0 0.0
    %1107 = vmatmul.mubr.f32.gmra.mxu0 %v679
    %v1108 = vpop.f32.mrf.mxu0
    %v1109 = vadd.f32 0.0, %v1108
    %v1110 = vpop.f32.mrf.mxu0
    %1111 = vmatprep.mubr.f32.mxu0 0.0
    %1112 = vmatmul.mubr.f32.gmra.mxu0 %v682
    %v1113 = vpop.f32.mrf.mxu0
    %v1114 = vadd.f32 0.0, %v1113
    %v1115 = vpop.f32.mrf.mxu0
    %1116 = vmatprep.mubr.f32.mxu0 0.0
    %1117 = vmatmul.mubr.f32.gmra.mxu0 %v685
    %v1118 = vpop.f32.mrf.mxu0
    %v1119 = vadd.f32 0.0, %v1118
    %v1120 = vpop.f32.mrf.mxu0
    %1121 = vmatprep.mubr.f32.mxu0 0.0
    %1122 = vmatmul.mubr.f32.gmra.mxu0 %v688
    %v1123 = vpop.f32.mrf.mxu0
    %v1124 = vadd.f32 0.0, %v1123
    %v1125 = vpop.f32.mrf.mxu0
    %1126 = vmatprep.mubr.f32.mxu0 0.0
    %1127 = vmatmul.mubr.f32.gmra.mxu0 %v691
    %v1128 = vpop.f32.mrf.mxu0
    %v1129 = vadd.f32 0.0, %v1128
    %v1130 = vpop.f32.mrf.mxu0
    %1131 = vdwg.mxu0
    %v1132 = vmul.f32 %v1054, %v93
    %v1133 = vmul.f32 %v1059, %v94
    %v1134 = vmul.f32 %v1064, %v95
    %v1135 = vmul.f32 %v1069, %v96
    %v1136 = vmul.f32 %v1074, %v97
    %v1137 = vmul.f32 %v1079, %v98
    %v1138 = vmul.f32 %v1084, %v99
    %v1139 = vmul.f32 %v1089, %v100
    %v1140 = vmul.f32 %v1094, %v101
    %v1141 = vmul.f32 %v1099, %v102
    %v1142 = vmul.f32 %v1104, %v103
    %v1143 = vmul.f32 %v1109, %v104
    %v1144 = vmul.f32 %v1114, %v105
    %v1145 = vmul.f32 %v1119, %v106
    %v1146 = vmul.f32 %v1124, %v107
    %v1147 = vmul.f32 %v1129, %v108
    %v1148 = vsel %vm109, %v1132, 0.0
    %v1149 = vsel %vm109, %v1134, 0.0
    %v1150 = vadd.f32 %v1148, %v1149
    %v1151 = vsel %vm109, %v1136, 0.0
    %v1152 = vadd.f32 %v1150, %v1151
    %v1153 = vsel %vm109, %v1138, 0.0
    %v1154 = vadd.f32 %v1152, %v1153
    %v1155 = vsel %vm109, %v1140, 0.0
    %v1156 = vadd.f32 %v1154, %v1155
    %v1157 = vsel %vm109, %v1142, 0.0
    %v1158 = vadd.f32 %v1156, %v1157
    %v1159 = vsel %vm109, %v1144, 0.0
    %v1160 = vadd.f32 %v1158, %v1159
    %v1161 = vsel %vm109, %v1146, 0.0
    %v1162 = vadd.f32 %v1160, %v1161
    %v1163 = vsel %vm109, %v1133, 0.0
    %v1164 = vsel %vm109, %v1135, 0.0
    %v1165 = vadd.f32 %v1163, %v1164
    %v1166 = vsel %vm109, %v1137, 0.0
    %v1167 = vadd.f32 %v1165, %v1166
    %v1168 = vsel %vm109, %v1139, 0.0
    %v1169 = vadd.f32 %v1167, %v1168
    %v1170 = vsel %vm109, %v1141, 0.0
    %v1171 = vadd.f32 %v1169, %v1170
    %v1172 = vsel %vm109, %v1143, 0.0
    %v1173 = vadd.f32 %v1171, %v1172
    %v1174 = vsel %vm109, %v1145, 0.0
    %v1175 = vadd.f32 %v1173, %v1174
    %v1176 = vsel %vm109, %v1147, 0.0
    %v1177 = vadd.f32 %v1175, %v1176
    %s1178 = scalar_lea.vmem [#allocation7], 32
    %v1179 = vld [vmem:[%s1178] sm:$0xff]
    %v1180 = vld [vmem:[%s1178 + $0x8] sm:$0xff]
    %v1181 = vld [vmem:[%s1178 + $0x10] sm:$0xff]
    %v1182 = vld [vmem:[%s1178 + $0x18] sm:$0xff]
    %v1184 = vsel %vm109, %v1162, 0
    %v1187 = vsel %vm109, %v1177, 0
    %1189 = vmatprep.subr.mxu0 0.0
    %1190 = vmatpush1.msra.mxu0 0.0
    %1191 = vmatprep.subr.mxu0 0.0
    %1192 = vmatpush1.msra.mxu0 0.0
    %1193 = vmatprep.subr.mxu0 0.0
    %1194 = vmatpush1.msra.mxu0 0.0
    %1195 = vmatprep.subr.mxu0 0.0
    %1196 = vmatpush1.msra.mxu0 0.0
    %1197 = vmatprep.subr.mxu0 0.0
    %1198 = vmatpush1.msra.mxu0 0.0
    %1199 = vmatprep.subr.mxu0 0.0
    %1200 = vmatpush1.msra.mxu0 0.0
    %1201 = vmatprep.subr.mxu0 0.0
    %1202 = vmatpush1.msra.mxu0 0.0
    %1203 = vmatprep.subr.mxu0 0.0
    %1204 = vmatpush1.msra.mxu0 0.0
    %1205 = vmatprep.subr.mxu0 0.0
    %1206 = vmatpush1.msra.mxu0 0.0
    %1207 = vmatprep.subr.mxu0 0.0
    %1208 = vmatpush1.msra.mxu0 0.0
    %1209 = vmatprep.subr.mxu0 0.0
    %1210 = vmatpush1.msra.mxu0 0.0
    %1211 = vmatprep.subr.mxu0 0.0
    %1212 = vmatpush1.msra.mxu0 0.0
    %1213 = vmatprep.subr.mxu0 0.0
    %1214 = vmatpush1.msra.mxu0 %v1182
    %1215 = vmatprep.subr.mxu0 0.0
    %1216 = vmatpush1.msra.mxu0 %v1181
    %1217 = vmatprep.subr.mxu0 0.0
    %1218 = vmatpush1.msra.mxu0 %v1180
    %1219 = vmatprep.subr.mxu0 0.0
    %1220 = vmatpush1.msra.mxu0 %v1179
    %1221 = vmatprep.subr.mxu0 0.0
    %1222 = vmatpush2.msra.mxu0 0.0
    %1223 = vmatprep.subr.mxu0 0.0
    %1224 = vmatpush2.msra.mxu0 0.0
    %1225 = vmatprep.subr.mxu0 0.0
    %1226 = vmatpush2.msra.mxu0 0.0
    %1227 = vmatprep.subr.mxu0 0.0
    %1228 = vmatpush2.msra.mxu0 0.0
    %1229 = vmatprep.subr.mxu0 0.0
    %1230 = vmatpush2.msra.mxu0 0.0
    %1231 = vmatprep.subr.mxu0 0.0
    %1232 = vmatpush2.msra.mxu0 0.0
    %1233 = vmatprep.subr.mxu0 0.0
    %1234 = vmatpush2.msra.mxu0 0.0
    %1235 = vmatprep.subr.mxu0 0.0
    %1236 = vmatpush2.msra.mxu0 0.0
    %1237 = vmatprep.subr.mxu0 0.0
    %1238 = vmatpush2.msra.mxu0 0.0
    %1239 = vmatprep.subr.mxu0 0.0
    %1240 = vmatpush2.msra.mxu0 0.0
    %1241 = vmatprep.subr.mxu0 0.0
    %1242 = vmatpush2.msra.mxu0 0.0
    %1243 = vmatprep.subr.mxu0 0.0
    %1244 = vmatpush2.msra.mxu0 0.0
    %1245 = vmatprep.subr.mxu0 0.0
    %1246 = vmatpush2.msra.mxu0 0.0
    %1247 = vmatprep.subr.mxu0 0.0
    %1248 = vmatpush2.msra.mxu0 0.0
    %1249 = vmatprep.subr.mxu0 0.0
    %1250 = vmatpush2.msra.mxu0 0.0
    %1251 = vmatprep.subr.mxu0 0.0
    %1252 = vmatpush2.msra.mxu0 0.0
    %1253 = vmatprep.mubr.f32.mxu0 0.0
    %1254 = vmatmul.mubr.f32.gmra.mxu0 %v1184
    %v1255 = vpop.f32.mrf.mxu0
    %v1256 = vadd.f32 0.0, %v1255
    %v1257 = vpop.f32.mrf.mxu0
    %1258 = vmatprep.mubr.f32.mxu0 0.0
    %1259 = vmatmul.mubr.f32.gmra.mxu0 %v1187
    %v1260 = vpop.f32.mrf.mxu0
    %v1261 = vadd.f32 0.0, %v1260
    %v1262 = vpop.f32.mrf.mxu0
    %1263 = vdwg.mxu0
    %v1264 = vadd.f32 %v979, %v1256
    %v1265 = vadd.f32 %v980, %v1261
    %vm1266 = vcmp.eq.s32.totalorder %v641, 2
    %v1267 = vsel %vm1266, 1, 0
    %v1268 = vcvt.s32.f32 %v1267
    %v1270 = vsel %vm693, %v1268, 0
    %1272 = vmatprep.subr.mxu0 0.0
    %1273 = vmatpush1.msra.mxu0 0.0
    %1274 = vmatprep.subr.mxu0 0.0
    %1275 = vmatpush1.msra.mxu0 0.0
    %1276 = vmatprep.subr.mxu0 0.0
    %1277 = vmatpush1.msra.mxu0 0.0
    %1278 = vmatprep.subr.mxu0 0.0
    %1279 = vmatpush1.msra.mxu0 0.0
    %1280 = vmatprep.subr.mxu0 0.0
    %1281 = vmatpush1.msra.mxu0 0.0
    %1282 = vmatprep.subr.mxu0 0.0
    %1283 = vmatpush1.msra.mxu0 0.0
    %1284 = vmatprep.subr.mxu0 0.0
    %1285 = vmatpush1.msra.mxu0 0.0
    %1286 = vmatprep.subr.mxu0 0.0
    %1287 = vmatpush1.msra.mxu0 0.0
    %1288 = vmatprep.subr.mxu0 0.0
    %1289 = vmatpush1.msra.mxu0 0.0
    %1290 = vmatprep.subr.mxu0 0.0
    %1291 = vmatpush1.msra.mxu0 0.0
    %1292 = vmatprep.subr.mxu0 0.0
    %1293 = vmatpush1.msra.mxu0 0.0
    %1294 = vmatprep.subr.mxu0 0.0
    %1295 = vmatpush1.msra.mxu0 0.0
    %1296 = vmatprep.subr.mxu0 0.0
    %1297 = vmatpush1.msra.mxu0 0.0
    %1298 = vmatprep.subr.mxu0 0.0
    %1299 = vmatpush1.msra.mxu0 0.0
    %1300 = vmatprep.subr.mxu0 0.0
    %1301 = vmatpush1.msra.mxu0 0.0
    %1302 = vmatprep.subr.mxu0 0.0
    %1303 = vmatpush1.msra.mxu0 %v1270
    %1304 = vmatprep.subr.mxu0 0.0
    %1305 = vmatpush2.msra.mxu0 0.0
    %1306 = vmatprep.subr.mxu0 0.0
    %1307 = vmatpush2.msra.mxu0 0.0
    %1308 = vmatprep.subr.mxu0 0.0
    %1309 = vmatpush2.msra.mxu0 0.0
    %1310 = vmatprep.subr.mxu0 0.0
    %1311 = vmatpush2.msra.mxu0 0.0
    %1312 = vmatprep.subr.mxu0 0.0
    %1313 = vmatpush2.msra.mxu0 0.0
    %1314 = vmatprep.subr.mxu0 0.0
    %1315 = vmatpush2.msra.mxu0 0.0
    %1316 = vmatprep.subr.mxu0 0.0
    %1317 = vmatpush2.msra.mxu0 0.0
    %1318 = vmatprep.subr.mxu0 0.0
    %1319 = vmatpush2.msra.mxu0 0.0
    %1320 = vmatprep.subr.mxu0 0.0
    %1321 = vmatpush2.msra.mxu0 0.0
    %1322 = vmatprep.subr.mxu0 0.0
    %1323 = vmatpush2.msra.mxu0 0.0
    %1324 = vmatprep.subr.mxu0 0.0
    %1325 = vmatpush2.msra.mxu0 0.0
    %1326 = vmatprep.subr.mxu0 0.0
    %1327 = vmatpush2.msra.mxu0 0.0
    %1328 = vmatprep.subr.mxu0 0.0
    %1329 = vmatpush2.msra.mxu0 0.0
    %1330 = vmatprep.subr.mxu0 0.0
    %1331 = vmatpush2.msra.mxu0 0.0
    %1332 = vmatprep.subr.mxu0 0.0
    %1333 = vmatpush2.msra.mxu0 0.0
    %1334 = vmatprep.subr.mxu0 0.0
    %1335 = vmatpush2.msra.mxu0 0.0
    %1336 = vmatprep.mubr.f32.mxu0 0.0
    %1337 = vmatmul.mubr.f32.gmra.mxu0 %v646
    %v1338 = vpop.f32.mrf.mxu0
    %v1339 = vadd.f32 0.0, %v1338
    %v1340 = vpop.f32.mrf.mxu0
    %1341 = vmatprep.mubr.f32.mxu0 0.0
    %1342 = vmatmul.mubr.f32.gmra.mxu0 %v649
    %v1343 = vpop.f32.mrf.mxu0
    %v1344 = vadd.f32 0.0, %v1343
    %v1345 = vpop.f32.mrf.mxu0
    %1346 = vmatprep.mubr.f32.mxu0 0.0
    %1347 = vmatmul.mubr.f32.gmra.mxu0 %v652
    %v1348 = vpop.f32.mrf.mxu0
    %v1349 = vadd.f32 0.0, %v1348
    %v1350 = vpop.f32.mrf.mxu0
    %1351 = vmatprep.mubr.f32.mxu0 0.0
    %1352 = vmatmul.mubr.f32.gmra.mxu0 %v655
    %v1353 = vpop.f32.mrf.mxu0
    %v1354 = vadd.f32 0.0, %v1353
    %v1355 = vpop.f32.mrf.mxu0
    %1356 = vmatprep.mubr.f32.mxu0 0.0
    %1357 = vmatmul.mubr.f32.gmra.mxu0 %v658
    %v1358 = vpop.f32.mrf.mxu0
    %v1359 = vadd.f32 0.0, %v1358
    %v1360 = vpop.f32.mrf.mxu0
    %1361 = vmatprep.mubr.f32.mxu0 0.0
    %1362 = vmatmul.mubr.f32.gmra.mxu0 %v661
    %v1363 = vpop.f32.mrf.mxu0
    %v1364 = vadd.f32 0.0, %v1363
    %v1365 = vpop.f32.mrf.mxu0
    %1366 = vmatprep.mubr.f32.mxu0 0.0
    %1367 = vmatmul.mubr.f32.gmra.mxu0 %v664
    %v1368 = vpop.f32.mrf.mxu0
    %v1369 = vadd.f32 0.0, %v1368
    %v1370 = vpop.f32.mrf.mxu0
    %1371 = vmatprep.mubr.f32.mxu0 0.0
    %1372 = vmatmul.mubr.f32.gmra.mxu0 %v667
    %v1373 = vpop.f32.mrf.mxu0
    %v1374 = vadd.f32 0.0, %v1373
    %v1375 = vpop.f32.mrf.mxu0
    %1376 = vmatprep.mubr.f32.mxu0 0.0
    %1377 = vmatmul.mubr.f32.gmra.mxu0 %v670
    %v1378 = vpop.f32.mrf.mxu0
    %v1379 = vadd.f32 0.0, %v1378
    %v1380 = vpop.f32.mrf.mxu0
    %1381 = vmatprep.mubr.f32.mxu0 0.0
    %1382 = vmatmul.mubr.f32.gmra.mxu0 %v673
    %v1383 = vpop.f32.mrf.mxu0
    %v1384 = vadd.f32 0.0, %v1383
    %v1385 = vpop.f32.mrf.mxu0
    %1386 = vmatprep.mubr.f32.mxu0 0.0
    %1387 = vmatmul.mubr.f32.gmra.mxu0 %v676
    %v1388 = vpop.f32.mrf.mxu0
    %v1389 = vadd.f32 0.0, %v1388
    %v1390 = vpop.f32.mrf.mxu0
    %1391 = vmatprep.mubr.f32.mxu0 0.0
    %1392 = vmatmul.mubr.f32.gmra.mxu0 %v679
    %v1393 = vpop.f32.mrf.mxu0
    %v1394 = vadd.f32 0.0, %v1393
    %v1395 = vpop.f32.mrf.mxu0
    %1396 = vmatprep.mubr.f32.mxu0 0.0
    %1397 = vmatmul.mubr.f32.gmra.mxu0 %v682
    %v1398 = vpop.f32.mrf.mxu0
    %v1399 = vadd.f32 0.0, %v1398
    %v1400 = vpop.f32.mrf.mxu0
    %1401 = vmatprep.mubr.f32.mxu0 0.0
    %1402 = vmatmul.mubr.f32.gmra.mxu0 %v685
    %v1403 = vpop.f32.mrf.mxu0
    %v1404 = vadd.f32 0.0, %v1403
    %v1405 = vpop.f32.mrf.mxu0
    %1406 = vmatprep.mubr.f32.mxu0 0.0
    %1407 = vmatmul.mubr.f32.gmra.mxu0 %v688
    %v1408 = vpop.f32.mrf.mxu0
    %v1409 = vadd.f32 0.0, %v1408
    %v1410 = vpop.f32.mrf.mxu0
    %1411 = vmatprep.mubr.f32.mxu0 0.0
    %1412 = vmatmul.mubr.f32.gmra.mxu0 %v691
    %v1413 = vpop.f32.mrf.mxu0
    %v1414 = vadd.f32 0.0, %v1413
    %v1415 = vpop.f32.mrf.mxu0
    %1416 = vdwg.mxu0
    %v1417 = vmul.f32 %v1339, %v93
    %v1418 = vmul.f32 %v1344, %v94
    %v1419 = vmul.f32 %v1349, %v95
    %v1420 = vmul.f32 %v1354, %v96
    %v1421 = vmul.f32 %v1359, %v97
    %v1422 = vmul.f32 %v1364, %v98
    %v1423 = vmul.f32 %v1369, %v99
    %v1424 = vmul.f32 %v1374, %v100
    %v1425 = vmul.f32 %v1379, %v101
    %v1426 = vmul.f32 %v1384, %v102
    %v1427 = vmul.f32 %v1389, %v103
    %v1428 = vmul.f32 %v1394, %v104
    %v1429 = vmul.f32 %v1399, %v105
    %v1430 = vmul.f32 %v1404, %v106
    %v1431 = vmul.f32 %v1409, %v107
    %v1432 = vmul.f32 %v1414, %v108
    %v1433 = vsel %vm109, %v1417, 0.0
    %v1434 = vsel %vm109, %v1419, 0.0
    %v1435 = vadd.f32 %v1433, %v1434
    %v1436 = vsel %vm109, %v1421, 0.0
    %v1437 = vadd.f32 %v1435, %v1436
    %v1438 = vsel %vm109, %v1423, 0.0
    %v1439 = vadd.f32 %v1437, %v1438
    %v1440 = vsel %vm109, %v1425, 0.0
    %v1441 = vadd.f32 %v1439, %v1440
    %v1442 = vsel %vm109, %v1427, 0.0
    %v1443 = vadd.f32 %v1441, %v1442
    %v1444 = vsel %vm109, %v1429, 0.0
    %v1445 = vadd.f32 %v1443, %v1444
    %v1446 = vsel %vm109, %v1431, 0.0
    %v1447 = vadd.f32 %v1445, %v1446
    %v1448 = vsel %vm109, %v1418, 0.0
    %v1449 = vsel %vm109, %v1420, 0.0
    %v1450 = vadd.f32 %v1448, %v1449
    %v1451 = vsel %vm109, %v1422, 0.0
    %v1452 = vadd.f32 %v1450, %v1451
    %v1453 = vsel %vm109, %v1424, 0.0
    %v1454 = vadd.f32 %v1452, %v1453
    %v1455 = vsel %vm109, %v1426, 0.0
    %v1456 = vadd.f32 %v1454, %v1455
    %v1457 = vsel %vm109, %v1428, 0.0
    %v1458 = vadd.f32 %v1456, %v1457
    %v1459 = vsel %vm109, %v1430, 0.0
    %v1460 = vadd.f32 %v1458, %v1459
    %v1461 = vsel %vm109, %v1432, 0.0
    %v1462 = vadd.f32 %v1460, %v1461
    %s1463 = scalar_lea.vmem [#allocation7], 64
    %v1464 = vld [vmem:[%s1463] sm:$0xff]
    %v1465 = vld [vmem:[%s1463 + $0x8] sm:$0xff]
    %v1466 = vld [vmem:[%s1463 + $0x10] sm:$0xff]
    %v1467 = vld [vmem:[%s1463 + $0x18] sm:$0xff]
    %v1469 = vsel %vm109, %v1447, 0
    %v1472 = vsel %vm109, %v1462, 0
    %1474 = vmatprep.subr.mxu0 0.0
    %1475 = vmatpush1.msra.mxu0 0.0
    %1476 = vmatprep.subr.mxu0 0.0
    %1477 = vmatpush1.msra.mxu0 0.0
    %1478 = vmatprep.subr.mxu0 0.0
    %1479 = vmatpush1.msra.mxu0 0.0
    %1480 = vmatprep.subr.mxu0 0.0
    %1481 = vmatpush1.msra.mxu0 0.0
    %1482 = vmatprep.subr.mxu0 0.0
    %1483 = vmatpush1.msra.mxu0 0.0
    %1484 = vmatprep.subr.mxu0 0.0
    %1485 = vmatpush1.msra.mxu0 0.0
    %1486 = vmatprep.subr.mxu0 0.0
    %1487 = vmatpush1.msra.mxu0 0.0
    %1488 = vmatprep.subr.mxu0 0.0
    %1489 = vmatpush1.msra.mxu0 0.0
    %1490 = vmatprep.subr.mxu0 0.0
    %1491 = vmatpush1.msra.mxu0 0.0
    %1492 = vmatprep.subr.mxu0 0.0
    %1493 = vmatpush1.msra.mxu0 0.0
    %1494 = vmatprep.subr.mxu0 0.0
    %1495 = vmatpush1.msra.mxu0 0.0
    %1496 = vmatprep.subr.mxu0 0.0
    %1497 = vmatpush1.msra.mxu0 0.0
    %1498 = vmatprep.subr.mxu0 0.0
    %1499 = vmatpush1.msra.mxu0 %v1467
    %1500 = vmatprep.subr.mxu0 0.0
    %1501 = vmatpush1.msra.mxu0 %v1466
    %1502 = vmatprep.subr.mxu0 0.0
    %1503 = vmatpush1.msra.mxu0 %v1465
    %1504 = vmatprep.subr.mxu0 0.0
    %1505 = vmatpush1.msra.mxu0 %v1464
    %1506 = vmatprep.subr.mxu0 0.0
    %1507 = vmatpush2.msra.mxu0 0.0
    %1508 = vmatprep.subr.mxu0 0.0
    %1509 = vmatpush2.msra.mxu0 0.0
    %1510 = vmatprep.subr.mxu0 0.0
    %1511 = vmatpush2.msra.mxu0 0.0
    %1512 = vmatprep.subr.mxu0 0.0
    %1513 = vmatpush2.msra.mxu0 0.0
    %1514 = vmatprep.subr.mxu0 0.0
    %1515 = vmatpush2.msra.mxu0 0.0
    %1516 = vmatprep.subr.mxu0 0.0
    %1517 = vmatpush2.msra.mxu0 0.0
    %1518 = vmatprep.subr.mxu0 0.0
    %1519 = vmatpush2.msra.mxu0 0.0
    %1520 = vmatprep.subr.mxu0 0.0
    %1521 = vmatpush2.msra.mxu0 0.0
    %1522 = vmatprep.subr.mxu0 0.0
    %1523 = vmatpush2.msra.mxu0 0.0
    %1524 = vmatprep.subr.mxu0 0.0
    %1525 = vmatpush2.msra.mxu0 0.0
    %1526 = vmatprep.subr.mxu0 0.0
    %1527 = vmatpush2.msra.mxu0 0.0
    %1528 = vmatprep.subr.mxu0 0.0
    %1529 = vmatpush2.msra.mxu0 0.0
    %1530 = vmatprep.subr.mxu0 0.0
    %1531 = vmatpush2.msra.mxu0 0.0
    %1532 = vmatprep.subr.mxu0 0.0
    %1533 = vmatpush2.msra.mxu0 0.0
    %1534 = vmatprep.subr.mxu0 0.0
    %1535 = vmatpush2.msra.mxu0 0.0
    %1536 = vmatprep.subr.mxu0 0.0
    %1537 = vmatpush2.msra.mxu0 0.0
    %1538 = vmatprep.mubr.f32.mxu0 0.0
    %1539 = vmatmul.mubr.f32.gmra.mxu0 %v1469
    %v1540 = vpop.f32.mrf.mxu0
    %v1541 = vadd.f32 0.0, %v1540
    %v1542 = vpop.f32.mrf.mxu0
    %1543 = vmatprep.mubr.f32.mxu0 0.0
    %1544 = vmatmul.mubr.f32.gmra.mxu0 %v1472
    %v1545 = vpop.f32.mrf.mxu0
    %v1546 = vadd.f32 0.0, %v1545
    %v1547 = vpop.f32.mrf.mxu0
    %1548 = vdwg.mxu0
    %v1549 = vadd.f32 %v1264, %v1541
    %v1550 = vadd.f32 %v1265, %v1546
    %vm1551 = vcmp.eq.s32.totalorder %v641, 3
    %v1552 = vsel %vm1551, 1, 0
    %v1553 = vcvt.s32.f32 %v1552
    %v1555 = vsel %vm693, %v1553, 0
    %1557 = vmatprep.subr.mxu0 0.0
    %1558 = vmatpush1.msra.mxu0 0.0
    %1559 = vmatprep.subr.mxu0 0.0
    %1560 = vmatpush1.msra.mxu0 0.0
    %1561 = vmatprep.subr.mxu0 0.0
    %1562 = vmatpush1.msra.mxu0 0.0
    %1563 = vmatprep.subr.mxu0 0.0
    %1564 = vmatpush1.msra.mxu0 0.0
    %1565 = vmatprep.subr.mxu0 0.0
    %1566 = vmatpush1.msra.mxu0 0.0
    %1567 = vmatprep.subr.mxu0 0.0
    %1568 = vmatpush1.msra.mxu0 0.0
    %1569 = vmatprep.subr.mxu0 0.0
    %1570 = vmatpush1.msra.mxu0 0.0
    %1571 = vmatprep.subr.mxu0 0.0
    %1572 = vmatpush1.msra.mxu0 0.0
    %1573 = vmatprep.subr.mxu0 0.0
    %1574 = vmatpush1.msra.mxu0 0.0
    %1575 = vmatprep.subr.mxu0 0.0
    %1576 = vmatpush1.msra.mxu0 0.0
    %1577 = vmatprep.subr.mxu0 0.0
    %1578 = vmatpush1.msra.mxu0 0.0
    %1579 = vmatprep.subr.mxu0 0.0
    %1580 = vmatpush1.msra.mxu0 0.0
    %1581 = vmatprep.subr.mxu0 0.0
    %1582 = vmatpush1.msra.mxu0 0.0
    %1583 = vmatprep.subr.mxu0 0.0
    %1584 = vmatpush1.msra.mxu0 0.0
    %1585 = vmatprep.subr.mxu0 0.0
    %1586 = vmatpush1.msra.mxu0 0.0
    %1587 = vmatprep.subr.mxu0 0.0
    %1588 = vmatpush1.msra.mxu0 %v1555
    %1589 = vmatprep.subr.mxu0 0.0
    %1590 = vmatpush2.msra.mxu0 0.0
    %1591 = vmatprep.subr.mxu0 0.0
    %1592 = vmatpush2.msra.mxu0 0.0
    %1593 = vmatprep.subr.mxu0 0.0
    %1594 = vmatpush2.msra.mxu0 0.0
    %1595 = vmatprep.subr.mxu0 0.0
    %1596 = vmatpush2.msra.mxu0 0.0
    %1597 = vmatprep.subr.mxu0 0.0
    %1598 = vmatpush2.msra.mxu0 0.0
    %1599 = vmatprep.subr.mxu0 0.0
    %1600 = vmatpush2.msra.mxu0 0.0
    %1601 = vmatprep.subr.mxu0 0.0
    %1602 = vmatpush2.msra.mxu0 0.0
    %1603 = vmatprep.subr.mxu0 0.0
    %1604 = vmatpush2.msra.mxu0 0.0
    %1605 = vmatprep.subr.mxu0 0.0
    %1606 = vmatpush2.msra.mxu0 0.0
    %1607 = vmatprep.subr.mxu0 0.0
    %1608 = vmatpush2.msra.mxu0 0.0
    %1609 = vmatprep.subr.mxu0 0.0
    %1610 = vmatpush2.msra.mxu0 0.0
    %1611 = vmatprep.subr.mxu0 0.0
    %1612 = vmatpush2.msra.mxu0 0.0
    %1613 = vmatprep.subr.mxu0 0.0
    %1614 = vmatpush2.msra.mxu0 0.0
    %1615 = vmatprep.subr.mxu0 0.0
    %1616 = vmatpush2.msra.mxu0 0.0
    %1617 = vmatprep.subr.mxu0 0.0
    %1618 = vmatpush2.msra.mxu0 0.0
    %1619 = vmatprep.subr.mxu0 0.0
    %1620 = vmatpush2.msra.mxu0 0.0
    %1621 = vmatprep.mubr.f32.mxu0 0.0
    %1622 = vmatmul.mubr.f32.gmra.mxu0 %v646
    %v1623 = vpop.f32.mrf.mxu0
    %v1624 = vadd.f32 0.0, %v1623
    %v1625 = vpop.f32.mrf.mxu0
    %1626 = vmatprep.mubr.f32.mxu0 0.0
    %1627 = vmatmul.mubr.f32.gmra.mxu0 %v649
    %v1628 = vpop.f32.mrf.mxu0
    %v1629 = vadd.f32 0.0, %v1628
    %v1630 = vpop.f32.mrf.mxu0
    %1631 = vmatprep.mubr.f32.mxu0 0.0
    %1632 = vmatmul.mubr.f32.gmra.mxu0 %v652
    %v1633 = vpop.f32.mrf.mxu0
    %v1634 = vadd.f32 0.0, %v1633
    %v1635 = vpop.f32.mrf.mxu0
    %1636 = vmatprep.mubr.f32.mxu0 0.0
    %1637 = vmatmul.mubr.f32.gmra.mxu0 %v655
    %v1638 = vpop.f32.mrf.mxu0
    %v1639 = vadd.f32 0.0, %v1638
    %v1640 = vpop.f32.mrf.mxu0
    %1641 = vmatprep.mubr.f32.mxu0 0.0
    %1642 = vmatmul.mubr.f32.gmra.mxu0 %v658
    %v1643 = vpop.f32.mrf.mxu0
    %v1644 = vadd.f32 0.0, %v1643
    %v1645 = vpop.f32.mrf.mxu0
    %1646 = vmatprep.mubr.f32.mxu0 0.0
    %1647 = vmatmul.mubr.f32.gmra.mxu0 %v661
    %v1648 = vpop.f32.mrf.mxu0
    %v1649 = vadd.f32 0.0, %v1648
    %v1650 = vpop.f32.mrf.mxu0
    %1651 = vmatprep.mubr.f32.mxu0 0.0
    %1652 = vmatmul.mubr.f32.gmra.mxu0 %v664
    %v1653 = vpop.f32.mrf.mxu0
    %v1654 = vadd.f32 0.0, %v1653
    %v1655 = vpop.f32.mrf.mxu0
    %1656 = vmatprep.mubr.f32.mxu0 0.0
    %1657 = vmatmul.mubr.f32.gmra.mxu0 %v667
    %v1658 = vpop.f32.mrf.mxu0
    %v1659 = vadd.f32 0.0, %v1658
    %v1660 = vpop.f32.mrf.mxu0
    %1661 = vmatprep.mubr.f32.mxu0 0.0
    %1662 = vmatmul.mubr.f32.gmra.mxu0 %v670
    %v1663 = vpop.f32.mrf.mxu0
    %v1664 = vadd.f32 0.0, %v1663
    %v1665 = vpop.f32.mrf.mxu0
    %1666 = vmatprep.mubr.f32.mxu0 0.0
    %1667 = vmatmul.mubr.f32.gmra.mxu0 %v673
    %v1668 = vpop.f32.mrf.mxu0
    %v1669 = vadd.f32 0.0, %v1668
    %v1670 = vpop.f32.mrf.mxu0
    %1671 = vmatprep.mubr.f32.mxu0 0.0
    %1672 = vmatmul.mubr.f32.gmra.mxu0 %v676
    %v1673 = vpop.f32.mrf.mxu0
    %v1674 = vadd.f32 0.0, %v1673
    %v1675 = vpop.f32.mrf.mxu0
    %1676 = vmatprep.mubr.f32.mxu0 0.0
    %1677 = vmatmul.mubr.f32.gmra.mxu0 %v679
    %v1678 = vpop.f32.mrf.mxu0
    %v1679 = vadd.f32 0.0, %v1678
    %v1680 = vpop.f32.mrf.mxu0
    %1681 = vmatprep.mubr.f32.mxu0 0.0
    %1682 = vmatmul.mubr.f32.gmra.mxu0 %v682
    %v1683 = vpop.f32.mrf.mxu0
    %v1684 = vadd.f32 0.0, %v1683
    %v1685 = vpop.f32.mrf.mxu0
    %1686 = vmatprep.mubr.f32.mxu0 0.0
    %1687 = vmatmul.mubr.f32.gmra.mxu0 %v685
    %v1688 = vpop.f32.mrf.mxu0
    %v1689 = vadd.f32 0.0, %v1688
    %v1690 = vpop.f32.mrf.mxu0
    %1691 = vmatprep.mubr.f32.mxu0 0.0
    %1692 = vmatmul.mubr.f32.gmra.mxu0 %v688
    %v1693 = vpop.f32.mrf.mxu0
    %v1694 = vadd.f32 0.0, %v1693
    %v1695 = vpop.f32.mrf.mxu0
    %1696 = vmatprep.mubr.f32.mxu0 0.0
    %1697 = vmatmul.mubr.f32.gmra.mxu0 %v691
    %v1698 = vpop.f32.mrf.mxu0
    %v1699 = vadd.f32 0.0, %v1698
    %v1700 = vpop.f32.mrf.mxu0
    %1701 = vdwg.mxu0
    %v1702 = vmul.f32 %v1624, %v93
    %v1703 = vmul.f32 %v1629, %v94
    %v1704 = vmul.f32 %v1634, %v95
    %v1705 = vmul.f32 %v1639, %v96
    %v1706 = vmul.f32 %v1644, %v97
    %v1707 = vmul.f32 %v1649, %v98
    %v1708 = vmul.f32 %v1654, %v99
    %v1709 = vmul.f32 %v1659, %v100
    %v1710 = vmul.f32 %v1664, %v101
    %v1711 = vmul.f32 %v1669, %v102
    %v1712 = vmul.f32 %v1674, %v103
    %v1713 = vmul.f32 %v1679, %v104
    %v1714 = vmul.f32 %v1684, %v105
    %v1715 = vmul.f32 %v1689, %v106
    %v1716 = vmul.f32 %v1694, %v107
    %v1717 = vmul.f32 %v1699, %v108
    %v1718 = vsel %vm109, %v1702, 0.0
    %v1719 = vsel %vm109, %v1704, 0.0
    %v1720 = vadd.f32 %v1718, %v1719
    %v1721 = vsel %vm109, %v1706, 0.0
    %v1722 = vadd.f32 %v1720, %v1721
    %v1723 = vsel %vm109, %v1708, 0.0
    %v1724 = vadd.f32 %v1722, %v1723
    %v1725 = vsel %vm109, %v1710, 0.0
    %v1726 = vadd.f32 %v1724, %v1725
    %v1727 = vsel %vm109, %v1712, 0.0
    %v1728 = vadd.f32 %v1726, %v1727
    %v1729 = vsel %vm109, %v1714, 0.0
    %v1730 = vadd.f32 %v1728, %v1729
    %v1731 = vsel %vm109, %v1716, 0.0
    %v1732 = vadd.f32 %v1730, %v1731
    %v1733 = vsel %vm109, %v1703, 0.0
    %v1734 = vsel %vm109, %v1705, 0.0
    %v1735 = vadd.f32 %v1733, %v1734
    %v1736 = vsel %vm109, %v1707, 0.0
    %v1737 = vadd.f32 %v1735, %v1736
    %v1738 = vsel %vm109, %v1709, 0.0
    %v1739 = vadd.f32 %v1737, %v1738
    %v1740 = vsel %vm109, %v1711, 0.0
    %v1741 = vadd.f32 %v1739, %v1740
    %v1742 = vsel %vm109, %v1713, 0.0
    %v1743 = vadd.f32 %v1741, %v1742
    %v1744 = vsel %vm109, %v1715, 0.0
    %v1745 = vadd.f32 %v1743, %v1744
    %v1746 = vsel %vm109, %v1717, 0.0
    %v1747 = vadd.f32 %v1745, %v1746
    %s1748 = scalar_lea.vmem [#allocation7], 96
    %v1749 = vld [vmem:[%s1748] sm:$0xff]
    %v1750 = vld [vmem:[%s1748 + $0x8] sm:$0xff]
    %v1751 = vld [vmem:[%s1748 + $0x10] sm:$0xff]
    %v1752 = vld [vmem:[%s1748 + $0x18] sm:$0xff]
    %v1754 = vsel %vm109, %v1732, 0
    %v1757 = vsel %vm109, %v1747, 0
    %1759 = vmatprep.subr.mxu0 0.0
    %1760 = vmatpush1.msra.mxu0 0.0
    %1761 = vmatprep.subr.mxu0 0.0
    %1762 = vmatpush1.msra.mxu0 0.0
    %1763 = vmatprep.subr.mxu0 0.0
    %1764 = vmatpush1.msra.mxu0 0.0
    %1765 = vmatprep.subr.mxu0 0.0
    %1766 = vmatpush1.msra.mxu0 0.0
    %1767 = vmatprep.subr.mxu0 0.0
    %1768 = vmatpush1.msra.mxu0 0.0
    %1769 = vmatprep.subr.mxu0 0.0
    %1770 = vmatpush1.msra.mxu0 0.0
    %1771 = vmatprep.subr.mxu0 0.0
    %1772 = vmatpush1.msra.mxu0 0.0
    %1773 = vmatprep.subr.mxu0 0.0
    %1774 = vmatpush1.msra.mxu0 0.0
    %1775 = vmatprep.subr.mxu0 0.0
    %1776 = vmatpush1.msra.mxu0 0.0
    %1777 = vmatprep.subr.mxu0 0.0
    %1778 = vmatpush1.msra.mxu0 0.0
    %1779 = vmatprep.subr.mxu0 0.0
    %1780 = vmatpush1.msra.mxu0 0.0
    %1781 = vmatprep.subr.mxu0 0.0
    %1782 = vmatpush1.msra.mxu0 0.0
    %1783 = vmatprep.subr.mxu0 0.0
    %1784 = vmatpush1.msra.mxu0 %v1752
    %1785 = vmatprep.subr.mxu0 0.0
    %1786 = vmatpush1.msra.mxu0 %v1751
    %1787 = vmatprep.subr.mxu0 0.0
    %1788 = vmatpush1.msra.mxu0 %v1750
    %1789 = vmatprep.subr.mxu0 0.0
    %1790 = vmatpush1.msra.mxu0 %v1749
    %1791 = vmatprep.subr.mxu0 0.0
    %1792 = vmatpush2.msra.mxu0 0.0
    %1793 = vmatprep.subr.mxu0 0.0
    %1794 = vmatpush2.msra.mxu0 0.0
    %1795 = vmatprep.subr.mxu0 0.0
    %1796 = vmatpush2.msra.mxu0 0.0
    %1797 = vmatprep.subr.mxu0 0.0
    %1798 = vmatpush2.msra.mxu0 0.0
    %1799 = vmatprep.subr.mxu0 0.0
    %1800 = vmatpush2.msra.mxu0 0.0
    %1801 = vmatprep.subr.mxu0 0.0
    %1802 = vmatpush2.msra.mxu0 0.0
    %1803 = vmatprep.subr.mxu0 0.0
    %1804 = vmatpush2.msra.mxu0 0.0
    %1805 = vmatprep.subr.mxu0 0.0
    %1806 = vmatpush2.msra.mxu0 0.0
    %1807 = vmatprep.subr.mxu0 0.0
    %1808 = vmatpush2.msra.mxu0 0.0
    %1809 = vmatprep.subr.mxu0 0.0
    %1810 = vmatpush2.msra.mxu0 0.0
    %1811 = vmatprep.subr.mxu0 0.0
    %1812 = vmatpush2.msra.mxu0 0.0
    %1813 = vmatprep.subr.mxu0 0.0
    %1814 = vmatpush2.msra.mxu0 0.0
    %1815 = vmatprep.subr.mxu0 0.0
    %1816 = vmatpush2.msra.mxu0 0.0
    %1817 = vmatprep.subr.mxu0 0.0
    %1818 = vmatpush2.msra.mxu0 0.0
    %1819 = vmatprep.subr.mxu0 0.0
    %1820 = vmatpush2.msra.mxu0 0.0
    %1821 = vmatprep.subr.mxu0 0.0
    %1822 = vmatpush2.msra.mxu0 0.0
    %1823 = vmatprep.mubr.f32.mxu0 0.0
    %1824 = vmatmul.mubr.f32.gmra.mxu0 %v1754
    %v1825 = vpop.f32.mrf.mxu0
    %v1826 = vadd.f32 0.0, %v1825
    %v1827 = vpop.f32.mrf.mxu0
    %1828 = vmatprep.mubr.f32.mxu0 0.0
    %1829 = vmatmul.mubr.f32.gmra.mxu0 %v1757
    %v1830 = vpop.f32.mrf.mxu0
    %v1831 = vadd.f32 0.0, %v1830
    %v1832 = vpop.f32.mrf.mxu0
    %1833 = vdwg.mxu0
    %v1834 = vadd.f32 %v1549, %v1826
    %v1835 = vadd.f32 %v1550, %v1831
    %v1836 = vld [vmem:[#allocation5] sm:$0xff]
    %v1837 = vld [vmem:[#allocation5 + $0x8] sm:$0xff]
    %v1838 = vld [vmem:[#allocation5 + $0x10] sm:$0xff]
    %v1839 = vld [vmem:[#allocation5 + $0x18] sm:$0xff]
    %v1840 = vld [vmem:[#allocation5 + $0x20] sm:$0xff]
    %v1841 = vld [vmem:[#allocation5 + $0x28] sm:$0xff]
    %v1842 = vld [vmem:[#allocation5 + $0x30] sm:$0xff]
    %v1843 = vld [vmem:[#allocation5 + $0x38] sm:$0xff]
    %v1844 = vld [vmem:[#allocation5 + $0x40] sm:$0xff]
    %v1845 = vld [vmem:[#allocation5 + $0x48] sm:$0xff]
    %v1846 = vld [vmem:[#allocation5 + $0x50] sm:$0xff]
    %v1847 = vld [vmem:[#allocation5 + $0x58] sm:$0xff]
    %v1848 = vld [vmem:[#allocation5 + $0x60] sm:$0xff]
    %v1849 = vld [vmem:[#allocation5 + $0x68] sm:$0xff]
    %v1850 = vld [vmem:[#allocation5 + $0x70] sm:$0xff]
    %v1851 = vld [vmem:[#allocation5 + $0x78] sm:$0xff]
    %v1853 = vsel %vm109, %v1836, 0
    %v1856 = vsel %vm109, %v1837, 0
    %v1859 = vsel %vm109, %v1838, 0
    %v1862 = vsel %vm109, %v1839, 0
    %v1865 = vsel %vm109, %v1840, 0
    %v1868 = vsel %vm109, %v1841, 0
    %v1871 = vsel %vm109, %v1842, 0
    %v1874 = vsel %vm109, %v1843, 0
    %v1877 = vsel %vm109, %v1844, 0
    %v1880 = vsel %vm109, %v1845, 0
    %v1883 = vsel %vm109, %v1846, 0
    %v1886 = vsel %vm109, %v1847, 0
    %v1889 = vsel %vm109, %v1848, 0
    %v1892 = vsel %vm109, %v1849, 0
    %v1895 = vsel %vm109, %v1850, 0
    %v1898 = vsel %vm109, %v1851, 0
    %1900 = vmatprep.subr.mxu0 0.0
    %1901 = vmatpush1.msra.mxu0 0.0
    %1902 = vmatprep.subr.mxu0 0.0
    %1903 = vmatpush1.msra.mxu0 0.0
    %1904 = vmatprep.subr.mxu0 0.0
    %1905 = vmatpush1.msra.mxu0 0.0
    %1906 = vmatprep.subr.mxu0 0.0
    %1907 = vmatpush1.msra.mxu0 0.0
    %1908 = vmatprep.subr.mxu0 0.0
    %1909 = vmatpush1.msra.mxu0 0.0
    %1910 = vmatprep.subr.mxu0 0.0
    %1911 = vmatpush1.msra.mxu0 0.0
    %1912 = vmatprep.subr.mxu0 0.0
    %1913 = vmatpush1.msra.mxu0 0.0
    %1914 = vmatprep.subr.mxu0 0.0
    %1915 = vmatpush1.msra.mxu0 0.0
    %1916 = vmatprep.subr.mxu0 0.0
    %1917 = vmatpush1.msra.mxu0 0.0
    %1918 = vmatprep.subr.mxu0 0.0
    %1919 = vmatpush1.msra.mxu0 0.0
    %1920 = vmatprep.subr.mxu0 0.0
    %1921 = vmatpush1.msra.mxu0 0.0
    %1922 = vmatprep.subr.mxu0 0.0
    %1923 = vmatpush1.msra.mxu0 0.0
    %1924 = vmatprep.subr.mxu0 0.0
    %1925 = vmatpush1.msra.mxu0 %v88
    %1926 = vmatprep.subr.mxu0 0.0
    %1927 = vmatpush1.msra.mxu0 %v87
    %1928 = vmatprep.subr.mxu0 0.0
    %1929 = vmatpush1.msra.mxu0 %v86
    %1930 = vmatprep.subr.mxu0 0.0
    %1931 = vmatpush1.msra.mxu0 %v85
    %1932 = vmatprep.subr.mxu0 0.0
    %1933 = vmatpush2.msra.mxu0 0.0
    %1934 = vmatprep.subr.mxu0 0.0
    %1935 = vmatpush2.msra.mxu0 0.0
    %1936 = vmatprep.subr.mxu0 0.0
    %1937 = vmatpush2.msra.mxu0 0.0
    %1938 = vmatprep.subr.mxu0 0.0
    %1939 = vmatpush2.msra.mxu0 0.0
    %1940 = vmatprep.subr.mxu0 0.0
    %1941 = vmatpush2.msra.mxu0 0.0
    %1942 = vmatprep.subr.mxu0 0.0
    %1943 = vmatpush2.msra.mxu0 0.0
    %1944 = vmatprep.subr.mxu0 0.0
    %1945 = vmatpush2.msra.mxu0 0.0
    %1946 = vmatprep.subr.mxu0 0.0
    %1947 = vmatpush2.msra.mxu0 0.0
    %1948 = vmatprep.subr.mxu0 0.0
    %1949 = vmatpush2.msra.mxu0 0.0
    %1950 = vmatprep.subr.mxu0 0.0
    %1951 = vmatpush2.msra.mxu0 0.0
    %1952 = vmatprep.subr.mxu0 0.0
    %1953 = vmatpush2.msra.mxu0 0.0
    %1954 = vmatprep.subr.mxu0 0.0
    %1955 = vmatpush2.msra.mxu0 0.0
    %1956 = vmatprep.subr.mxu0 0.0
    %1957 = vmatpush2.msra.mxu0 0.0
    %1958 = vmatprep.subr.mxu0 0.0
    %1959 = vmatpush2.msra.mxu0 0.0
    %1960 = vmatprep.subr.mxu0 0.0
    %1961 = vmatpush2.msra.mxu0 0.0
    %1962 = vmatprep.subr.mxu0 0.0
    %1963 = vmatpush2.msra.mxu0 0.0
    %1964 = vmatprep.mubr.f32.mxu0 0.0
    %1965 = vmatmul.mubr.f32.gmra.mxu0 %v1853
    %v1966 = vpop.f32.mrf.mxu0
    %v1967 = vadd.f32 0.0, %v1966
    %v1968 = vpop.f32.mrf.mxu0
    %1969 = vmatprep.mubr.f32.mxu0 0.0
    %1970 = vmatmul.mubr.f32.gmra.mxu0 %v1856
    %v1971 = vpop.f32.mrf.mxu0
    %v1972 = vadd.f32 0.0, %v1971
    %v1973 = vpop.f32.mrf.mxu0
    %1974 = vmatprep.mubr.f32.mxu0 0.0
    %1975 = vmatmul.mubr.f32.gmra.mxu0 %v1859
    %v1976 = vpop.f32.mrf.mxu0
    %v1977 = vadd.f32 0.0, %v1976
    %v1978 = vpop.f32.mrf.mxu0
    %1979 = vmatprep.mubr.f32.mxu0 0.0
    %1980 = vmatmul.mubr.f32.gmra.mxu0 %v1862
    %v1981 = vpop.f32.mrf.mxu0
    %v1982 = vadd.f32 0.0, %v1981
    %v1983 = vpop.f32.mrf.mxu0
    %1984 = vmatprep.mubr.f32.mxu0 0.0
    %1985 = vmatmul.mubr.f32.gmra.mxu0 %v1865
    %v1986 = vpop.f32.mrf.mxu0
    %v1987 = vadd.f32 0.0, %v1986
    %v1988 = vpop.f32.mrf.mxu0
    %1989 = vmatprep.mubr.f32.mxu0 0.0
    %1990 = vmatmul.mubr.f32.gmra.mxu0 %v1868
    %v1991 = vpop.f32.mrf.mxu0
    %v1992 = vadd.f32 0.0, %v1991
    %v1993 = vpop.f32.mrf.mxu0
    %1994 = vmatprep.mubr.f32.mxu0 0.0
    %1995 = vmatmul.mubr.f32.gmra.mxu0 %v1871
    %v1996 = vpop.f32.mrf.mxu0
    %v1997 = vadd.f32 0.0, %v1996
    %v1998 = vpop.f32.mrf.mxu0
    %1999 = vmatprep.mubr.f32.mxu0 0.0
    %2000 = vmatmul.mubr.f32.gmra.mxu0 %v1874
    %v2001 = vpop.f32.mrf.mxu0
    %v2002 = vadd.f32 0.0, %v2001
    %v2003 = vpop.f32.mrf.mxu0
    %2004 = vmatprep.mubr.f32.mxu0 0.0
    %2005 = vmatmul.mubr.f32.gmra.mxu0 %v1877
    %v2006 = vpop.f32.mrf.mxu0
    %v2007 = vadd.f32 0.0, %v2006
    %v2008 = vpop.f32.mrf.mxu0
    %2009 = vmatprep.mubr.f32.mxu0 0.0
    %2010 = vmatmul.mubr.f32.gmra.mxu0 %v1880
    %v2011 = vpop.f32.mrf.mxu0
    %v2012 = vadd.f32 0.0, %v2011
    %v2013 = vpop.f32.mrf.mxu0
    %2014 = vmatprep.mubr.f32.mxu0 0.0
    %2015 = vmatmul.mubr.f32.gmra.mxu0 %v1883
    %v2016 = vpop.f32.mrf.mxu0
    %v2017 = vadd.f32 0.0, %v2016
    %v2018 = vpop.f32.mrf.mxu0
    %2019 = vmatprep.mubr.f32.mxu0 0.0
    %2020 = vmatmul.mubr.f32.gmra.mxu0 %v1886
    %v2021 = vpop.f32.mrf.mxu0
    %v2022 = vadd.f32 0.0, %v2021
    %v2023 = vpop.f32.mrf.mxu0
    %2024 = vmatprep.mubr.f32.mxu0 0.0
    %2025 = vmatmul.mubr.f32.gmra.mxu0 %v1889
    %v2026 = vpop.f32.mrf.mxu0
    %v2027 = vadd.f32 0.0, %v2026
    %v2028 = vpop.f32.mrf.mxu0
    %2029 = vmatprep.mubr.f32.mxu0 0.0
    %2030 = vmatmul.mubr.f32.gmra.mxu0 %v1892
    %v2031 = vpop.f32.mrf.mxu0
    %v2032 = vadd.f32 0.0, %v2031
    %v2033 = vpop.f32.mrf.mxu0
    %2034 = vmatprep.mubr.f32.mxu0 0.0
    %2035 = vmatmul.mubr.f32.gmra.mxu0 %v1895
    %v2036 = vpop.f32.mrf.mxu0
    %v2037 = vadd.f32 0.0, %v2036
    %v2038 = vpop.f32.mrf.mxu0
    %2039 = vmatprep.mubr.f32.mxu0 0.0
    %2040 = vmatmul.mubr.f32.gmra.mxu0 %v1898
    %v2041 = vpop.f32.mrf.mxu0
    %v2042 = vadd.f32 0.0, %v2041
    %v2043 = vpop.f32.mrf.mxu0
    %2044 = vdwg.mxu0
    %v2045 = vtanh.pop %v1967
    %v2046 = vtanh.pop %v1972
    %v2047 = vtanh.pop %v1977
    %v2048 = vtanh.pop %v1982
    %v2049 = vtanh.pop %v1987
    %v2050 = vtanh.pop %v1992
    %v2051 = vtanh.pop %v1997
    %v2052 = vtanh.pop %v2002
    %v2053 = vtanh.pop %v2007
    %v2054 = vtanh.pop %v2012
    %v2055 = vtanh.pop %v2017
    %v2056 = vtanh.pop %v2022
    %v2057 = vtanh.pop %v2027
    %v2058 = vtanh.pop %v2032
    %v2059 = vtanh.pop %v2037
    %v2060 = vtanh.pop %v2042
    %v2062 = vsel %vm109, %v2045, 0
    %v2065 = vsel %vm109, %v2046, 0
    %v2068 = vsel %vm109, %v2047, 0
    %v2071 = vsel %vm109, %v2048, 0
    %v2074 = vsel %vm109, %v2049, 0
    %v2077 = vsel %vm109, %v2050, 0
    %v2080 = vsel %vm109, %v2051, 0
    %v2083 = vsel %vm109, %v2052, 0
    %v2086 = vsel %vm109, %v2053, 0
    %v2089 = vsel %vm109, %v2054, 0
    %v2092 = vsel %vm109, %v2055, 0
    %v2095 = vsel %vm109, %v2056, 0
    %v2098 = vsel %vm109, %v2057, 0
    %v2101 = vsel %vm109, %v2058, 0
    %v2104 = vsel %vm109, %v2059, 0
    %v2107 = vsel %vm109, %v2060, 0
    %2109 = vmatprep.subr.mxu0 0.0
    %2110 = vmatpush1.msra.mxu0 0.0
    %2111 = vmatprep.subr.mxu0 0.0
    %2112 = vmatpush1.msra.mxu0 0.0
    %2113 = vmatprep.subr.mxu0 0.0
    %2114 = vmatpush1.msra.mxu0 0.0
    %2115 = vmatprep.subr.mxu0 0.0
    %2116 = vmatpush1.msra.mxu0 0.0
    %2117 = vmatprep.subr.mxu0 0.0
    %2118 = vmatpush1.msra.mxu0 0.0
    %2119 = vmatprep.subr.mxu0 0.0
    %2120 = vmatpush1.msra.mxu0 0.0
    %2121 = vmatprep.subr.mxu0 0.0
    %2122 = vmatpush1.msra.mxu0 0.0
    %2123 = vmatprep.subr.mxu0 0.0
    %2124 = vmatpush1.msra.mxu0 0.0
    %2125 = vmatprep.subr.mxu0 0.0
    %2126 = vmatpush1.msra.mxu0 0.0
    %2127 = vmatprep.subr.mxu0 0.0
    %2128 = vmatpush1.msra.mxu0 0.0
    %2129 = vmatprep.subr.mxu0 0.0
    %2130 = vmatpush1.msra.mxu0 0.0
    %2131 = vmatprep.subr.mxu0 0.0
    %2132 = vmatpush1.msra.mxu0 0.0
    %2133 = vmatprep.subr.mxu0 0.0
    %2134 = vmatpush1.msra.mxu0 %v92
    %2135 = vmatprep.subr.mxu0 0.0
    %2136 = vmatpush1.msra.mxu0 %v91
    %2137 = vmatprep.subr.mxu0 0.0
    %2138 = vmatpush1.msra.mxu0 %v90
    %2139 = vmatprep.subr.mxu0 0.0
    %2140 = vmatpush1.msra.mxu0 %v89
    %2141 = vmatprep.subr.mxu0 0.0
    %2142 = vmatpush2.msra.mxu0 0.0
    %2143 = vmatprep.subr.mxu0 0.0
    %2144 = vmatpush2.msra.mxu0 0.0
    %2145 = vmatprep.subr.mxu0 0.0
    %2146 = vmatpush2.msra.mxu0 0.0
    %2147 = vmatprep.subr.mxu0 0.0
    %2148 = vmatpush2.msra.mxu0 0.0
    %2149 = vmatprep.subr.mxu0 0.0
    %2150 = vmatpush2.msra.mxu0 0.0
    %2151 = vmatprep.subr.mxu0 0.0
    %2152 = vmatpush2.msra.mxu0 0.0
    %2153 = vmatprep.subr.mxu0 0.0
    %2154 = vmatpush2.msra.mxu0 0.0
    %2155 = vmatprep.subr.mxu0 0.0
    %2156 = vmatpush2.msra.mxu0 0.0
    %2157 = vmatprep.subr.mxu0 0.0
    %2158 = vmatpush2.msra.mxu0 0.0
    %2159 = vmatprep.subr.mxu0 0.0
    %2160 = vmatpush2.msra.mxu0 0.0
    %2161 = vmatprep.subr.mxu0 0.0
    %2162 = vmatpush2.msra.mxu0 0.0
    %2163 = vmatprep.subr.mxu0 0.0
    %2164 = vmatpush2.msra.mxu0 0.0
    %2165 = vmatprep.subr.mxu0 0.0
    %2166 = vmatpush2.msra.mxu0 0.0
    %2167 = vmatprep.subr.mxu0 0.0
    %2168 = vmatpush2.msra.mxu0 0.0
    %2169 = vmatprep.subr.mxu0 0.0
    %2170 = vmatpush2.msra.mxu0 0.0
    %2171 = vmatprep.subr.mxu0 0.0
    %2172 = vmatpush2.msra.mxu0 0.0
    %2173 = vmatprep.mubr.f32.mxu0 0.0
    %2174 = vmatmul.mubr.f32.gmra.mxu0 %v2062
    %v2175 = vpop.f32.mrf.mxu0
    %v2176 = vadd.f32 0.0, %v2175
    %v2177 = vpop.f32.mrf.mxu0
    %2178 = vmatprep.mubr.f32.mxu0 0.0
    %2179 = vmatmul.mubr.f32.gmra.mxu0 %v2065
    %v2180 = vpop.f32.mrf.mxu0
    %v2181 = vadd.f32 0.0, %v2180
    %v2182 = vpop.f32.mrf.mxu0
    %2183 = vmatprep.mubr.f32.mxu0 0.0
    %2184 = vmatmul.mubr.f32.gmra.mxu0 %v2068
    %v2185 = vpop.f32.mrf.mxu0
    %v2186 = vadd.f32 0.0, %v2185
    %v2187 = vpop.f32.mrf.mxu0
    %2188 = vmatprep.mubr.f32.mxu0 0.0
    %2189 = vmatmul.mubr.f32.gmra.mxu0 %v2071
    %v2190 = vpop.f32.mrf.mxu0
    %v2191 = vadd.f32 0.0, %v2190
    %v2192 = vpop.f32.mrf.mxu0
    %2193 = vmatprep.mubr.f32.mxu0 0.0
    %2194 = vmatmul.mubr.f32.gmra.mxu0 %v2074
    %v2195 = vpop.f32.mrf.mxu0
    %v2196 = vadd.f32 0.0, %v2195
    %v2197 = vpop.f32.mrf.mxu0
    %2198 = vmatprep.mubr.f32.mxu0 0.0
    %2199 = vmatmul.mubr.f32.gmra.mxu0 %v2077
    %v2200 = vpop.f32.mrf.mxu0
    %v2201 = vadd.f32 0.0, %v2200
    %v2202 = vpop.f32.mrf.mxu0
    %2203 = vmatprep.mubr.f32.mxu0 0.0
    %2204 = vmatmul.mubr.f32.gmra.mxu0 %v2080
    %v2205 = vpop.f32.mrf.mxu0
    %v2206 = vadd.f32 0.0, %v2205
    %v2207 = vpop.f32.mrf.mxu0
    %2208 = vmatprep.mubr.f32.mxu0 0.0
    %2209 = vmatmul.mubr.f32.gmra.mxu0 %v2083
    %v2210 = vpop.f32.mrf.mxu0
    %v2211 = vadd.f32 0.0, %v2210
    %v2212 = vpop.f32.mrf.mxu0
    %2213 = vmatprep.mubr.f32.mxu0 0.0
    %2214 = vmatmul.mubr.f32.gmra.mxu0 %v2086
    %v2215 = vpop.f32.mrf.mxu0
    %v2216 = vadd.f32 0.0, %v2215
    %v2217 = vpop.f32.mrf.mxu0
    %2218 = vmatprep.mubr.f32.mxu0 0.0
    %2219 = vmatmul.mubr.f32.gmra.mxu0 %v2089
    %v2220 = vpop.f32.mrf.mxu0
    %v2221 = vadd.f32 0.0, %v2220
    %v2222 = vpop.f32.mrf.mxu0
    %2223 = vmatprep.mubr.f32.mxu0 0.0
    %2224 = vmatmul.mubr.f32.gmra.mxu0 %v2092
    %v2225 = vpop.f32.mrf.mxu0
    %v2226 = vadd.f32 0.0, %v2225
    %v2227 = vpop.f32.mrf.mxu0
    %2228 = vmatprep.mubr.f32.mxu0 0.0
    %2229 = vmatmul.mubr.f32.gmra.mxu0 %v2095
    %v2230 = vpop.f32.mrf.mxu0
    %v2231 = vadd.f32 0.0, %v2230
    %v2232 = vpop.f32.mrf.mxu0
    %2233 = vmatprep.mubr.f32.mxu0 0.0
    %2234 = vmatmul.mubr.f32.gmra.mxu0 %v2098
    %v2235 = vpop.f32.mrf.mxu0
    %v2236 = vadd.f32 0.0, %v2235
    %v2237 = vpop.f32.mrf.mxu0
    %2238 = vmatprep.mubr.f32.mxu0 0.0
    %2239 = vmatmul.mubr.f32.gmra.mxu0 %v2101
    %v2240 = vpop.f32.mrf.mxu0
    %v2241 = vadd.f32 0.0, %v2240
    %v2242 = vpop.f32.mrf.mxu0
    %2243 = vmatprep.mubr.f32.mxu0 0.0
    %2244 = vmatmul.mubr.f32.gmra.mxu0 %v2104
    %v2245 = vpop.f32.mrf.mxu0
    %v2246 = vadd.f32 0.0, %v2245
    %v2247 = vpop.f32.mrf.mxu0
    %2248 = vmatprep.mubr.f32.mxu0 0.0
    %2249 = vmatmul.mubr.f32.gmra.mxu0 %v2107
    %v2250 = vpop.f32.mrf.mxu0
    %v2251 = vadd.f32 0.0, %v2250
    %v2252 = vpop.f32.mrf.mxu0
    %2253 = vdwg.mxu0
    %v2254 = vsel %vm512, %v2176, -inf
    %v2255 = vsel %vm512, %v2186, -inf
    %v2256 = vsel %vm512, %v2196, -inf
    %v2257 = vmax.f32 %v2254, %v2256
    %v2258 = vsel %vm512, %v2206, -inf
    %v2259 = vmax.f32 %v2255, %v2258
    %v2260 = vsel %vm512, %v2216, -inf
    %v2261 = vmax.f32 %v2257, %v2260
    %v2262 = vsel %vm512, %v2226, -inf
    %v2263 = vmax.f32 %v2259, %v2262
    %v2264 = vsel %vm512, %v2236, -inf
    %v2265 = vmax.f32 %v2261, %v2264
    %v2266 = vsel %vm512, %v2246, -inf
    %v2267 = vmax.f32 %v2263, %v2266
    %v2268 = vmax.f32 %v2265, %v2267
    %v2269 = vsel %vm512, %v2181, -inf
    %v2270 = vsel %vm512, %v2191, -inf
    %v2271 = vsel %vm512, %v2201, -inf
    %v2272 = vmax.f32 %v2269, %v2271
    %v2273 = vsel %vm512, %v2211, -inf
    %v2274 = vmax.f32 %v2270, %v2273
    %v2275 = vsel %vm512, %v2221, -inf
    %v2276 = vmax.f32 %v2272, %v2275
    %v2277 = vsel %vm512, %v2231, -inf
    %v2278 = vmax.f32 %v2274, %v2277
    %v2279 = vsel %vm512, %v2241, -inf
    %v2280 = vmax.f32 %v2276, %v2279
    %v2281 = vsel %vm512, %v2251, -inf
    %v2282 = vmax.f32 %v2278, %v2281
    %v2283 = vmax.f32 %v2280, %v2282
    %v2284 = vsub.f32 %v2176, %v2268
    %v2285 = vsub.f32 %v2181, %v2283
    %v2286 = vsub.f32 %v2186, %v2268
    %v2287 = vsub.f32 %v2191, %v2283
    %v2288 = vsub.f32 %v2196, %v2268
    %v2289 = vsub.f32 %v2201, %v2283
    %v2290 = vsub.f32 %v2206, %v2268
    %v2291 = vsub.f32 %v2211, %v2283
    %v2292 = vsub.f32 %v2216, %v2268
    %v2293 = vsub.f32 %v2221, %v2283
    %v2294 = vsub.f32 %v2226, %v2268
    %v2295 = vsub.f32 %v2231, %v2283
    %v2296 = vsub.f32 %v2236, %v2268
    %v2297 = vsub.f32 %v2241, %v2283
    %v2298 = vsub.f32 %v2246, %v2268
    %v2299 = vsub.f32 %v2251, %v2283
    %v2300 = vmul.f32 %v2284, 1.442695
    %v2301 = vpow.pop %v2300
    %v2302 = vmul.f32 %v2285, 1.442695
    %v2303 = vpow.pop %v2302
    %v2304 = vmul.f32 %v2286, 1.442695
    %v2305 = vpow.pop %v2304
    %v2306 = vmul.f32 %v2287, 1.442695
    %v2307 = vpow.pop %v2306
    %v2308 = vmul.f32 %v2288, 1.442695
    %v2309 = vpow.pop %v2308
    %v2310 = vmul.f32 %v2289, 1.442695
    %v2311 = vpow.pop %v2310
    %v2312 = vmul.f32 %v2290, 1.442695
    %v2313 = vpow.pop %v2312
    %v2314 = vmul.f32 %v2291, 1.442695
    %v2315 = vpow.pop %v2314
    %v2316 = vmul.f32 %v2292, 1.442695
    %v2317 = vpow.pop %v2316
    %v2318 = vmul.f32 %v2293, 1.442695
    %v2319 = vpow.pop %v2318
    %v2320 = vmul.f32 %v2294, 1.442695
    %v2321 = vpow.pop %v2320
    %v2322 = vmul.f32 %v2295, 1.442695
    %v2323 = vpow.pop %v2322
    %v2324 = vmul.f32 %v2296, 1.442695
    %v2325 = vpow.pop %v2324
    %v2326 = vmul.f32 %v2297, 1.442695
    %v2327 = vpow.pop %v2326
    %v2328 = vmul.f32 %v2298, 1.442695
    %v2329 = vpow.pop %v2328
    %v2330 = vmul.f32 %v2299, 1.442695
    %v2331 = vpow.pop %v2330
    %v2332 = vsel %vm512, %v2301, 0.0
    %v2333 = vsel %vm512, %v2305, 0.0
    %v2334 = vadd.f32 %v2332, %v2333
    %v2335 = vsel %vm512, %v2309, 0.0
    %v2336 = vadd.f32 %v2334, %v2335
    %v2337 = vsel %vm512, %v2313, 0.0
    %v2338 = vadd.f32 %v2336, %v2337
    %v2339 = vsel %vm512, %v2317, 0.0
    %v2340 = vadd.f32 %v2338, %v2339
    %v2341 = vsel %vm512, %v2321, 0.0
    %v2342 = vadd.f32 %v2340, %v2341
    %v2343 = vsel %vm512, %v2325, 0.0
    %v2344 = vadd.f32 %v2342, %v2343
    %v2345 = vsel %vm512, %v2329, 0.0
    %v2346 = vadd.f32 %v2344, %v2345
    %v2347 = vsel %vm512, %v2303, 0.0
    %v2348 = vsel %vm512, %v2307, 0.0
    %v2349 = vadd.f32 %v2347, %v2348
    %v2350 = vsel %vm512, %v2311, 0.0
    %v2351 = vadd.f32 %v2349, %v2350
    %v2352 = vsel %vm512, %v2315, 0.0
    %v2353 = vadd.f32 %v2351, %v2352
    %v2354 = vsel %vm512, %v2319, 0.0
    %v2355 = vadd.f32 %v2353, %v2354
    %v2356 = vsel %vm512, %v2323, 0.0
    %v2357 = vadd.f32 %v2355, %v2356
    %v2358 = vsel %vm512, %v2327, 0.0
    %v2359 = vadd.f32 %v2357, %v2358
    %v2360 = vsel %vm512, %v2331, 0.0
    %v2361 = vadd.f32 %v2359, %v2360
    %v2362 = vrcp.pop %v2346
    %v2363 = vmul.f32 %v2301, %v2362
    %v2364 = vrcp.pop %v2361
    %v2365 = vmul.f32 %v2303, %v2364
    %v2366 = vmul.f32 %v2305, %v2362
    %v2367 = vmul.f32 %v2307, %v2364
    %v2368 = vmul.f32 %v2309, %v2362
    %v2369 = vmul.f32 %v2311, %v2364
    %v2370 = vmul.f32 %v2313, %v2362
    %v2371 = vmul.f32 %v2315, %v2364
    %v2372 = vmul.f32 %v2317, %v2362
    %v2373 = vmul.f32 %v2319, %v2364
    %v2374 = vmul.f32 %v2321, %v2362
    %v2375 = vmul.f32 %v2323, %v2364
    %v2376 = vmul.f32 %v2325, %v2362
    %v2377 = vmul.f32 %v2327, %v2364
    %v2378 = vmul.f32 %v2329, %v2362
    %v2379 = vmul.f32 %v2331, %v2364
    %v2380 = vld [vmem:[%s7] sm:$0x1]
    %v2382 = vsel %vm512, %v2363, 0
    %v2385 = vsel %vm512, %v2365, 0
    %v2388 = vsel %vm512, %v2366, 0
    %v2391 = vsel %vm512, %v2367, 0
    %v2394 = vsel %vm512, %v2368, 0
    %v2397 = vsel %vm512, %v2369, 0
    %v2400 = vsel %vm512, %v2370, 0
    %v2403 = vsel %vm512, %v2371, 0
    %v2406 = vsel %vm512, %v2372, 0
    %v2409 = vsel %vm512, %v2373, 0
    %v2412 = vsel %vm512, %v2374, 0
    %v2415 = vsel %vm512, %v2375, 0
    %v2418 = vsel %vm512, %v2376, 0
    %v2421 = vsel %vm512, %v2377, 0
    %v2424 = vsel %vm512, %v2378, 0
    %v2427 = vsel %vm512, %v2379, 0
    %2429 = vmatprep.subr.mxu0 0.0
    %2430 = vmatpush1.msra.mxu0 0.0
    %2431 = vmatprep.subr.mxu0 0.0
    %2432 = vmatpush1.msra.mxu0 0.0
    %2433 = vmatprep.subr.mxu0 0.0
    %2434 = vmatpush1.msra.mxu0 0.0
    %2435 = vmatprep.subr.mxu0 0.0
    %2436 = vmatpush1.msra.mxu0 0.0
    %2437 = vmatprep.subr.mxu0 0.0
    %2438 = vmatpush1.msra.mxu0 0.0
    %2439 = vmatprep.subr.mxu0 0.0
    %2440 = vmatpush1.msra.mxu0 0.0
    %2441 = vmatprep.subr.mxu0 0.0
    %2442 = vmatpush1.msra.mxu0 0.0
    %2443 = vmatprep.subr.mxu0 0.0
    %2444 = vmatpush1.msra.mxu0 0.0
    %2445 = vmatprep.subr.mxu0 0.0
    %2446 = vmatpush1.msra.mxu0 0.0
    %2447 = vmatprep.subr.mxu0 0.0
    %2448 = vmatpush1.msra.mxu0 0.0
    %2449 = vmatprep.subr.mxu0 0.0
    %2450 = vmatpush1.msra.mxu0 0.0
    %2451 = vmatprep.subr.mxu0 0.0
    %2452 = vmatpush1.msra.mxu0 0.0
    %2453 = vmatprep.subr.mxu0 0.0
    %2454 = vmatpush1.msra.mxu0 0.0
    %2455 = vmatprep.subr.mxu0 0.0
    %2456 = vmatpush1.msra.mxu0 0.0
    %2457 = vmatprep.subr.mxu0 0.0
    %2458 = vmatpush1.msra.mxu0 0.0
    %2459 = vmatprep.subr.mxu0 0.0
    %2460 = vmatpush1.msra.mxu0 %v695
    %2461 = vmatprep.subr.mxu0 0.0
    %2462 = vmatpush2.msra.mxu0 0.0
    %2463 = vmatprep.subr.mxu0 0.0
    %2464 = vmatpush2.msra.mxu0 0.0
    %2465 = vmatprep.subr.mxu0 0.0
    %2466 = vmatpush2.msra.mxu0 0.0
    %2467 = vmatprep.subr.mxu0 0.0
    %2468 = vmatpush2.msra.mxu0 0.0
    %2469 = vmatprep.subr.mxu0 0.0
    %2470 = vmatpush2.msra.mxu0 0.0
    %2471 = vmatprep.subr.mxu0 0.0
    %2472 = vmatpush2.msra.mxu0 0.0
    %2473 = vmatprep.subr.mxu0 0.0
    %2474 = vmatpush2.msra.mxu0 0.0
    %2475 = vmatprep.subr.mxu0 0.0
    %2476 = vmatpush2.msra.mxu0 0.0
    %2477 = vmatprep.subr.mxu0 0.0
    %2478 = vmatpush2.msra.mxu0 0.0
    %2479 = vmatprep.subr.mxu0 0.0
    %2480 = vmatpush2.msra.mxu0 0.0
    %2481 = vmatprep.subr.mxu0 0.0
    %2482 = vmatpush2.msra.mxu0 0.0
    %2483 = vmatprep.subr.mxu0 0.0
    %2484 = vmatpush2.msra.mxu0 0.0
    %2485 = vmatprep.subr.mxu0 0.0
    %2486 = vmatpush2.msra.mxu0 0.0
    %2487 = vmatprep.subr.mxu0 0.0
    %2488 = vmatpush2.msra.mxu0 0.0
    %2489 = vmatprep.subr.mxu0 0.0
    %2490 = vmatpush2.msra.mxu0 0.0
    %2491 = vmatprep.subr.mxu0 0.0
    %2492 = vmatpush2.msra.mxu0 0.0
    %2493 = vmatprep.mubr.f32.mxu0 0.0
    %2494 = vmatmul.mubr.f32.gmra.mxu0 %v2382
    %v2495 = vpop.f32.mrf.mxu0
    %v2496 = vadd.f32 0.0, %v2495
    %v2497 = vpop.f32.mrf.mxu0
    %2498 = vmatprep.mubr.f32.mxu0 0.0
    %2499 = vmatmul.mubr.f32.gmra.mxu0 %v2385
    %v2500 = vpop.f32.mrf.mxu0
    %v2501 = vadd.f32 0.0, %v2500
    %v2502 = vpop.f32.mrf.mxu0
    %2503 = vmatprep.mubr.f32.mxu0 0.0
    %2504 = vmatmul.mubr.f32.gmra.mxu0 %v2388
    %v2505 = vpop.f32.mrf.mxu0
    %v2506 = vadd.f32 0.0, %v2505
    %v2507 = vpop.f32.mrf.mxu0
    %2508 = vmatprep.mubr.f32.mxu0 0.0
    %2509 = vmatmul.mubr.f32.gmra.mxu0 %v2391
    %v2510 = vpop.f32.mrf.mxu0
    %v2511 = vadd.f32 0.0, %v2510
    %v2512 = vpop.f32.mrf.mxu0
    %2513 = vmatprep.mubr.f32.mxu0 0.0
    %2514 = vmatmul.mubr.f32.gmra.mxu0 %v2394
    %v2515 = vpop.f32.mrf.mxu0
    %v2516 = vadd.f32 0.0, %v2515
    %v2517 = vpop.f32.mrf.mxu0
    %2518 = vmatprep.mubr.f32.mxu0 0.0
    %2519 = vmatmul.mubr.f32.gmra.mxu0 %v2397
    %v2520 = vpop.f32.mrf.mxu0
    %v2521 = vadd.f32 0.0, %v2520
    %v2522 = vpop.f32.mrf.mxu0
    %2523 = vmatprep.mubr.f32.mxu0 0.0
    %2524 = vmatmul.mubr.f32.gmra.mxu0 %v2400
    %v2525 = vpop.f32.mrf.mxu0
    %v2526 = vadd.f32 0.0, %v2525
    %v2527 = vpop.f32.mrf.mxu0
    %2528 = vmatprep.mubr.f32.mxu0 0.0
    %2529 = vmatmul.mubr.f32.gmra.mxu0 %v2403
    %v2530 = vpop.f32.mrf.mxu0
    %v2531 = vadd.f32 0.0, %v2530
    %v2532 = vpop.f32.mrf.mxu0
    %2533 = vmatprep.mubr.f32.mxu0 0.0
    %2534 = vmatmul.mubr.f32.gmra.mxu0 %v2406
    %v2535 = vpop.f32.mrf.mxu0
    %v2536 = vadd.f32 0.0, %v2535
    %v2537 = vpop.f32.mrf.mxu0
    %2538 = vmatprep.mubr.f32.mxu0 0.0
    %2539 = vmatmul.mubr.f32.gmra.mxu0 %v2409
    %v2540 = vpop.f32.mrf.mxu0
    %v2541 = vadd.f32 0.0, %v2540
    %v2542 = vpop.f32.mrf.mxu0
    %2543 = vmatprep.mubr.f32.mxu0 0.0
    %2544 = vmatmul.mubr.f32.gmra.mxu0 %v2412
    %v2545 = vpop.f32.mrf.mxu0
    %v2546 = vadd.f32 0.0, %v2545
    %v2547 = vpop.f32.mrf.mxu0
    %2548 = vmatprep.mubr.f32.mxu0 0.0
    %2549 = vmatmul.mubr.f32.gmra.mxu0 %v2415
    %v2550 = vpop.f32.mrf.mxu0
    %v2551 = vadd.f32 0.0, %v2550
    %v2552 = vpop.f32.mrf.mxu0
    %2553 = vmatprep.mubr.f32.mxu0 0.0
    %2554 = vmatmul.mubr.f32.gmra.mxu0 %v2418
    %v2555 = vpop.f32.mrf.mxu0
    %v2556 = vadd.f32 0.0, %v2555
    %v2557 = vpop.f32.mrf.mxu0
    %2558 = vmatprep.mubr.f32.mxu0 0.0
    %2559 = vmatmul.mubr.f32.gmra.mxu0 %v2421
    %v2560 = vpop.f32.mrf.mxu0
    %v2561 = vadd.f32 0.0, %v2560
    %v2562 = vpop.f32.mrf.mxu0
    %2563 = vmatprep.mubr.f32.mxu0 0.0
    %2564 = vmatmul.mubr.f32.gmra.mxu0 %v2424
    %v2565 = vpop.f32.mrf.mxu0
    %v2566 = vadd.f32 0.0, %v2565
    %v2567 = vpop.f32.mrf.mxu0
    %2568 = vmatprep.mubr.f32.mxu0 0.0
    %2569 = vmatmul.mubr.f32.gmra.mxu0 %v2427
    %v2570 = vpop.f32.mrf.mxu0
    %v2571 = vadd.f32 0.0, %v2570
    %v2572 = vpop.f32.mrf.mxu0
    %2573 = vdwg.mxu0
    %v2574 = vmul.f32 %v2496, %v1836
    %v2575 = vmul.f32 %v2501, %v1837
    %v2576 = vmul.f32 %v2506, %v1838
    %v2577 = vmul.f32 %v2511, %v1839
    %v2578 = vmul.f32 %v2516, %v1840
    %v2579 = vmul.f32 %v2521, %v1841
    %v2580 = vmul.f32 %v2526, %v1842
    %v2581 = vmul.f32 %v2531, %v1843
    %v2582 = vmul.f32 %v2536, %v1844
    %v2583 = vmul.f32 %v2541, %v1845
    %v2584 = vmul.f32 %v2546, %v1846
    %v2585 = vmul.f32 %v2551, %v1847
    %v2586 = vmul.f32 %v2556, %v1848
    %v2587 = vmul.f32 %v2561, %v1849
    %v2588 = vmul.f32 %v2566, %v1850
    %v2589 = vmul.f32 %v2571, %v1851
    %v2590 = vsel %vm109, %v2574, 0.0
    %v2591 = vsel %vm109, %v2576, 0.0
    %v2592 = vadd.f32 %v2590, %v2591
    %v2593 = vsel %vm109, %v2578, 0.0
    %v2594 = vadd.f32 %v2592, %v2593
    %v2595 = vsel %vm109, %v2580, 0.0
    %v2596 = vadd.f32 %v2594, %v2595
    %v2597 = vsel %vm109, %v2582, 0.0
    %v2598 = vadd.f32 %v2596, %v2597
    %v2599 = vsel %vm109, %v2584, 0.0
    %v2600 = vadd.f32 %v2598, %v2599
    %v2601 = vsel %vm109, %v2586, 0.0
    %v2602 = vadd.f32 %v2600, %v2601
    %v2603 = vsel %vm109, %v2588, 0.0
    %v2604 = vadd.f32 %v2602, %v2603
    %v2605 = vsel %vm109, %v2575, 0.0
    %v2606 = vsel %vm109, %v2577, 0.0
    %v2607 = vadd.f32 %v2605, %v2606
    %v2608 = vsel %vm109, %v2579, 0.0
    %v2609 = vadd.f32 %v2607, %v2608
    %v2610 = vsel %vm109, %v2581, 0.0
    %v2611 = vadd.f32 %v2609, %v2610
    %v2612 = vsel %vm109, %v2583, 0.0
    %v2613 = vadd.f32 %v2611, %v2612
    %v2614 = vsel %vm109, %v2585, 0.0
    %v2615 = vadd.f32 %v2613, %v2614
    %v2616 = vsel %vm109, %v2587, 0.0
    %v2617 = vadd.f32 %v2615, %v2616
    %v2618 = vsel %vm109, %v2589, 0.0
    %v2619 = vadd.f32 %v2617, %v2618
    %v2620 = vld [vmem:[#allocation8] sm:$0xff]
    %v2621 = vld [vmem:[#allocation8 + $0x8] sm:$0xff]
    %v2622 = vld [vmem:[#allocation8 + $0x10] sm:$0xff]
    %v2623 = vld [vmem:[#allocation8 + $0x18] sm:$0xff]
    %v2625 = vsel %vm109, %v2604, 0
    %v2628 = vsel %vm109, %v2619, 0
    %2630 = vmatprep.subr.mxu0 0.0
    %2631 = vmatpush1.msra.mxu0 0.0
    %2632 = vmatprep.subr.mxu0 0.0
    %2633 = vmatpush1.msra.mxu0 0.0
    %2634 = vmatprep.subr.mxu0 0.0
    %2635 = vmatpush1.msra.mxu0 0.0
    %2636 = vmatprep.subr.mxu0 0.0
    %2637 = vmatpush1.msra.mxu0 0.0
    %2638 = vmatprep.subr.mxu0 0.0
    %2639 = vmatpush1.msra.mxu0 0.0
    %2640 = vmatprep.subr.mxu0 0.0
    %2641 = vmatpush1.msra.mxu0 0.0
    %2642 = vmatprep.subr.mxu0 0.0
    %2643 = vmatpush1.msra.mxu0 0.0
    %2644 = vmatprep.subr.mxu0 0.0
    %2645 = vmatpush1.msra.mxu0 0.0
    %2646 = vmatprep.subr.mxu0 0.0
    %2647 = vmatpush1.msra.mxu0 0.0
    %2648 = vmatprep.subr.mxu0 0.0
    %2649 = vmatpush1.msra.mxu0 0.0
    %2650 = vmatprep.subr.mxu0 0.0
    %2651 = vmatpush1.msra.mxu0 0.0
    %2652 = vmatprep.subr.mxu0 0.0
    %2653 = vmatpush1.msra.mxu0 0.0
    %2654 = vmatprep.subr.mxu0 0.0
    %2655 = vmatpush1.msra.mxu0 %v2623
    %2656 = vmatprep.subr.mxu0 0.0
    %2657 = vmatpush1.msra.mxu0 %v2622
    %2658 = vmatprep.subr.mxu0 0.0
    %2659 = vmatpush1.msra.mxu0 %v2621
    %2660 = vmatprep.subr.mxu0 0.0
    %2661 = vmatpush1.msra.mxu0 %v2620
    %2662 = vmatprep.subr.mxu0 0.0
    %2663 = vmatpush2.msra.mxu0 0.0
    %2664 = vmatprep.subr.mxu0 0.0
    %2665 = vmatpush2.msra.mxu0 0.0
    %2666 = vmatprep.subr.mxu0 0.0
    %2667 = vmatpush2.msra.mxu0 0.0
    %2668 = vmatprep.subr.mxu0 0.0
    %2669 = vmatpush2.msra.mxu0 0.0
    %2670 = vmatprep.subr.mxu0 0.0
    %2671 = vmatpush2.msra.mxu0 0.0
    %2672 = vmatprep.subr.mxu0 0.0
    %2673 = vmatpush2.msra.mxu0 0.0
    %2674 = vmatprep.subr.mxu0 0.0
    %2675 = vmatpush2.msra.mxu0 0.0
    %2676 = vmatprep.subr.mxu0 0.0
    %2677 = vmatpush2.msra.mxu0 0.0
    %2678 = vmatprep.subr.mxu0 0.0
    %2679 = vmatpush2.msra.mxu0 0.0
    %2680 = vmatprep.subr.mxu0 0.0
    %2681 = vmatpush2.msra.mxu0 0.0
    %2682 = vmatprep.subr.mxu0 0.0
    %2683 = vmatpush2.msra.mxu0 0.0
    %2684 = vmatprep.subr.mxu0 0.0
    %2685 = vmatpush2.msra.mxu0 0.0
    %2686 = vmatprep.subr.mxu0 0.0
    %2687 = vmatpush2.msra.mxu0 0.0
    %2688 = vmatprep.subr.mxu0 0.0
    %2689 = vmatpush2.msra.mxu0 0.0
    %2690 = vmatprep.subr.mxu0 0.0
    %2691 = vmatpush2.msra.mxu0 0.0
    %2692 = vmatprep.subr.mxu0 0.0
    %2693 = vmatpush2.msra.mxu0 0.0
    %2694 = vmatprep.mubr.f32.mxu0 0.0
    %2695 = vmatmul.mubr.f32.gmra.mxu0 %v2625
    %v2696 = vpop.f32.mrf.mxu0
    %v2697 = vadd.f32 0.0, %v2696
    %v2698 = vpop.f32.mrf.mxu0
    %2699 = vmatprep.mubr.f32.mxu0 0.0
    %2700 = vmatmul.mubr.f32.gmra.mxu0 %v2628
    %v2701 = vpop.f32.mrf.mxu0
    %v2702 = vadd.f32 0.0, %v2701
    %v2703 = vpop.f32.mrf.mxu0
    %2704 = vdwg.mxu0
    %v2706 = vlaneseq
    %v2707 = vshrl.u32 %v2706, 7
    %v2708 = vsub.s32 0, %v2707
    %v2709 = vrot.slane %v2380, %v2708
    %v2711 = vadd.f32 %v2709, %v2697
    %v2712 = vadd.f32 %v2709, %v2702
    %2713 = vmatprep.subr.mxu0 0.0
    %2714 = vmatpush1.msra.mxu0 0.0
    %2715 = vmatprep.subr.mxu0 0.0
    %2716 = vmatpush1.msra.mxu0 0.0
    %2717 = vmatprep.subr.mxu0 0.0
    %2718 = vmatpush1.msra.mxu0 0.0
    %2719 = vmatprep.subr.mxu0 0.0
    %2720 = vmatpush1.msra.mxu0 0.0
    %2721 = vmatprep.subr.mxu0 0.0
    %2722 = vmatpush1.msra.mxu0 0.0
    %2723 = vmatprep.subr.mxu0 0.0
    %2724 = vmatpush1.msra.mxu0 0.0
    %2725 = vmatprep.subr.mxu0 0.0
    %2726 = vmatpush1.msra.mxu0 0.0
    %2727 = vmatprep.subr.mxu0 0.0
    %2728 = vmatpush1.msra.mxu0 0.0
    %2729 = vmatprep.subr.mxu0 0.0
    %2730 = vmatpush1.msra.mxu0 0.0
    %2731 = vmatprep.subr.mxu0 0.0
    %2732 = vmatpush1.msra.mxu0 0.0
    %2733 = vmatprep.subr.mxu0 0.0
    %2734 = vmatpush1.msra.mxu0 0.0
    %2735 = vmatprep.subr.mxu0 0.0
    %2736 = vmatpush1.msra.mxu0 0.0
    %2737 = vmatprep.subr.mxu0 0.0
    %2738 = vmatpush1.msra.mxu0 0.0
    %2739 = vmatprep.subr.mxu0 0.0
    %2740 = vmatpush1.msra.mxu0 0.0
    %2741 = vmatprep.subr.mxu0 0.0
    %2742 = vmatpush1.msra.mxu0 0.0
    %2743 = vmatprep.subr.mxu0 0.0
    %2744 = vmatpush1.msra.mxu0 %v985
    %2745 = vmatprep.subr.mxu0 0.0
    %2746 = vmatpush2.msra.mxu0 0.0
    %2747 = vmatprep.subr.mxu0 0.0
    %2748 = vmatpush2.msra.mxu0 0.0
    %2749 = vmatprep.subr.mxu0 0.0
    %2750 = vmatpush2.msra.mxu0 0.0
    %2751 = vmatprep.subr.mxu0 0.0
    %2752 = vmatpush2.msra.mxu0 0.0
    %2753 = vmatprep.subr.mxu0 0.0
    %2754 = vmatpush2.msra.mxu0 0.0
    %2755 = vmatprep.subr.mxu0 0.0
    %2756 = vmatpush2.msra.mxu0 0.0
    %2757 = vmatprep.subr.mxu0 0.0
    %2758 = vmatpush2.msra.mxu0 0.0
    %2759 = vmatprep.subr.mxu0 0.0
    %2760 = vmatpush2.msra.mxu0 0.0
    %2761 = vmatprep.subr.mxu0 0.0
    %2762 = vmatpush2.msra.mxu0 0.0
    %2763 = vmatprep.subr.mxu0 0.0
    %2764 = vmatpush2.msra.mxu0 0.0
    %2765 = vmatprep.subr.mxu0 0.0
    %2766 = vmatpush2.msra.mxu0 0.0
    %2767 = vmatprep.subr.mxu0 0.0
    %2768 = vmatpush2.msra.mxu0 0.0
    %2769 = vmatprep.subr.mxu0 0.0
    %2770 = vmatpush2.msra.mxu0 0.0
    %2771 = vmatprep.subr.mxu0 0.0
    %2772 = vmatpush2.msra.mxu0 0.0
    %2773 = vmatprep.subr.mxu0 0.0
    %2774 = vmatpush2.msra.mxu0 0.0
    %2775 = vmatprep.subr.mxu0 0.0
    %2776 = vmatpush2.msra.mxu0 0.0
    %2777 = vmatprep.mubr.f32.mxu0 0.0
    %2778 = vmatmul.mubr.f32.gmra.mxu0 %v2382
    %v2779 = vpop.f32.mrf.mxu0
    %v2780 = vadd.f32 0.0, %v2779
    %v2781 = vpop.f32.mrf.mxu0
    %2782 = vmatprep.mubr.f32.mxu0 0.0
    %2783 = vmatmul.mubr.f32.gmra.mxu0 %v2385
    %v2784 = vpop.f32.mrf.mxu0
    %v2785 = vadd.f32 0.0, %v2784
    %v2786 = vpop.f32.mrf.mxu0
    %2787 = vmatprep.mubr.f32.mxu0 0.0
    %2788 = vmatmul.mubr.f32.gmra.mxu0 %v2388
    %v2789 = vpop.f32.mrf.mxu0
    %v2790 = vadd.f32 0.0, %v2789
    %v2791 = vpop.f32.mrf.mxu0
    %2792 = vmatprep.mubr.f32.mxu0 0.0
    %2793 = vmatmul.mubr.f32.gmra.mxu0 %v2391
    %v2794 = vpop.f32.mrf.mxu0
    %v2795 = vadd.f32 0.0, %v2794
    %v2796 = vpop.f32.mrf.mxu0
    %2797 = vmatprep.mubr.f32.mxu0 0.0
    %2798 = vmatmul.mubr.f32.gmra.mxu0 %v2394
    %v2799 = vpop.f32.mrf.mxu0
    %v2800 = vadd.f32 0.0, %v2799
    %v2801 = vpop.f32.mrf.mxu0
    %2802 = vmatprep.mubr.f32.mxu0 0.0
    %2803 = vmatmul.mubr.f32.gmra.mxu0 %v2397
    %v2804 = vpop.f32.mrf.mxu0
    %v2805 = vadd.f32 0.0, %v2804
    %v2806 = vpop.f32.mrf.mxu0
    %2807 = vmatprep.mubr.f32.mxu0 0.0
    %2808 = vmatmul.mubr.f32.gmra.mxu0 %v2400
    %v2809 = vpop.f32.mrf.mxu0
    %v2810 = vadd.f32 0.0, %v2809
    %v2811 = vpop.f32.mrf.mxu0
    %2812 = vmatprep.mubr.f32.mxu0 0.0
    %2813 = vmatmul.mubr.f32.gmra.mxu0 %v2403
    %v2814 = vpop.f32.mrf.mxu0
    %v2815 = vadd.f32 0.0, %v2814
    %v2816 = vpop.f32.mrf.mxu0
    %2817 = vmatprep.mubr.f32.mxu0 0.0
    %2818 = vmatmul.mubr.f32.gmra.mxu0 %v2406
    %v2819 = vpop.f32.mrf.mxu0
    %v2820 = vadd.f32 0.0, %v2819
    %v2821 = vpop.f32.mrf.mxu0
    %2822 = vmatprep.mubr.f32.mxu0 0.0
    %2823 = vmatmul.mubr.f32.gmra.mxu0 %v2409
    %v2824 = vpop.f32.mrf.mxu0
    %v2825 = vadd.f32 0.0, %v2824
    %v2826 = vpop.f32.mrf.mxu0
    %2827 = vmatprep.mubr.f32.mxu0 0.0
    %2828 = vmatmul.mubr.f32.gmra.mxu0 %v2412
    %v2829 = vpop.f32.mrf.mxu0
    %v2830 = vadd.f32 0.0, %v2829
    %v2831 = vpop.f32.mrf.mxu0
    %2832 = vmatprep.mubr.f32.mxu0 0.0
    %2833 = vmatmul.mubr.f32.gmra.mxu0 %v2415
    %v2834 = vpop.f32.mrf.mxu0
    %v2835 = vadd.f32 0.0, %v2834
    %v2836 = vpop.f32.mrf.mxu0
    %2837 = vmatprep.mubr.f32.mxu0 0.0
    %2838 = vmatmul.mubr.f32.gmra.mxu0 %v2418
    %v2839 = vpop.f32.mrf.mxu0
    %v2840 = vadd.f32 0.0, %v2839
    %v2841 = vpop.f32.mrf.mxu0
    %2842 = vmatprep.mubr.f32.mxu0 0.0
    %2843 = vmatmul.mubr.f32.gmra.mxu0 %v2421
    %v2844 = vpop.f32.mrf.mxu0
    %v2845 = vadd.f32 0.0, %v2844
    %v2846 = vpop.f32.mrf.mxu0
    %2847 = vmatprep.mubr.f32.mxu0 0.0
    %2848 = vmatmul.mubr.f32.gmra.mxu0 %v2424
    %v2849 = vpop.f32.mrf.mxu0
    %v2850 = vadd.f32 0.0, %v2849
    %v2851 = vpop.f32.mrf.mxu0
    %2852 = vmatprep.mubr.f32.mxu0 0.0
    %2853 = vmatmul.mubr.f32.gmra.mxu0 %v2427
    %v2854 = vpop.f32.mrf.mxu0
    %v2855 = vadd.f32 0.0, %v2854
    %v2856 = vpop.f32.mrf.mxu0
    %2857 = vdwg.mxu0
    %v2858 = vmul.f32 %v2780, %v1836
    %v2859 = vmul.f32 %v2785, %v1837
    %v2860 = vmul.f32 %v2790, %v1838
    %v2861 = vmul.f32 %v2795, %v1839
    %v2862 = vmul.f32 %v2800, %v1840
    %v2863 = vmul.f32 %v2805, %v1841
    %v2864 = vmul.f32 %v2810, %v1842
    %v2865 = vmul.f32 %v2815, %v1843
    %v2866 = vmul.f32 %v2820, %v1844
    %v2867 = vmul.f32 %v2825, %v1845
    %v2868 = vmul.f32 %v2830, %v1846
    %v2869 = vmul.f32 %v2835, %v1847
    %v2870 = vmul.f32 %v2840, %v1848
    %v2871 = vmul.f32 %v2845, %v1849
    %v2872 = vmul.f32 %v2850, %v1850
    %v2873 = vmul.f32 %v2855, %v1851
    %v2874 = vsel %vm109, %v2858, 0.0
    %v2875 = vsel %vm109, %v2860, 0.0
    %v2876 = vadd.f32 %v2874, %v2875
    %v2877 = vsel %vm109, %v2862, 0.0
    %v2878 = vadd.f32 %v2876, %v2877
    %v2879 = vsel %vm109, %v2864, 0.0
    %v2880 = vadd.f32 %v2878, %v2879
    %v2881 = vsel %vm109, %v2866, 0.0
    %v2882 = vadd.f32 %v2880, %v2881
    %v2883 = vsel %vm109, %v2868, 0.0
    %v2884 = vadd.f32 %v2882, %v2883
    %v2885 = vsel %vm109, %v2870, 0.0
    %v2886 = vadd.f32 %v2884, %v2885
    %v2887 = vsel %vm109, %v2872, 0.0
    %v2888 = vadd.f32 %v2886, %v2887
    %v2889 = vsel %vm109, %v2859, 0.0
    %v2890 = vsel %vm109, %v2861, 0.0
    %v2891 = vadd.f32 %v2889, %v2890
    %v2892 = vsel %vm109, %v2863, 0.0
    %v2893 = vadd.f32 %v2891, %v2892
    %v2894 = vsel %vm109, %v2865, 0.0
    %v2895 = vadd.f32 %v2893, %v2894
    %v2896 = vsel %vm109, %v2867, 0.0
    %v2897 = vadd.f32 %v2895, %v2896
    %v2898 = vsel %vm109, %v2869, 0.0
    %v2899 = vadd.f32 %v2897, %v2898
    %v2900 = vsel %vm109, %v2871, 0.0
    %v2901 = vadd.f32 %v2899, %v2900
    %v2902 = vsel %vm109, %v2873, 0.0
    %v2903 = vadd.f32 %v2901, %v2902
    %s2904 = scalar_lea.vmem [#allocation8], 32
    %v2905 = vld [vmem:[%s2904] sm:$0xff]
    %v2906 = vld [vmem:[%s2904 + $0x8] sm:$0xff]
    %v2907 = vld [vmem:[%s2904 + $0x10] sm:$0xff]
    %v2908 = vld [vmem:[%s2904 + $0x18] sm:$0xff]
    %v2910 = vsel %vm109, %v2888, 0
    %v2913 = vsel %vm109, %v2903, 0
    %2915 = vmatprep.subr.mxu0 0.0
    %2916 = vmatpush1.msra.mxu0 0.0
    %2917 = vmatprep.subr.mxu0 0.0
    %2918 = vmatpush1.msra.mxu0 0.0
    %2919 = vmatprep.subr.mxu0 0.0
    %2920 = vmatpush1.msra.mxu0 0.0
    %2921 = vmatprep.subr.mxu0 0.0
    %2922 = vmatpush1.msra.mxu0 0.0
    %2923 = vmatprep.subr.mxu0 0.0
    %2924 = vmatpush1.msra.mxu0 0.0
    %2925 = vmatprep.subr.mxu0 0.0
    %2926 = vmatpush1.msra.mxu0 0.0
    %2927 = vmatprep.subr.mxu0 0.0
    %2928 = vmatpush1.msra.mxu0 0.0
    %2929 = vmatprep.subr.mxu0 0.0
    %2930 = vmatpush1.msra.mxu0 0.0
    %2931 = vmatprep.subr.mxu0 0.0
    %2932 = vmatpush1.msra.mxu0 0.0
    %2933 = vmatprep.subr.mxu0 0.0
    %2934 = vmatpush1.msra.mxu0 0.0
    %2935 = vmatprep.subr.mxu0 0.0
    %2936 = vmatpush1.msra.mxu0 0.0
    %2937 = vmatprep.subr.mxu0 0.0
    %2938 = vmatpush1.msra.mxu0 0.0
    %2939 = vmatprep.subr.mxu0 0.0
    %2940 = vmatpush1.msra.mxu0 %v2908
    %2941 = vmatprep.subr.mxu0 0.0
    %2942 = vmatpush1.msra.mxu0 %v2907
    %2943 = vmatprep.subr.mxu0 0.0
    %2944 = vmatpush1.msra.mxu0 %v2906
    %2945 = vmatprep.subr.mxu0 0.0
    %2946 = vmatpush1.msra.mxu0 %v2905
    %2947 = vmatprep.subr.mxu0 0.0
    %2948 = vmatpush2.msra.mxu0 0.0
    %2949 = vmatprep.subr.mxu0 0.0
    %2950 = vmatpush2.msra.mxu0 0.0
    %2951 = vmatprep.subr.mxu0 0.0
    %2952 = vmatpush2.msra.mxu0 0.0
    %2953 = vmatprep.subr.mxu0 0.0
    %2954 = vmatpush2.msra.mxu0 0.0
    %2955 = vmatprep.subr.mxu0 0.0
    %2956 = vmatpush2.msra.mxu0 0.0
    %2957 = vmatprep.subr.mxu0 0.0
    %2958 = vmatpush2.msra.mxu0 0.0
    %2959 = vmatprep.subr.mxu0 0.0
    %2960 = vmatpush2.msra.mxu0 0.0
    %2961 = vmatprep.subr.mxu0 0.0
    %2962 = vmatpush2.msra.mxu0 0.0
    %2963 = vmatprep.subr.mxu0 0.0
    %2964 = vmatpush2.msra.mxu0 0.0
    %2965 = vmatprep.subr.mxu0 0.0
    %2966 = vmatpush2.msra.mxu0 0.0
    %2967 = vmatprep.subr.mxu0 0.0
    %2968 = vmatpush2.msra.mxu0 0.0
    %2969 = vmatprep.subr.mxu0 0.0
    %2970 = vmatpush2.msra.mxu0 0.0
    %2971 = vmatprep.subr.mxu0 0.0
    %2972 = vmatpush2.msra.mxu0 0.0
    %2973 = vmatprep.subr.mxu0 0.0
    %2974 = vmatpush2.msra.mxu0 0.0
    %2975 = vmatprep.subr.mxu0 0.0
    %2976 = vmatpush2.msra.mxu0 0.0
    %2977 = vmatprep.subr.mxu0 0.0
    %2978 = vmatpush2.msra.mxu0 0.0
    %2979 = vmatprep.mubr.f32.mxu0 0.0
    %2980 = vmatmul.mubr.f32.gmra.mxu0 %v2910
    %v2981 = vpop.f32.mrf.mxu0
    %v2982 = vadd.f32 0.0, %v2981
    %v2983 = vpop.f32.mrf.mxu0
    %2984 = vmatprep.mubr.f32.mxu0 0.0
    %2985 = vmatmul.mubr.f32.gmra.mxu0 %v2913
    %v2986 = vpop.f32.mrf.mxu0
    %v2987 = vadd.f32 0.0, %v2986
    %v2988 = vpop.f32.mrf.mxu0
    %2989 = vdwg.mxu0
    %v2990 = vadd.f32 %v2711, %v2982
    %v2991 = vadd.f32 %v2712, %v2987
    %2992 = vmatprep.subr.mxu0 0.0
    %2993 = vmatpush1.msra.mxu0 0.0
    %2994 = vmatprep.subr.mxu0 0.0
    %2995 = vmatpush1.msra.mxu0 0.0
    %2996 = vmatprep.subr.mxu0 0.0
    %2997 = vmatpush1.msra.mxu0 0.0
    %2998 = vmatprep.subr.mxu0 0.0
    %2999 = vmatpush1.msra.mxu0 0.0
    %3000 = vmatprep.subr.mxu0 0.0
    %3001 = vmatpush1.msra.mxu0 0.0
    %3002 = vmatprep.subr.mxu0 0.0
    %3003 = vmatpush1.msra.mxu0 0.0
    %3004 = vmatprep.subr.mxu0 0.0
    %3005 = vmatpush1.msra.mxu0 0.0
    %3006 = vmatprep.subr.mxu0 0.0
    %3007 = vmatpush1.msra.mxu0 0.0
    %3008 = vmatprep.subr.mxu0 0.0
    %3009 = vmatpush1.msra.mxu0 0.0
    %3010 = vmatprep.subr.mxu0 0.0
    %3011 = vmatpush1.msra.mxu0 0.0
    %3012 = vmatprep.subr.mxu0 0.0
    %3013 = vmatpush1.msra.mxu0 0.0
    %3014 = vmatprep.subr.mxu0 0.0
    %3015 = vmatpush1.msra.mxu0 0.0
    %3016 = vmatprep.subr.mxu0 0.0
    %3017 = vmatpush1.msra.mxu0 0.0
    %3018 = vmatprep.subr.mxu0 0.0
    %3019 = vmatpush1.msra.mxu0 0.0
    %3020 = vmatprep.subr.mxu0 0.0
    %3021 = vmatpush1.msra.mxu0 0.0
    %3022 = vmatprep.subr.mxu0 0.0
    %3023 = vmatpush1.msra.mxu0 %v1270
    %3024 = vmatprep.subr.mxu0 0.0
    %3025 = vmatpush2.msra.mxu0 0.0
    %3026 = vmatprep.subr.mxu0 0.0
    %3027 = vmatpush2.msra.mxu0 0.0
    %3028 = vmatprep.subr.mxu0 0.0
    %3029 = vmatpush2.msra.mxu0 0.0
    %3030 = vmatprep.subr.mxu0 0.0
    %3031 = vmatpush2.msra.mxu0 0.0
    %3032 = vmatprep.subr.mxu0 0.0
    %3033 = vmatpush2.msra.mxu0 0.0
    %3034 = vmatprep.subr.mxu0 0.0
    %3035 = vmatpush2.msra.mxu0 0.0
    %3036 = vmatprep.subr.mxu0 0.0
    %3037 = vmatpush2.msra.mxu0 0.0
    %3038 = vmatprep.subr.mxu0 0.0
    %3039 = vmatpush2.msra.mxu0 0.0
    %3040 = vmatprep.subr.mxu0 0.0
    %3041 = vmatpush2.msra.mxu0 0.0
    %3042 = vmatprep.subr.mxu0 0.0
    %3043 = vmatpush2.msra.mxu0 0.0
    %3044 = vmatprep.subr.mxu0 0.0
    %3045 = vmatpush2.msra.mxu0 0.0
    %3046 = vmatprep.subr.mxu0 0.0
    %3047 = vmatpush2.msra.mxu0 0.0
    %3048 = vmatprep.subr.mxu0 0.0
    %3049 = vmatpush2.msra.mxu0 0.0
    %3050 = vmatprep.subr.mxu0 0.0
    %3051 = vmatpush2.msra.mxu0 0.0
    %3052 = vmatprep.subr.mxu0 0.0
    %3053 = vmatpush2.msra.mxu0 0.0
    %3054 = vmatprep.subr.mxu0 0.0
    %3055 = vmatpush2.msra.mxu0 0.0
    %3056 = vmatprep.mubr.f32.mxu0 0.0
    %3057 = vmatmul.mubr.f32.gmra.mxu0 %v2382
    %v3058 = vpop.f32.mrf.mxu0
    %v3059 = vadd.f32 0.0, %v3058
    %v3060 = vpop.f32.mrf.mxu0
    %3061 = vmatprep.mubr.f32.mxu0 0.0
    %3062 = vmatmul.mubr.f32.gmra.mxu0 %v2385
    %v3063 = vpop.f32.mrf.mxu0
    %v3064 = vadd.f32 0.0, %v3063
    %v3065 = vpop.f32.mrf.mxu0
    %3066 = vmatprep.mubr.f32.mxu0 0.0
    %3067 = vmatmul.mubr.f32.gmra.mxu0 %v2388
    %v3068 = vpop.f32.mrf.mxu0
    %v3069 = vadd.f32 0.0, %v3068
    %v3070 = vpop.f32.mrf.mxu0
    %3071 = vmatprep.mubr.f32.mxu0 0.0
    %3072 = vmatmul.mubr.f32.gmra.mxu0 %v2391
    %v3073 = vpop.f32.mrf.mxu0
    %v3074 = vadd.f32 0.0, %v3073
    %v3075 = vpop.f32.mrf.mxu0
    %3076 = vmatprep.mubr.f32.mxu0 0.0
    %3077 = vmatmul.mubr.f32.gmra.mxu0 %v2394
    %v3078 = vpop.f32.mrf.mxu0
    %v3079 = vadd.f32 0.0, %v3078
    %v3080 = vpop.f32.mrf.mxu0
    %3081 = vmatprep.mubr.f32.mxu0 0.0
    %3082 = vmatmul.mubr.f32.gmra.mxu0 %v2397
    %v3083 = vpop.f32.mrf.mxu0
    %v3084 = vadd.f32 0.0, %v3083
    %v3085 = vpop.f32.mrf.mxu0
    %3086 = vmatprep.mubr.f32.mxu0 0.0
    %3087 = vmatmul.mubr.f32.gmra.mxu0 %v2400
    %v3088 = vpop.f32.mrf.mxu0
    %v3089 = vadd.f32 0.0, %v3088
    %v3090 = vpop.f32.mrf.mxu0
    %3091 = vmatprep.mubr.f32.mxu0 0.0
    %3092 = vmatmul.mubr.f32.gmra.mxu0 %v2403
    %v3093 = vpop.f32.mrf.mxu0
    %v3094 = vadd.f32 0.0, %v3093
    %v3095 = vpop.f32.mrf.mxu0
    %3096 = vmatprep.mubr.f32.mxu0 0.0
    %3097 = vmatmul.mubr.f32.gmra.mxu0 %v2406
    %v3098 = vpop.f32.mrf.mxu0
    %v3099 = vadd.f32 0.0, %v3098
    %v3100 = vpop.f32.mrf.mxu0
    %3101 = vmatprep.mubr.f32.mxu0 0.0
    %3102 = vmatmul.mubr.f32.gmra.mxu0 %v2409
    %v3103 = vpop.f32.mrf.mxu0
    %v3104 = vadd.f32 0.0, %v3103
    %v3105 = vpop.f32.mrf.mxu0
    %3106 = vmatprep.mubr.f32.mxu0 0.0
    %3107 = vmatmul.mubr.f32.gmra.mxu0 %v2412
    %v3108 = vpop.f32.mrf.mxu0
    %v3109 = vadd.f32 0.0, %v3108
    %v3110 = vpop.f32.mrf.mxu0
    %3111 = vmatprep.mubr.f32.mxu0 0.0
    %3112 = vmatmul.mubr.f32.gmra.mxu0 %v2415
    %v3113 = vpop.f32.mrf.mxu0
    %v3114 = vadd.f32 0.0, %v3113
    %v3115 = vpop.f32.mrf.mxu0
    %3116 = vmatprep.mubr.f32.mxu0 0.0
    %3117 = vmatmul.mubr.f32.gmra.mxu0 %v2418
    %v3118 = vpop.f32.mrf.mxu0
    %v3119 = vadd.f32 0.0, %v3118
    %v3120 = vpop.f32.mrf.mxu0
    %3121 = vmatprep.mubr.f32.mxu0 0.0
    %3122 = vmatmul.mubr.f32.gmra.mxu0 %v2421
    %v3123 = vpop.f32.mrf.mxu0
    %v3124 = vadd.f32 0.0, %v3123
    %v3125 = vpop.f32.mrf.mxu0
    %3126 = vmatprep.mubr.f32.mxu0 0.0
    %3127 = vmatmul.mubr.f32.gmra.mxu0 %v2424
    %v3128 = vpop.f32.mrf.mxu0
    %v3129 = vadd.f32 0.0, %v3128
    %v3130 = vpop.f32.mrf.mxu0
    %3131 = vmatprep.mubr.f32.mxu0 0.0
    %3132 = vmatmul.mubr.f32.gmra.mxu0 %v2427
    %v3133 = vpop.f32.mrf.mxu0
    %v3134 = vadd.f32 0.0, %v3133
    %v3135 = vpop.f32.mrf.mxu0
    %3136 = vdwg.mxu0
    %v3137 = vmul.f32 %v3059, %v1836
    %v3138 = vmul.f32 %v3064, %v1837
    %v3139 = vmul.f32 %v3069, %v1838
    %v3140 = vmul.f32 %v3074, %v1839
    %v3141 = vmul.f32 %v3079, %v1840
    %v3142 = vmul.f32 %v3084, %v1841
    %v3143 = vmul.f32 %v3089, %v1842
    %v3144 = vmul.f32 %v3094, %v1843
    %v3145 = vmul.f32 %v3099, %v1844
    %v3146 = vmul.f32 %v3104, %v1845
    %v3147 = vmul.f32 %v3109, %v1846
    %v3148 = vmul.f32 %v3114, %v1847
    %v3149 = vmul.f32 %v3119, %v1848
    %v3150 = vmul.f32 %v3124, %v1849
    %v3151 = vmul.f32 %v3129, %v1850
    %v3152 = vmul.f32 %v3134, %v1851
    %v3153 = vsel %vm109, %v3137, 0.0
    %v3154 = vsel %vm109, %v3139, 0.0
    %v3155 = vadd.f32 %v3153, %v3154
    %v3156 = vsel %vm109, %v3141, 0.0
    %v3157 = vadd.f32 %v3155, %v3156
    %v3158 = vsel %vm109, %v3143, 0.0
    %v3159 = vadd.f32 %v3157, %v3158
    %v3160 = vsel %vm109, %v3145, 0.0
    %v3161 = vadd.f32 %v3159, %v3160
    %v3162 = vsel %vm109, %v3147, 0.0
    %v3163 = vadd.f32 %v3161, %v3162
    %v3164 = vsel %vm109, %v3149, 0.0
    %v3165 = vadd.f32 %v3163, %v3164
    %v3166 = vsel %vm109, %v3151, 0.0
    %v3167 = vadd.f32 %v3165, %v3166
    %v3168 = vsel %vm109, %v3138, 0.0
    %v3169 = vsel %vm109, %v3140, 0.0
    %v3170 = vadd.f32 %v3168, %v3169
    %v3171 = vsel %vm109, %v3142, 0.0
    %v3172 = vadd.f32 %v3170, %v3171
    %v3173 = vsel %vm109, %v3144, 0.0
    %v3174 = vadd.f32 %v3172, %v3173
    %v3175 = vsel %vm109, %v3146, 0.0
    %v3176 = vadd.f32 %v3174, %v3175
    %v3177 = vsel %vm109, %v3148, 0.0
    %v3178 = vadd.f32 %v3176, %v3177
    %v3179 = vsel %vm109, %v3150, 0.0
    %v3180 = vadd.f32 %v3178, %v3179
    %v3181 = vsel %vm109, %v3152, 0.0
    %v3182 = vadd.f32 %v3180, %v3181
    %s3183 = scalar_lea.vmem [#allocation8], 64
    %v3184 = vld [vmem:[%s3183] sm:$0xff]
    %v3185 = vld [vmem:[%s3183 + $0x8] sm:$0xff]
    %v3186 = vld [vmem:[%s3183 + $0x10] sm:$0xff]
    %v3187 = vld [vmem:[%s3183 + $0x18] sm:$0xff]
    %v3189 = vsel %vm109, %v3167, 0
    %v3192 = vsel %vm109, %v3182, 0
    %3194 = vmatprep.subr.mxu0 0.0
    %3195 = vmatpush1.msra.mxu0 0.0
    %3196 = vmatprep.subr.mxu0 0.0
    %3197 = vmatpush1.msra.mxu0 0.0
    %3198 = vmatprep.subr.mxu0 0.0
    %3199 = vmatpush1.msra.mxu0 0.0
    %3200 = vmatprep.subr.mxu0 0.0
    %3201 = vmatpush1.msra.mxu0 0.0
    %3202 = vmatprep.subr.mxu0 0.0
    %3203 = vmatpush1.msra.mxu0 0.0
    %3204 = vmatprep.subr.mxu0 0.0
    %3205 = vmatpush1.msra.mxu0 0.0
    %3206 = vmatprep.subr.mxu0 0.0
    %3207 = vmatpush1.msra.mxu0 0.0
    %3208 = vmatprep.subr.mxu0 0.0
    %3209 = vmatpush1.msra.mxu0 0.0
    %3210 = vmatprep.subr.mxu0 0.0
    %3211 = vmatpush1.msra.mxu0 0.0
    %3212 = vmatprep.subr.mxu0 0.0
    %3213 = vmatpush1.msra.mxu0 0.0
    %3214 = vmatprep.subr.mxu0 0.0
    %3215 = vmatpush1.msra.mxu0 0.0
    %3216 = vmatprep.subr.mxu0 0.0
    %3217 = vmatpush1.msra.mxu0 0.0
    %3218 = vmatprep.subr.mxu0 0.0
    %3219 = vmatpush1.msra.mxu0 %v3187
    %3220 = vmatprep.subr.mxu0 0.0
    %3221 = vmatpush1.msra.mxu0 %v3186
    %3222 = vmatprep.subr.mxu0 0.0
    %3223 = vmatpush1.msra.mxu0 %v3185
    %3224 = vmatprep.subr.mxu0 0.0
    %3225 = vmatpush1.msra.mxu0 %v3184
    %3226 = vmatprep.subr.mxu0 0.0
    %3227 = vmatpush2.msra.mxu0 0.0
    %3228 = vmatprep.subr.mxu0 0.0
    %3229 = vmatpush2.msra.mxu0 0.0
    %3230 = vmatprep.subr.mxu0 0.0
    %3231 = vmatpush2.msra.mxu0 0.0
    %3232 = vmatprep.subr.mxu0 0.0
    %3233 = vmatpush2.msra.mxu0 0.0
    %3234 = vmatprep.subr.mxu0 0.0
    %3235 = vmatpush2.msra.mxu0 0.0
    %3236 = vmatprep.subr.mxu0 0.0
    %3237 = vmatpush2.msra.mxu0 0.0
    %3238 = vmatprep.subr.mxu0 0.0
    %3239 = vmatpush2.msra.mxu0 0.0
    %3240 = vmatprep.subr.mxu0 0.0
    %3241 = vmatpush2.msra.mxu0 0.0
    %3242 = vmatprep.subr.mxu0 0.0
    %3243 = vmatpush2.msra.mxu0 0.0
    %3244 = vmatprep.subr.mxu0 0.0
    %3245 = vmatpush2.msra.mxu0 0.0
    %3246 = vmatprep.subr.mxu0 0.0
    %3247 = vmatpush2.msra.mxu0 0.0
    %3248 = vmatprep.subr.mxu0 0.0
    %3249 = vmatpush2.msra.mxu0 0.0
    %3250 = vmatprep.subr.mxu0 0.0
    %3251 = vmatpush2.msra.mxu0 0.0
    %3252 = vmatprep.subr.mxu0 0.0
    %3253 = vmatpush2.msra.mxu0 0.0
    %3254 = vmatprep.subr.mxu0 0.0
    %3255 = vmatpush2.msra.mxu0 0.0
    %3256 = vmatprep.subr.mxu0 0.0
    %3257 = vmatpush2.msra.mxu0 0.0
    %3258 = vmatprep.mubr.f32.mxu0 0.0
    %3259 = vmatmul.mubr.f32.gmra.mxu0 %v3189
    %v3260 = vpop.f32.mrf.mxu0
    %v3261 = vadd.f32 0.0, %v3260
    %v3262 = vpop.f32.mrf.mxu0
    %3263 = vmatprep.mubr.f32.mxu0 0.0
    %3264 = vmatmul.mubr.f32.gmra.mxu0 %v3192
    %v3265 = vpop.f32.mrf.mxu0
    %v3266 = vadd.f32 0.0, %v3265
    %v3267 = vpop.f32.mrf.mxu0
    %3268 = vdwg.mxu0
    %v3269 = vadd.f32 %v2990, %v3261
    %v3270 = vadd.f32 %v2991, %v3266
    %3271 = vmatprep.subr.mxu0 0.0
    %3272 = vmatpush1.msra.mxu0 0.0
    %3273 = vmatprep.subr.mxu0 0.0
    %3274 = vmatpush1.msra.mxu0 0.0
    %3275 = vmatprep.subr.mxu0 0.0
    %3276 = vmatpush1.msra.mxu0 0.0
    %3277 = vmatprep.subr.mxu0 0.0
    %3278 = vmatpush1.msra.mxu0 0.0
    %3279 = vmatprep.subr.mxu0 0.0
    %3280 = vmatpush1.msra.mxu0 0.0
    %3281 = vmatprep.subr.mxu0 0.0
    %3282 = vmatpush1.msra.mxu0 0.0
    %3283 = vmatprep.subr.mxu0 0.0
    %3284 = vmatpush1.msra.mxu0 0.0
    %3285 = vmatprep.subr.mxu0 0.0
    %3286 = vmatpush1.msra.mxu0 0.0
    %3287 = vmatprep.subr.mxu0 0.0
    %3288 = vmatpush1.msra.mxu0 0.0
    %3289 = vmatprep.subr.mxu0 0.0
    %3290 = vmatpush1.msra.mxu0 0.0
    %3291 = vmatprep.subr.mxu0 0.0
    %3292 = vmatpush1.msra.mxu0 0.0
    %3293 = vmatprep.subr.mxu0 0.0
    %3294 = vmatpush1.msra.mxu0 0.0
    %3295 = vmatprep.subr.mxu0 0.0
    %3296 = vmatpush1.msra.mxu0 0.0
    %3297 = vmatprep.subr.mxu0 0.0
    %3298 = vmatpush1.msra.mxu0 0.0
    %3299 = vmatprep.subr.mxu0 0.0
    %3300 = vmatpush1.msra.mxu0 0.0
    %3301 = vmatprep.subr.mxu0 0.0
    %3302 = vmatpush1.msra.mxu0 %v1555
    %3303 = vmatprep.subr.mxu0 0.0
    %3304 = vmatpush2.msra.mxu0 0.0
    %3305 = vmatprep.subr.mxu0 0.0
    %3306 = vmatpush2.msra.mxu0 0.0
    %3307 = vmatprep.subr.mxu0 0.0
    %3308 = vmatpush2.msra.mxu0 0.0
    %3309 = vmatprep.subr.mxu0 0.0
    %3310 = vmatpush2.msra.mxu0 0.0
    %3311 = vmatprep.subr.mxu0 0.0
    %3312 = vmatpush2.msra.mxu0 0.0
    %3313 = vmatprep.subr.mxu0 0.0
    %3314 = vmatpush2.msra.mxu0 0.0
    %3315 = vmatprep.subr.mxu0 0.0
    %3316 = vmatpush2.msra.mxu0 0.0
    %3317 = vmatprep.subr.mxu0 0.0
    %3318 = vmatpush2.msra.mxu0 0.0
    %3319 = vmatprep.subr.mxu0 0.0
    %3320 = vmatpush2.msra.mxu0 0.0
    %3321 = vmatprep.subr.mxu0 0.0
    %3322 = vmatpush2.msra.mxu0 0.0
    %3323 = vmatprep.subr.mxu0 0.0
    %3324 = vmatpush2.msra.mxu0 0.0
    %3325 = vmatprep.subr.mxu0 0.0
    %3326 = vmatpush2.msra.mxu0 0.0
    %3327 = vmatprep.subr.mxu0 0.0
    %3328 = vmatpush2.msra.mxu0 0.0
    %3329 = vmatprep.subr.mxu0 0.0
    %3330 = vmatpush2.msra.mxu0 0.0
    %3331 = vmatprep.subr.mxu0 0.0
    %3332 = vmatpush2.msra.mxu0 0.0
    %3333 = vmatprep.subr.mxu0 0.0
    %3334 = vmatpush2.msra.mxu0 0.0
    %3335 = vmatprep.mubr.f32.mxu0 0.0
    %3336 = vmatmul.mubr.f32.gmra.mxu0 %v2382
    %v3337 = vpop.f32.mrf.mxu0
    %v3338 = vadd.f32 0.0, %v3337
    %v3339 = vpop.f32.mrf.mxu0
    %3340 = vmatprep.mubr.f32.mxu0 0.0
    %3341 = vmatmul.mubr.f32.gmra.mxu0 %v2385
    %v3342 = vpop.f32.mrf.mxu0
    %v3343 = vadd.f32 0.0, %v3342
    %v3344 = vpop.f32.mrf.mxu0
    %3345 = vmatprep.mubr.f32.mxu0 0.0
    %3346 = vmatmul.mubr.f32.gmra.mxu0 %v2388
    %v3347 = vpop.f32.mrf.mxu0
    %v3348 = vadd.f32 0.0, %v3347
    %v3349 = vpop.f32.mrf.mxu0
    %3350 = vmatprep.mubr.f32.mxu0 0.0
    %3351 = vmatmul.mubr.f32.gmra.mxu0 %v2391
    %v3352 = vpop.f32.mrf.mxu0
    %v3353 = vadd.f32 0.0, %v3352
    %v3354 = vpop.f32.mrf.mxu0
    %3355 = vmatprep.mubr.f32.mxu0 0.0
    %3356 = vmatmul.mubr.f32.gmra.mxu0 %v2394
    %v3357 = vpop.f32.mrf.mxu0
    %v3358 = vadd.f32 0.0, %v3357
    %v3359 = vpop.f32.mrf.mxu0
    %3360 = vmatprep.mubr.f32.mxu0 0.0
    %3361 = vmatmul.mubr.f32.gmra.mxu0 %v2397
    %v3362 = vpop.f32.mrf.mxu0
    %v3363 = vadd.f32 0.0, %v3362
    %v3364 = vpop.f32.mrf.mxu0
    %3365 = vmatprep.mubr.f32.mxu0 0.0
    %3366 = vmatmul.mubr.f32.gmra.mxu0 %v2400
    %v3367 = vpop.f32.mrf.mxu0
    %v3368 = vadd.f32 0.0, %v3367
    %v3369 = vpop.f32.mrf.mxu0
    %3370 = vmatprep.mubr.f32.mxu0 0.0
    %3371 = vmatmul.mubr.f32.gmra.mxu0 %v2403
    %v3372 = vpop.f32.mrf.mxu0
    %v3373 = vadd.f32 0.0, %v3372
    %v3374 = vpop.f32.mrf.mxu0
    %3375 = vmatprep.mubr.f32.mxu0 0.0
    %3376 = vmatmul.mubr.f32.gmra.mxu0 %v2406
    %v3377 = vpop.f32.mrf.mxu0
    %v3378 = vadd.f32 0.0, %v3377
    %v3379 = vpop.f32.mrf.mxu0
    %3380 = vmatprep.mubr.f32.mxu0 0.0
    %3381 = vmatmul.mubr.f32.gmra.mxu0 %v2409
    %v3382 = vpop.f32.mrf.mxu0
    %v3383 = vadd.f32 0.0, %v3382
    %v3384 = vpop.f32.mrf.mxu0
    %3385 = vmatprep.mubr.f32.mxu0 0.0
    %3386 = vmatmul.mubr.f32.gmra.mxu0 %v2412
    %v3387 = vpop.f32.mrf.mxu0
    %v3388 = vadd.f32 0.0, %v3387
    %v3389 = vpop.f32.mrf.mxu0
    %3390 = vmatprep.mubr.f32.mxu0 0.0
    %3391 = vmatmul.mubr.f32.gmra.mxu0 %v2415
    %v3392 = vpop.f32.mrf.mxu0
    %v3393 = vadd.f32 0.0, %v3392
    %v3394 = vpop.f32.mrf.mxu0
    %3395 = vmatprep.mubr.f32.mxu0 0.0
    %3396 = vmatmul.mubr.f32.gmra.mxu0 %v2418
    %v3397 = vpop.f32.mrf.mxu0
    %v3398 = vadd.f32 0.0, %v3397
    %v3399 = vpop.f32.mrf.mxu0
    %3400 = vmatprep.mubr.f32.mxu0 0.0
    %3401 = vmatmul.mubr.f32.gmra.mxu0 %v2421
    %v3402 = vpop.f32.mrf.mxu0
    %v3403 = vadd.f32 0.0, %v3402
    %v3404 = vpop.f32.mrf.mxu0
    %3405 = vmatprep.mubr.f32.mxu0 0.0
    %3406 = vmatmul.mubr.f32.gmra.mxu0 %v2424
    %v3407 = vpop.f32.mrf.mxu0
    %v3408 = vadd.f32 0.0, %v3407
    %v3409 = vpop.f32.mrf.mxu0
    %3410 = vmatprep.mubr.f32.mxu0 0.0
    %3411 = vmatmul.mubr.f32.gmra.mxu0 %v2427
    %v3412 = vpop.f32.mrf.mxu0
    %v3413 = vadd.f32 0.0, %v3412
    %v3414 = vpop.f32.mrf.mxu0
    %3415 = vdwg.mxu0
    %v3416 = vmul.f32 %v3338, %v1836
    %v3417 = vmul.f32 %v3343, %v1837
    %v3418 = vmul.f32 %v3348, %v1838
    %v3419 = vmul.f32 %v3353, %v1839
    %v3420 = vmul.f32 %v3358, %v1840
    %v3421 = vmul.f32 %v3363, %v1841
    %v3422 = vmul.f32 %v3368, %v1842
    %v3423 = vmul.f32 %v3373, %v1843
    %v3424 = vmul.f32 %v3378, %v1844
    %v3425 = vmul.f32 %v3383, %v1845
    %v3426 = vmul.f32 %v3388, %v1846
    %v3427 = vmul.f32 %v3393, %v1847
    %v3428 = vmul.f32 %v3398, %v1848
    %v3429 = vmul.f32 %v3403, %v1849
    %v3430 = vmul.f32 %v3408, %v1850
    %v3431 = vmul.f32 %v3413, %v1851
    %v3432 = vsel %vm109, %v3416, 0.0
    %v3433 = vsel %vm109, %v3418, 0.0
    %v3434 = vadd.f32 %v3432, %v3433
    %v3435 = vsel %vm109, %v3420, 0.0
    %v3436 = vadd.f32 %v3434, %v3435
    %v3437 = vsel %vm109, %v3422, 0.0
    %v3438 = vadd.f32 %v3436, %v3437
    %v3439 = vsel %vm109, %v3424, 0.0
    %v3440 = vadd.f32 %v3438, %v3439
    %v3441 = vsel %vm109, %v3426, 0.0
    %v3442 = vadd.f32 %v3440, %v3441
    %v3443 = vsel %vm109, %v3428, 0.0
    %v3444 = vadd.f32 %v3442, %v3443
    %v3445 = vsel %vm109, %v3430, 0.0
    %v3446 = vadd.f32 %v3444, %v3445
    %v3447 = vsel %vm109, %v3417, 0.0
    %v3448 = vsel %vm109, %v3419, 0.0
    %v3449 = vadd.f32 %v3447, %v3448
    %v3450 = vsel %vm109, %v3421, 0.0
    %v3451 = vadd.f32 %v3449, %v3450
    %v3452 = vsel %vm109, %v3423, 0.0
    %v3453 = vadd.f32 %v3451, %v3452
    %v3454 = vsel %vm109, %v3425, 0.0
    %v3455 = vadd.f32 %v3453, %v3454
    %v3456 = vsel %vm109, %v3427, 0.0
    %v3457 = vadd.f32 %v3455, %v3456
    %v3458 = vsel %vm109, %v3429, 0.0
    %v3459 = vadd.f32 %v3457, %v3458
    %v3460 = vsel %vm109, %v3431, 0.0
    %v3461 = vadd.f32 %v3459, %v3460
    %s3462 = scalar_lea.vmem [#allocation8], 96
    %v3463 = vld [vmem:[%s3462] sm:$0xff]
    %v3464 = vld [vmem:[%s3462 + $0x8] sm:$0xff]
    %v3465 = vld [vmem:[%s3462 + $0x10] sm:$0xff]
    %v3466 = vld [vmem:[%s3462 + $0x18] sm:$0xff]
    %v3468 = vsel %vm109, %v3446, 0
    %v3471 = vsel %vm109, %v3461, 0
    %3473 = vmatprep.subr.mxu0 0.0
    %3474 = vmatpush1.msra.mxu0 0.0
    %3475 = vmatprep.subr.mxu0 0.0
    %3476 = vmatpush1.msra.mxu0 0.0
    %3477 = vmatprep.subr.mxu0 0.0
    %3478 = vmatpush1.msra.mxu0 0.0
    %3479 = vmatprep.subr.mxu0 0.0
    %3480 = vmatpush1.msra.mxu0 0.0
    %3481 = vmatprep.subr.mxu0 0.0
    %3482 = vmatpush1.msra.mxu0 0.0
    %3483 = vmatprep.subr.mxu0 0.0
    %3484 = vmatpush1.msra.mxu0 0.0
    %3485 = vmatprep.subr.mxu0 0.0
    %3486 = vmatpush1.msra.mxu0 0.0
    %3487 = vmatprep.subr.mxu0 0.0
    %3488 = vmatpush1.msra.mxu0 0.0
    %3489 = vmatprep.subr.mxu0 0.0
    %3490 = vmatpush1.msra.mxu0 0.0
    %3491 = vmatprep.subr.mxu0 0.0
    %3492 = vmatpush1.msra.mxu0 0.0
    %3493 = vmatprep.subr.mxu0 0.0
    %3494 = vmatpush1.msra.mxu0 0.0
    %3495 = vmatprep.subr.mxu0 0.0
    %3496 = vmatpush1.msra.mxu0 0.0
    %3497 = vmatprep.subr.mxu0 0.0
    %3498 = vmatpush1.msra.mxu0 %v3466
    %3499 = vmatprep.subr.mxu0 0.0
    %3500 = vmatpush1.msra.mxu0 %v3465
    %3501 = vmatprep.subr.mxu0 0.0
    %3502 = vmatpush1.msra.mxu0 %v3464
    %3503 = vmatprep.subr.mxu0 0.0
    %3504 = vmatpush1.msra.mxu0 %v3463
    %3505 = vmatprep.subr.mxu0 0.0
    %3506 = vmatpush2.msra.mxu0 0.0
    %3507 = vmatprep.subr.mxu0 0.0
    %3508 = vmatpush2.msra.mxu0 0.0
    %3509 = vmatprep.subr.mxu0 0.0
    %3510 = vmatpush2.msra.mxu0 0.0
    %3511 = vmatprep.subr.mxu0 0.0
    %3512 = vmatpush2.msra.mxu0 0.0
    %3513 = vmatprep.subr.mxu0 0.0
    %3514 = vmatpush2.msra.mxu0 0.0
    %3515 = vmatprep.subr.mxu0 0.0
    %3516 = vmatpush2.msra.mxu0 0.0
    %3517 = vmatprep.subr.mxu0 0.0
    %3518 = vmatpush2.msra.mxu0 0.0
    %3519 = vmatprep.subr.mxu0 0.0
    %3520 = vmatpush2.msra.mxu0 0.0
    %3521 = vmatprep.subr.mxu0 0.0
    %3522 = vmatpush2.msra.mxu0 0.0
    %3523 = vmatprep.subr.mxu0 0.0
    %3524 = vmatpush2.msra.mxu0 0.0
    %3525 = vmatprep.subr.mxu0 0.0
    %3526 = vmatpush2.msra.mxu0 0.0
    %3527 = vmatprep.subr.mxu0 0.0
    %3528 = vmatpush2.msra.mxu0 0.0
    %3529 = vmatprep.subr.mxu0 0.0
    %3530 = vmatpush2.msra.mxu0 0.0
    %3531 = vmatprep.subr.mxu0 0.0
    %3532 = vmatpush2.msra.mxu0 0.0
    %3533 = vmatprep.subr.mxu0 0.0
    %3534 = vmatpush2.msra.mxu0 0.0
    %3535 = vmatprep.subr.mxu0 0.0
    %3536 = vmatpush2.msra.mxu0 0.0
    %3537 = vmatprep.mubr.f32.mxu0 0.0
    %3538 = vmatmul.mubr.f32.gmra.mxu0 %v3468
    %v3539 = vpop.f32.mrf.mxu0
    %v3540 = vadd.f32 0.0, %v3539
    %v3541 = vpop.f32.mrf.mxu0
    %3542 = vmatprep.mubr.f32.mxu0 0.0
    %3543 = vmatmul.mubr.f32.gmra.mxu0 %v3471
    %v3544 = vpop.f32.mrf.mxu0
    %v3545 = vadd.f32 0.0, %v3544
    %v3546 = vpop.f32.mrf.mxu0
    %3547 = vdwg.mxu0
    %v3548 = vadd.f32 %v3269, %v3540
    %v3549 = vadd.f32 %v3270, %v3545
    %v3550 = vmul.f32 %v1834, %v3548
    %v3551 = vmul.f32 %v1835, %v3549
    %3552 = vst.msk [vmem:[#allocation10] sm:$0xff] %vm109, %v3550
    %3553 = vst.msk [vmem:[#allocation10 + $0x8] sm:$0xff] %vm109, %v3551
    // Predicated region
    $region50: #{tpu_custom_call.1} parent=1 // pred_check
      _
    $region51: #{tpu_custom_call.1} parent=1 // pred_check_branch
      %3555 = sbr.rel (0) target = $region53
    $region52: #{tpu_custom_call.1} parent=1 // pred_region
      %s3557 = ssub.s32 256, 256
      %3558 = vsyncadd [#allocation4], %s3557
      %s3559 = sshll.u32 [#allocation10], 4
      %s3560 = int_to_ptr.vmem [resolvable:$true] %s3559
      %3565 = dma.vmem_to_hbm [thread:$0]  %s3560, 256, %s8, [#allocation4], 128, 128, 8
    $region53: #{tpu_custom_call.1} parent=1 // pred_fallthru
      _
    // Predicated region
    $region54: #{tpu_custom_call.1} parent=1 // pred_check
      _
    $region55: #{tpu_custom_call.1} parent=1 // pred_check_branch
      %3567 = sbr.rel (0) target = $region57
    $region56: #{tpu_custom_call.1} parent=1 // pred_region
      %3568 = dma.done [#allocation4], 256
    $region57: #{tpu_custom_call.1} parent=1 // pred_fallthru
      _
    %3569 = vsyncpa [#allocation3], 1
    %3570 = vsyncpa [#allocation6], 1
    %3571 = vsyncpa [#allocation9], 1
    %3572 = vsyncpa [#allocation4], 1

</llo_original>
